<compile_context>
chip_gen: v6e
topology: v6e:2x2x1
jax: 0.10.0
libtpu: 0.0.40
codegen_flags: <defaults>
</compile_context>

<pallas_src>
from functools import partial

import jax
import jax.numpy as jnp
from jax import lax
from jax.experimental import pallas as pl
from jax.experimental.pallas import tpu as pltpu


def _round_up(x, m):
    return (x + m - 1) // m * m


def _physical_vmem_bytes():
    # v5e/v6e: 128 MiB per TensorCore; v7x: 64 MiB.  Query when possible, else be conservative.
    try:
        v = getattr(pltpu.get_tpu_info(), "vmem_capacity_bytes", None)
        if v:
            return int(v)
    except Exception:
        pass
    return 64 << 20


def bottleneck_kernel(x_ref, mask_ref, w1_ref, b1_ref, w2_ref, b2_ref, w3_ref, b3_ref,
                      out_ref, slab_ref, *, H, Wp, base):
    """One image per grid step.  x block: (1, H*Wp, Cin), zero right-pad columns, f32."""
    HWp = H * Wp
    P = w1_ref.shape[1]
    bf16 = jnp.bfloat16

    x2d = x_ref[0]                       # (H*Wp, Cin) f32 (kept f32 for the residual add)
    mask = mask_ref[...]                 # (H*Wp, 1)  f32: 1.0 valid column, 0.0 pad column

    # ---- conv1 (1x1, BN1 scale folded) + bias + ReLU; pad columns forced to zero so they ----
    # ---- double as the left/right halo of the row-flattened 3x3 conv.                    ----
    pre1 = jnp.dot(x2d.astype(bf16), w1_ref[...], preferred_element_type=jnp.float32)
    h1 = jnp.maximum(pre1 + b1_ref[...], 0.0) * mask          # (H*Wp, P) f32
    h1b = h1.astype(bf16)                                      # single cast; slab is bf16

    # ---- park h1 in the zero-haloed bf16 slab.  Only the halo rows are re-zeroed each grid ----
    # ---- step (the interior is fully overwritten), and it is done per-step (not           ----
    # ---- program_id==0 gated) so per-core scratch stays correct under megacore splitting.  ----
    nrows = slab_ref.shape[0]
    slab_ref[0:base, :] = jnp.zeros((base, P), bf16)
    slab_ref[base + HWp:nrows, :] = jnp.zeros((nrows - base - HWp, P), bf16)
    slab_ref[base:base + HWp, :] = h1b

    # ---- conv2 (3x3, stride=1, pad=1, BN2 scale folded), fused along K per kernel row dy: ----
    # LHS_dy = [window(dx=0) | window(dx=1) | window(dx=2)] -> one (HWp,3P)x(3P,P) matmul.
    # 3 MXU matmuls total instead of 9; K = 3P fills the MXU 3x better at small P.
    # dy window starts differ by Wp (8-aligned); the +-1 dx shifts are handled inside the
    # staged loads/concat (XLU), not on the matmul path.
    def lhs(dy):
        s = base + (dy - 1) * Wp - 1
        return jnp.concatenate(
            [slab_ref[s + dx:s + dx + HWp, :] for dx in range(3)], axis=1)   # (HWp, 3P) bf16

    acc = jnp.dot(lhs(0), w2_ref[0], preferred_element_type=jnp.float32)
    acc = acc + jnp.dot(lhs(1), w2_ref[1], preferred_element_type=jnp.float32)
    acc = acc + jnp.dot(lhs(2), w2_ref[2], preferred_element_type=jnp.float32)
    h2 = jnp.maximum(acc + b2_ref[...], 0.0)                                 # (H*Wp, P) f32

    # ---- conv3 (1x1, BN3 scale folded) + bias + residual add + ReLU (f32 epilogue).      ----
    # ---- Pad columns are zeroed so the padded row layout can be chained into the next    ----
    # ---- bottleneck block; the store is the full lane-dense block (no unpad slice).       ----
    h3 = jnp.dot(h2.astype(bf16), w3_ref[...], preferred_element_type=jnp.float32)
    out = jnp.maximum(h3 + b3_ref[...] + x2d, 0.0) * mask                    # (H*Wp, Cout)
    out_ref[0] = out.astype(out_ref.dtype)


def bottleneck_forward_nhwc(x, params, *, out_dtype=None):
    """x: (N, H, W, C) float32 NHWC, C == planes*expansion.  Returns (N, H, W, C)."""
    N, H, W, Cin = x.shape
    P = params["w1"].shape[1]
    Cout = params["w3"].shape[1]
    assert Cout == Cin, "identity bottleneck requires inplanes == planes * expansion"
    # TODO(synk): set out_dtype=jnp.bfloat16 to halve inter-block HBM traffic (v5e roofline);
    # the residual/epilogue stays f32 in-kernel either way.
    out_dtype = x.dtype if out_dtype is None else out_dtype

    Wp = _round_up(W + 1, 8)                      # padded row width (>= W+1, sublane aligned)
    base = _round_up(Wp + 1, 16)                  # slab row of image (0,0); 16-aligned (bf16)
    HWp = H * Wp
    slab_rows = _round_up(base + Wp + HWp + 1, 16)

    # Fold BN scale into the conv weights and cast matmul operands to bf16 (MXU-native).
    w1 = (params["w1"] * params["s1"][0][None, :]).astype(jnp.bfloat16)            # (Cin, P)
    w2 = params["w2"] * params["s2"][0][None, None, None, :]                        # (3,3,P,P) HWIO
    w2k = w2.reshape(3, 3 * P, P).astype(jnp.bfloat16)       # per-dy (3P, P), rows = (dx, cin)
    w3 = (params["w3"] * params["s3"][0][None, :]).astype(jnp.bfloat16)            # (P, Cout)
    b1 = params["b1"].astype(jnp.float32)
    b2 = params["b2"].astype(jnp.float32)
    b3 = params["b3"].astype(jnp.float32)

    # Pad-column mask, built once outside the kernel (small constant input).
    col = jnp.arange(HWp, dtype=jnp.int32) % Wp
    mask = (col < W).astype(jnp.float32)[:, None]                                   # (HWp, 1)

    # Layout plumbing: right-pad W -> Wp with zeros and flatten (H, Wp) into one row axis.
    # In a multi-block network this padded layout is created once at the stem and carried
    # between blocks (the kernel zeroes its output pad columns), so this pad and the unpad
    # below are not per-block work.
    x_pad = jnp.pad(x, ((0, 0), (0, 0), (0, Wp - W), (0, 0))).reshape(N, HWp, Cin)

    full = lambda shape: pl.BlockSpec(shape, lambda n: (0,) * len(shape))

    # Chip-aware VMEM budget: double-buffered x/out blocks + single-counted weights/mask +
    # bf16 slab scratch + headroom, clamped below physical VMEM (64 MiB/core on v7x).
    block_bytes = HWp * Cin * 4 + HWp * Cout * jnp.dtype(out_dtype).itemsize
    weight_bytes = (Cin * P + 9 * P * P + P * Cout) * 2 + (2 * P + Cout) * 4
    mask_bytes = HWp * 128 * 4                    # (HWp, 1) is lane-padded in VMEM
    slab_bytes = slab_rows * P * 2
    needed = 2 * block_bytes + weight_bytes + mask_bytes + slab_bytes
    vmem_limit = int(max(min(needed + (16 << 20), _physical_vmem_bytes() - (8 << 20)),
                         1 << 20))

    kernel = partial(bottleneck_kernel, H=H, Wp=Wp, base=base)

    out_flat = pl.pallas_call(
        kernel,
        out_shape=jax.ShapeDtypeStruct((N, HWp, Cout), out_dtype),
        grid_spec=pltpu.PrefetchScalarGridSpec(
            num_scalar_prefetch=0,
            grid=(N,),
            in_specs=[
                pl.BlockSpec((1, HWp, Cin), lambda n: (n, 0, 0)),   # x (padded row layout)
                full((HWp, 1)),        # pad-column mask
                full((Cin, P)),        # w1  (BN1 scale folded, bf16)
                full((1, P)),          # bn1 bias
                full((3, 3 * P, P)),   # w2  grouped by dy, rows = (dx, cin), bf16
                full((1, P)),          # bn2 bias
                full((P, Cout)),       # w3  (BN3 scale folded, bf16)
                full((1, Cout)),       # bn3 bias
            ],
            out_specs=pl.BlockSpec((1, HWp, Cout), lambda n: (n, 0, 0)),
            scratch_shapes=[pltpu.VMEM((slab_rows, P), jnp.bfloat16)],
        ),
        compiler_params=pltpu.CompilerParams(
            dimension_semantics=("parallel",),
            vmem_limit_bytes=vmem_limit),
    )(x_pad, mask, w1, b1, w2k, b2, w3, b3)

    # Drop the padded columns (done once at the end of a block chain in a real network).
    return out_flat.reshape(N, H, Wp, Cout)[:, :, :W, :]


def fold_bn(gamma, beta, mean, var, eps=1e-5):
    scale = gamma / jnp.sqrt(var + eps)
    bias = beta - mean * scale
    return scale[None, :], bias[None, :]


def make_params(key, inplanes, planes):
    expansion = 4
    ks = jax.random.split(key, 6)
    f = lambda k, shape, s: jax.random.normal(k, shape, jnp.float32) * s

    # PyTorch conv weights are OIHW; convert to the kernel layouts.
    w1_oihw = f(ks[0], (planes, inplanes, 1, 1), 0.1)
    w2_oihw = f(ks[1], (planes, planes, 3, 3), 0.1)
    w3_oihw = f(ks[2], (planes * expansion, planes, 1, 1), 0.1)

    w1 = jnp.transpose(w1_oihw[:, :, 0, 0], (1, 0))     # (Cin, P)
    w2 = jnp.transpose(w2_oihw, (2, 3, 1, 0))           # (3, 3, P, P)  HWIO
    w3 = jnp.transpose(w3_oihw[:, :, 0, 0], (1, 0))     # (P, 4P)

    def bn(k, c):
        kg, kb, km, kv = jax.random.split(k, 4)
        gamma = 1.0 + 0.1 * jax.random.normal(kg, (c,), jnp.float32)
        beta = 0.1 * jax.random.normal(kb, (c,), jnp.float32)
        mean = 0.1 * jax.random.normal(km, (c,), jnp.float32)
        var = jnp.abs(jax.random.normal(kv, (c,), jnp.float32)) + 0.5
        return fold_bn(gamma, beta, mean, var)

    s1, b1 = bn(ks[3], planes)
    s2, b2 = bn(ks[4], planes)
    s3, b3 = bn(ks[5], planes * expansion)
    return dict(w1=w1, s1=s1, b1=b1, w2=w2, s2=s2, b2=b2, w3=w3, s3=s3, b3=b3)


def reference_forward_nhwc(x, params):
    """Plain-JAX NHWC reference with unfolded BN scale/bias (inference-mode BatchNorm)."""
    dn = ("NHWC", "HWIO", "NHWC")
    w1 = params["w1"][None, None]      # (1,1,Cin,P)
    w2 = params["w2"]                  # (3,3,P,P)
    w3 = params["w3"][None, None]      # (1,1,P,Cout)

    def conv(y, w, pad):
        return lax.conv_general_dilated(y, w, (1, 1), [(pad, pad), (pad, pad)],
                                        dimension_numbers=dn)

    def affine(y, s, b):
        return y * s[0] + b[0]

    out = jnp.maximum(affine(conv(x, w1, 0), params["s1"], params["b1"]), 0.0)
    out = jnp.maximum(affine(conv(out, w2, 1), params["s2"], params["b2"]), 0.0)
    out = affine(conv(out, w3, 0), params["s3"], params["b3"])
    return jnp.maximum(out + x, 0.0)


if __name__ == "__main__":
    planes = 32
    inplanes = planes * 4          # 128 -> lane-dense channel dims (unmasked stores)
    N, H, W = 2, 16, 16

    key = jax.random.PRNGKey(0)
    kx, kp = jax.random.split(key)
    x = jax.random.normal(kx, (N, H, W, inplanes), jnp.float32)   # NHWC (channels-last)
    params = make_params(kp, inplanes, planes)

    out = jax.block_until_ready(bottleneck_forward_nhwc(x, params))
    ref = reference_forward_nhwc(x, params)

    assert out.shape == ref.shape == (N, H, W, inplanes)
    # bf16 MXU passes with f32 accumulation/epilogue: typical max abs error ~1e-2 vs f32 ref.
    assert jnp.allclose(out, ref, rtol=5e-2, atol=5e-2), (
        f"mismatch vs reference: max abs err = {jnp.max(jnp.abs(out - ref))}")
    print("KERNEL_OK")
</pallas_src>

<mosaic_0001>
module attributes {stable_mosaic.version = 11 : i64} {
  func.func @bottleneck_kernel(%arg0: i32, %arg1: memref<1x384x128xf32, #tpu.memory_space<vmem>>, %arg2: memref<384x1xf32, #tpu.memory_space<vmem>>, %arg3: memref<128x32xbf16, #tpu.memory_space<vmem>>, %arg4: memref<1x32xf32, #tpu.memory_space<vmem>>, %arg5: memref<3x96x32xbf16, #tpu.memory_space<vmem>>, %arg6: memref<1x32xf32, #tpu.memory_space<vmem>>, %arg7: memref<32x128xbf16, #tpu.memory_space<vmem>>, %arg8: memref<1x128xf32, #tpu.memory_space<vmem>>, %arg9: memref<1x384x128xf32, #tpu.memory_space<vmem>>, %arg10: memref<448x32xbf16, #tpu.memory_space<vmem>>) attributes {dimension_semantics = [#tpu.dimension_semantics<parallel>], iteration_bounds = array<i64: 2>, scalar_prefetch = 0 : i64, scratch_operands = 1 : i64, tpu.core_type = #tpu.core_type<tc>, window_params = [{transform_indices = @transform_0, window_bounds = array<i64: 1, 384, 128>}, {pipeline_mode = #tpu.pipeline_mode<synchronous>, transform_indices = @transform_1, window_bounds = array<i64: 384, 1>}, {pipeline_mode = #tpu.pipeline_mode<synchronous>, transform_indices = @transform_2, window_bounds = array<i64: 128, 32>}, {pipeline_mode = #tpu.pipeline_mode<synchronous>, transform_indices = @transform_3, window_bounds = array<i64: 1, 32>}, {pipeline_mode = #tpu.pipeline_mode<synchronous>, transform_indices = @transform_4, window_bounds = array<i64: 3, 96, 32>}, {pipeline_mode = #tpu.pipeline_mode<synchronous>, transform_indices = @transform_5, window_bounds = array<i64: 1, 32>}, {pipeline_mode = #tpu.pipeline_mode<synchronous>, transform_indices = @transform_6, window_bounds = array<i64: 32, 128>}, {pipeline_mode = #tpu.pipeline_mode<synchronous>, transform_indices = @transform_7, window_bounds = array<i64: 1, 128>}, {transform_indices = @transform_8, window_bounds = array<i64: 1, 384, 128>}]} {
    %c0 = arith.constant 0 : index
    %c0_0 = arith.constant 0 : index
    %c0_1 = arith.constant 0 : index
    %0 = vector.load %arg1[%c0, %c0_0, %c0_1] : memref<1x384x128xf32, #tpu.memory_space<vmem>>, vector<1x384x128xf32>
    %1 = vector.shape_cast %0 : vector<1x384x128xf32> to vector<384x128xf32>
    %c0_2 = arith.constant 0 : index
    %c0_3 = arith.constant 0 : index
    %2 = vector.load %arg2[%c0_2, %c0_3] : memref<384x1xf32, #tpu.memory_space<vmem>>, vector<384x1xf32>
    %3 = arith.truncf %1 : vector<384x128xf32> to vector<384x128xbf16>
    %c0_4 = arith.constant 0 : index
    %c0_5 = arith.constant 0 : index
    %4 = vector.load %arg3[%c0_4, %c0_5] : memref<128x32xbf16, #tpu.memory_space<vmem>>, vector<128x32xbf16>
    %cst = arith.constant dense<0.000000e+00> : vector<384x32xf32>
    %5 = tpu.matmul %3, %4, %cst {dimension_numbers = #tpu.dot_dimension_numbers<[1], [0], [0], [1], [0, 0, 1, 1], [], []>} : vector<384x128xbf16>, vector<128x32xbf16>, vector<384x32xf32> -> vector<384x32xf32>
    %c0_6 = arith.constant 0 : index
    %c0_7 = arith.constant 0 : index
    %6 = vector.load %arg4[%c0_6, %c0_7] : memref<1x32xf32, #tpu.memory_space<vmem>>, vector<1x32xf32>
    %7 = vector.broadcast %6 : vector<1x32xf32> to vector<384x32xf32>
    %8 = arith.addf %5, %7 : vector<384x32xf32>
    %cst_8 = arith.constant 0.000000e+00 : f32
    %9 = vector.broadcast %cst_8 : f32 to vector<384x32xf32>
    %10 = arith.maximumf %8, %9 : vector<384x32xf32>
    %11 = vector.broadcast %2 : vector<384x1xf32> to vector<384x32xf32>
    %12 = arith.mulf %10, %11 : vector<384x32xf32>
    %13 = arith.truncf %12 : vector<384x32xf32> to vector<384x32xbf16>
    %cst_9 = arith.constant 0.000000e+00 : bf16
    %14 = vector.broadcast %cst_9 : bf16 to vector<32x32xbf16>
    %c0_10 = arith.constant 0 : index
    %c0_11 = arith.constant 0 : index
    %15 = vector.load %arg10[%c0_10, %c0_11] : memref<448x32xbf16, #tpu.memory_space<vmem>>, vector<32x32xbf16>
    tpu.vector_store %arg10[%c0_10, %c0_11], %14 {strides = array<i32>} : memref<448x32xbf16, #tpu.memory_space<vmem>>, vector<32x32xbf16>,
    %cst_12 = arith.constant 0.000000e+00 : bf16
    %16 = vector.broadcast %cst_12 : bf16 to vector<32x32xbf16>
    %c416 = arith.constant 416 : index
    %c0_13 = arith.constant 0 : index
    %17 = vector.load %arg10[%c416, %c0_13] : memref<448x32xbf16, #tpu.memory_space<vmem>>, vector<32x32xbf16>
    tpu.vector_store %arg10[%c416, %c0_13], %16 {strides = array<i32>} : memref<448x32xbf16, #tpu.memory_space<vmem>>, vector<32x32xbf16>,
    %c32 = arith.constant 32 : index
    %c0_14 = arith.constant 0 : index
    %18 = vector.load %arg10[%c32, %c0_14] : memref<448x32xbf16, #tpu.memory_space<vmem>>, vector<384x32xbf16>
    tpu.vector_store %arg10[%c32, %c0_14], %13 {strides = array<i32>} : memref<448x32xbf16, #tpu.memory_space<vmem>>, vector<384x32xbf16>,
    %c7 = arith.constant 7 : index
    %c0_15 = arith.constant 0 : index
    %19 = vector.load %arg10[%c7, %c0_15] : memref<448x32xbf16, #tpu.memory_space<vmem>>, vector<384x32xbf16>
    %c8 = arith.constant 8 : index
    %c0_16 = arith.constant 0 : index
    %20 = vector.load %arg10[%c8, %c0_16] : memref<448x32xbf16, #tpu.memory_space<vmem>>, vector<384x32xbf16>
    %c9 = arith.constant 9 : index
    %c0_17 = arith.constant 0 : index
    %21 = vector.load %arg10[%c9, %c0_17] : memref<448x32xbf16, #tpu.memory_space<vmem>>, vector<384x32xbf16>
    %22 = tpu.concatenate %19, %20, %21 in 1 : vector<384x32xbf16>, vector<384x32xbf16>, vector<384x32xbf16> -> vector<384x96xbf16>
    %c0_18 = arith.constant 0 : index
    %c0_19 = arith.constant 0 : index
    %c0_20 = arith.constant 0 : index
    %23 = vector.load %arg5[%c0_18, %c0_19, %c0_20] : memref<3x96x32xbf16, #tpu.memory_space<vmem>>, vector<1x96x32xbf16>
    %24 = vector.shape_cast %23 : vector<1x96x32xbf16> to vector<96x32xbf16>
    %cst_21 = arith.constant dense<0.000000e+00> : vector<384x32xf32>
    %25 = tpu.matmul %22, %24, %cst_21 {dimension_numbers = #tpu.dot_dimension_numbers<[1], [0], [0], [1], [0, 0, 1, 1], [], []>} : vector<384x96xbf16>, vector<96x32xbf16>, vector<384x32xf32> -> vector<384x32xf32>
    %c31 = arith.constant 31 : index
    %c0_22 = arith.constant 0 : index
    %26 = vector.load %arg10[%c31, %c0_22] : memref<448x32xbf16, #tpu.memory_space<vmem>>, vector<384x32xbf16>
    %c32_23 = arith.constant 32 : index
    %c0_24 = arith.constant 0 : index
    %27 = vector.load %arg10[%c32_23, %c0_24] : memref<448x32xbf16, #tpu.memory_space<vmem>>, vector<384x32xbf16>
    %c33 = arith.constant 33 : index
    %c0_25 = arith.constant 0 : index
    %28 = vector.load %arg10[%c33, %c0_25] : memref<448x32xbf16, #tpu.memory_space<vmem>>, vector<384x32xbf16>
    %29 = tpu.concatenate %26, %27, %28 in 1 : vector<384x32xbf16>, vector<384x32xbf16>, vector<384x32xbf16> -> vector<384x96xbf16>
    %c1 = arith.constant 1 : index
    %c0_26 = arith.constant 0 : index
    %c0_27 = arith.constant 0 : index
    %30 = vector.load %arg5[%c1, %c0_26, %c0_27] : memref<3x96x32xbf16, #tpu.memory_space<vmem>>, vector<1x96x32xbf16>
    %31 = vector.shape_cast %30 : vector<1x96x32xbf16> to vector<96x32xbf16>
    %cst_28 = arith.constant dense<0.000000e+00> : vector<384x32xf32>
    %32 = tpu.matmul %29, %31, %cst_28 {dimension_numbers = #tpu.dot_dimension_numbers<[1], [0], [0], [1], [0, 0, 1, 1], [], []>} : vector<384x96xbf16>, vector<96x32xbf16>, vector<384x32xf32> -> vector<384x32xf32>
    %33 = arith.addf %25, %32 : vector<384x32xf32>
    %c55 = arith.constant 55 : index
    %c0_29 = arith.constant 0 : index
    %34 = vector.load %arg10[%c55, %c0_29] : memref<448x32xbf16, #tpu.memory_space<vmem>>, vector<384x32xbf16>
    %c56 = arith.constant 56 : index
    %c0_30 = arith.constant 0 : index
    %35 = vector.load %arg10[%c56, %c0_30] : memref<448x32xbf16, #tpu.memory_space<vmem>>, vector<384x32xbf16>
    %c57 = arith.constant 57 : index
    %c0_31 = arith.constant 0 : index
    %36 = vector.load %arg10[%c57, %c0_31] : memref<448x32xbf16, #tpu.memory_space<vmem>>, vector<384x32xbf16>
    %37 = tpu.concatenate %34, %35, %36 in 1 : vector<384x32xbf16>, vector<384x32xbf16>, vector<384x32xbf16> -> vector<384x96xbf16>
    %c2 = arith.constant 2 : index
    %c0_32 = arith.constant 0 : index
    %c0_33 = arith.constant 0 : index
    %38 = vector.load %arg5[%c2, %c0_32, %c0_33] : memref<3x96x32xbf16, #tpu.memory_space<vmem>>, vector<1x96x32xbf16>
    %39 = vector.shape_cast %38 : vector<1x96x32xbf16> to vector<96x32xbf16>
    %cst_34 = arith.constant dense<0.000000e+00> : vector<384x32xf32>
    %40 = tpu.matmul %37, %39, %cst_34 {dimension_numbers = #tpu.dot_dimension_numbers<[1], [0], [0], [1], [0, 0, 1, 1], [], []>} : vector<384x96xbf16>, vector<96x32xbf16>, vector<384x32xf32> -> vector<384x32xf32>
    %41 = arith.addf %33, %40 : vector<384x32xf32>
    %c0_35 = arith.constant 0 : index
    %c0_36 = arith.constant 0 : index
    %42 = vector.load %arg6[%c0_35, %c0_36] : memref<1x32xf32, #tpu.memory_space<vmem>>, vector<1x32xf32>
    %43 = vector.broadcast %42 : vector<1x32xf32> to vector<384x32xf32>
    %44 = arith.addf %41, %43 : vector<384x32xf32>
    %cst_37 = arith.constant 0.000000e+00 : f32
    %45 = vector.broadcast %cst_37 : f32 to vector<384x32xf32>
    %46 = arith.maximumf %44, %45 : vector<384x32xf32>
    %47 = arith.truncf %46 : vector<384x32xf32> to vector<384x32xbf16>
    %c0_38 = arith.constant 0 : index
    %c0_39 = arith.constant 0 : index
    %48 = vector.load %arg7[%c0_38, %c0_39] : memref<32x128xbf16, #tpu.memory_space<vmem>>, vector<32x128xbf16>
    %cst_40 = arith.constant dense<0.000000e+00> : vector<384x128xf32>
    %49 = tpu.matmul %47, %48, %cst_40 {dimension_numbers = #tpu.dot_dimension_numbers<[1], [0], [0], [1], [0, 0, 1, 1], [], []>} : vector<384x32xbf16>, vector<32x128xbf16>, vector<384x128xf32> -> vector<384x128xf32>
    %c0_41 = arith.constant 0 : index
    %c0_42 = arith.constant 0 : index
    %50 = vector.load %arg8[%c0_41, %c0_42] : memref<1x128xf32, #tpu.memory_space<vmem>>, vector<1x128xf32>
    %51 = vector.broadcast %50 : vector<1x128xf32> to vector<384x128xf32>
    %52 = arith.addf %49, %51 : vector<384x128xf32>
    %53 = arith.addf %52, %1 : vector<384x128xf32>
    %cst_43 = arith.constant 0.000000e+00 : f32
    %54 = vector.broadcast %cst_43 : f32 to vector<384x128xf32>
    %55 = arith.maximumf %53, %54 : vector<384x128xf32>
    %56 = vector.broadcast %2 : vector<384x1xf32> to vector<384x128xf32>
    %57 = arith.mulf %55, %56 : vector<384x128xf32>
    %c0_44 = arith.constant 0 : index
    %c0_45 = arith.constant 0 : index
    %c0_46 = arith.constant 0 : index
    %58 = vector.load %arg9[%c0_44, %c0_45, %c0_46] : memref<1x384x128xf32, #tpu.memory_space<vmem>>, vector<1x384x128xf32>
    %59 = vector.shape_cast %58 : vector<1x384x128xf32> to vector<384x128xf32>
    %60 = vector.shape_cast %57 : vector<384x128xf32> to vector<1x384x128xf32>
    tpu.vector_store %arg9[%c0_44, %c0_45, %c0_46], %60 {strides = array<i32>} : memref<1x384x128xf32, #tpu.memory_space<vmem>>, vector<1x384x128xf32>,
    return
  }
  func.func @transform_0(%arg0: i32) -> (i32, i32, i32) {
    %c0_i32 = arith.constant 0 : i32
    %c0_i32_0 = arith.constant 0 : i32
    %c0_i32_1 = arith.constant 0 : i32
    return %arg0, %c0_i32, %c0_i32_0 : i32, i32, i32
  }
  func.func @transform_1(%arg0: i32) -> (i32, i32) {
    %c0_i32 = arith.constant 0 : i32
    %c0_i32_0 = arith.constant 0 : i32
    %c0_i32_1 = arith.constant 0 : i32
    return %c0_i32, %c0_i32_0 : i32, i32
  }
  func.func @transform_2(%arg0: i32) -> (i32, i32) {
    %c0_i32 = arith.constant 0 : i32
    %c0_i32_0 = arith.constant 0 : i32
    %c0_i32_1 = arith.constant 0 : i32
    return %c0_i32, %c0_i32_0 : i32, i32
  }
  func.func @transform_3(%arg0: i32) -> (i32, i32) {
    %c0_i32 = arith.constant 0 : i32
    %c0_i32_0 = arith.constant 0 : i32
    %c0_i32_1 = arith.constant 0 : i32
    return %c0_i32, %c0_i32_0 : i32, i32
  }
  func.func @transform_4(%arg0: i32) -> (i32, i32, i32) {
    %c0_i32 = arith.constant 0 : i32
    %c0_i32_0 = arith.constant 0 : i32
    %c0_i32_1 = arith.constant 0 : i32
    %c0_i32_2 = arith.constant 0 : i32
    return %c0_i32, %c0_i32_0, %c0_i32_1 : i32, i32, i32
  }
  func.func @transform_5(%arg0: i32) -> (i32, i32) {
    %c0_i32 = arith.constant 0 : i32
    %c0_i32_0 = arith.constant 0 : i32
    %c0_i32_1 = arith.constant 0 : i32
    return %c0_i32, %c0_i32_0 : i32, i32
  }
  func.func @transform_6(%arg0: i32) -> (i32, i32) {
    %c0_i32 = arith.constant 0 : i32
    %c0_i32_0 = arith.constant 0 : i32
    %c0_i32_1 = arith.constant 0 : i32
    return %c0_i32, %c0_i32_0 : i32, i32
  }
  func.func @transform_7(%arg0: i32) -> (i32, i32) {
    %c0_i32 = arith.constant 0 : i32
    %c0_i32_0 = arith.constant 0 : i32
    %c0_i32_1 = arith.constant 0 : i32
    return %c0_i32, %c0_i32_0 : i32, i32
  }
  func.func @transform_8(%arg0: i32) -> (i32, i32, i32) {
    %c0_i32 = arith.constant 0 : i32
    %c0_i32_0 = arith.constant 0 : i32
    %c0_i32_1 = arith.constant 0 : i32
    return %arg0, %c0_i32, %c0_i32_0 : i32, i32, i32
  }
}

</mosaic_0001>

<llo_original>
// kernel: tpu_custom_call.1
$region0: #{tpu_custom_call.1}
  #allocation0 [shape = 'u32[]', space=smem, size = 0x4, offset = 0x4, fixed_abs, tag = 'smem constant byte address 0x4 - core index']
  #allocation1 [shape = 'u32[144,128]{1,0:T(1,128)}', space=vmem, size = 0x12000, scoped, tag = 'internal scratch']
  #allocation2 [shape = 'bf16[448,32]{1,0:T(8,128)(2,1)}', space=vmem, size = 0x1c000, scoped, tag = 'scratch operand']
  %s0 = inlined_call_operand.hbm [shape: f32[2,384,128], index: 0, kind: input, shape index: {}]
  %s1 = inlined_call_operand.vmem [shape: f32[384,1], index: 1, kind: input, shape index: {}]
  %s2 = inlined_call_operand.vmem [shape: bf16[128,32], index: 2, kind: input, shape index: {}]
  %s3 = inlined_call_operand.vmem [shape: f32[1,32], index: 3, kind: input, shape index: {}]
  %s4 = inlined_call_operand.vmem [shape: bf16[3,96,32], index: 4, kind: input, shape index: {}]
  %s5 = inlined_call_operand.vmem [shape: f32[1,32], index: 5, kind: input, shape index: {}]
  %s6 = inlined_call_operand.vmem [shape: bf16[32,128], index: 6, kind: input, shape index: {}]
  %s7 = inlined_call_operand.vmem [shape: f32[1,128], index: 7, kind: input, shape index: {}]
  %s8 = inlined_call_operand.hbm [shape: f32[2,384,128], index: 8, kind: output, shape index: {}]
  %s9 = sld [smem:[#allocation0]]
  $region69: #{tpu_custom_call.1} parent=0
    _
  %s11 = ssub.s32 1, %s9
  %s12 = scalar_select 0, %s11, %s9
  $region1: #{tpu_custom_call.1} parent=0
    #allocation3 [shape = 'u8[393216]{0}', space=vmem, size = 0x60000, scoped, tag = 'input window, operand 0']
    #allocation4 [shape = 's32[2]{0}', space=sflag, size = 0x8, scoped, tag = 'scoped memory for tpu_custom_call.1']
    #allocation5 [shape = 's32[2]{0}', space=sflag, size = 0x8, scoped, tag = 'scoped memory for tpu_custom_call.1']
    #allocation6 [shape = 'u8[393216]{0}', space=vmem, size = 0x60000, scoped, tag = 'output window, operand 0']
    %13 = vsyncpa [#allocation4], 0
    %s14 = scalar_lea.sflag [#allocation4], 1
    %15 = vsyncpa %s14, 0
    %16 = vsyncpa [#allocation5], 0
    %s17 = scalar_lea.sflag [#allocation5], 1
    %18 = vsyncpa %s17, 0
    loop: start=0, step=1, limit=4
    $region2: #{tpu_custom_call.1} parent=1 // loop_pre_header
      _
    $region3: #{tpu_custom_call.1} parent=1 // loop_header
      %s20 = sphi 0, %s24
      %p21 = scmp.ge.s32.totalorder %s20, 4
      %s30 = sphi 0, %s32
      %s33 = sphi 0, %s30
      %s34 = sphi 0, %s33
      %s50 = sphi 0, %s34
      %s54 = sphi 0, %s54
      %s56 = sphi 0, %s54
      %s57 = sphi 0, %s56
      %s71 = sphi 0, %s57
      %s75 = sphi 0, %s75
      %s77 = sphi 0, %s75
      %s78 = sphi 0, %s77
      %s92 = sphi 0, %s78
      %s96 = sphi 0, %s96
      %s98 = sphi 0, %s96
      %s99 = sphi 0, %s98
      %s113 = sphi 0, %s99
      %s117 = sphi 0, %s117
      %s119 = sphi 0, %s117
      %s120 = sphi 0, %s119
      %s134 = sphi 0, %s120
      %s138 = sphi 0, %s138
      %s140 = sphi 0, %s138
      %s141 = sphi 0, %s140
      %s155 = sphi 0, %s141
      %s159 = sphi 0, %s159
      %s161 = sphi 0, %s159
      %s162 = sphi 0, %s161
      %s176 = sphi 0, %s162
      %s180 = sphi 0, %s180
      %s182 = sphi 0, %s180
      %s183 = sphi 0, %s182
      %s197 = sphi 0, %s183
      %s203 = sphi 0, %s205
      %s206 = sphi 0, %s203
      %s207 = sphi 0, %s206
      %s223 = sphi 0, %s207
    $region4: #{tpu_custom_call.1} parent=1 // loop_header_branch
      %23 = sbr.rel (%p21) target = $region8
    $region5: #{tpu_custom_call.1} parent=1 // loop_body
      %s25 = ssub.s32 %s20, 1
      %s26 = ssub.s32 %s20, 2
      %s27 = sadd.s32 %s20, 1
      %s28 = ssub.s32 %s20, %s27
      %p29 = scmp.eq.s32.totalorder %s28, 0
      %s31 = sadd.s32 %s30, 1
      %s32 = scalar_select %p29, %s30, %s31
      %p35 = pneg %p29
      %p36 = scmp.eq.s32.totalorder %s20, 1
      %p37 = por %p35, %p36
      %p38 = scmp.ne.s32.totalorder %s30, %s33
      %p39 = scmp.eq.s32.totalorder %s20, 0
      %p40 = por %p38, %p39
      %p41 = scmp.ne.s32.totalorder %s30, %s33
      %p42 = scmp.eq.s32.totalorder %s25, 1
      %p43 = por %p41, %p42
      %p44 = scmp.ne.s32.totalorder %s33, %s34
      %p45 = scmp.eq.s32.totalorder %s25, 0
      %p46 = por %p44, %p45
      %p47 = scmp.ne.s32.totalorder %s33, %s34
      %p48 = scmp.eq.s32.totalorder %s26, 1
      %p49 = por %p47, %p48
      %p51 = scmp.ne.s32.totalorder %s34, %s50
      %p52 = scmp.eq.s32.totalorder %s26, 0
      %p53 = por %p51, %p52
      %s55 = sadd.s32 %s54, 1
      %p58 = scmp.eq.s32.totalorder %s20, 1
      %p59 = scmp.ne.s32.totalorder %s54, %s56
      %p60 = scmp.eq.s32.totalorder %s20, 0
      %p61 = por %p59, %p60
      %p62 = scmp.ne.s32.totalorder %s54, %s56
      %p63 = scmp.eq.s32.totalorder %s25, 1
      %p64 = por %p62, %p63
      %p65 = scmp.ne.s32.totalorder %s56, %s57
      %p66 = scmp.eq.s32.totalorder %s25, 0
      %p67 = por %p65, %p66
      %p68 = scmp.ne.s32.totalorder %s56, %s57
      %p69 = scmp.eq.s32.totalorder %s26, 1
      %p70 = por %p68, %p69
      %p72 = scmp.ne.s32.totalorder %s57, %s71
      %p73 = scmp.eq.s32.totalorder %s26, 0
      %p74 = por %p72, %p73
      %s76 = sadd.s32 %s75, 1
      %p79 = scmp.eq.s32.totalorder %s20, 1
      %p80 = scmp.ne.s32.totalorder %s75, %s77
      %p81 = scmp.eq.s32.totalorder %s20, 0
      %p82 = por %p80, %p81
      %p83 = scmp.ne.s32.totalorder %s75, %s77
      %p84 = scmp.eq.s32.totalorder %s25, 1
      %p85 = por %p83, %p84
      %p86 = scmp.ne.s32.totalorder %s77, %s78
      %p87 = scmp.eq.s32.totalorder %s25, 0
      %p88 = por %p86, %p87
      %p89 = scmp.ne.s32.totalorder %s77, %s78
      %p90 = scmp.eq.s32.totalorder %s26, 1
      %p91 = por %p89, %p90
      %p93 = scmp.ne.s32.totalorder %s78, %s92
      %p94 = scmp.eq.s32.totalorder %s26, 0
      %p95 = por %p93, %p94
      %s97 = sadd.s32 %s96, 1
      %p100 = scmp.eq.s32.totalorder %s20, 1
      %p101 = scmp.ne.s32.totalorder %s96, %s98
      %p102 = scmp.eq.s32.totalorder %s20, 0
      %p103 = por %p101, %p102
      %p104 = scmp.ne.s32.totalorder %s96, %s98
      %p105 = scmp.eq.s32.totalorder %s25, 1
      %p106 = por %p104, %p105
      %p107 = scmp.ne.s32.totalorder %s98, %s99
      %p108 = scmp.eq.s32.totalorder %s25, 0
      %p109 = por %p107, %p108
      %p110 = scmp.ne.s32.totalorder %s98, %s99
      %p111 = scmp.eq.s32.totalorder %s26, 1
      %p112 = por %p110, %p111
      %p114 = scmp.ne.s32.totalorder %s99, %s113
      %p115 = scmp.eq.s32.totalorder %s26, 0
      %p116 = por %p114, %p115
      %s118 = sadd.s32 %s117, 1
      %p121 = scmp.eq.s32.totalorder %s20, 1
      %p122 = scmp.ne.s32.totalorder %s117, %s119
      %p123 = scmp.eq.s32.totalorder %s20, 0
      %p124 = por %p122, %p123
      %p125 = scmp.ne.s32.totalorder %s117, %s119
      %p126 = scmp.eq.s32.totalorder %s25, 1
      %p127 = por %p125, %p126
      %p128 = scmp.ne.s32.totalorder %s119, %s120
      %p129 = scmp.eq.s32.totalorder %s25, 0
      %p130 = por %p128, %p129
      %p131 = scmp.ne.s32.totalorder %s119, %s120
      %p132 = scmp.eq.s32.totalorder %s26, 1
      %p133 = por %p131, %p132
      %p135 = scmp.ne.s32.totalorder %s120, %s134
      %p136 = scmp.eq.s32.totalorder %s26, 0
      %p137 = por %p135, %p136
      %s139 = sadd.s32 %s138, 1
      %p142 = scmp.eq.s32.totalorder %s20, 1
      %p143 = scmp.ne.s32.totalorder %s138, %s140
      %p144 = scmp.eq.s32.totalorder %s20, 0
      %p145 = por %p143, %p144
      %p146 = scmp.ne.s32.totalorder %s138, %s140
      %p147 = scmp.eq.s32.totalorder %s25, 1
      %p148 = por %p146, %p147
      %p149 = scmp.ne.s32.totalorder %s140, %s141
      %p150 = scmp.eq.s32.totalorder %s25, 0
      %p151 = por %p149, %p150
      %p152 = scmp.ne.s32.totalorder %s140, %s141
      %p153 = scmp.eq.s32.totalorder %s26, 1
      %p154 = por %p152, %p153
      %p156 = scmp.ne.s32.totalorder %s141, %s155
      %p157 = scmp.eq.s32.totalorder %s26, 0
      %p158 = por %p156, %p157
      %s160 = sadd.s32 %s159, 1
      %p163 = scmp.eq.s32.totalorder %s20, 1
      %p164 = scmp.ne.s32.totalorder %s159, %s161
      %p165 = scmp.eq.s32.totalorder %s20, 0
      %p166 = por %p164, %p165
      %p167 = scmp.ne.s32.totalorder %s159, %s161
      %p168 = scmp.eq.s32.totalorder %s25, 1
      %p169 = por %p167, %p168
      %p170 = scmp.ne.s32.totalorder %s161, %s162
      %p171 = scmp.eq.s32.totalorder %s25, 0
      %p172 = por %p170, %p171
      %p173 = scmp.ne.s32.totalorder %s161, %s162
      %p174 = scmp.eq.s32.totalorder %s26, 1
      %p175 = por %p173, %p174
      %p177 = scmp.ne.s32.totalorder %s162, %s176
      %p178 = scmp.eq.s32.totalorder %s26, 0
      %p179 = por %p177, %p178
      %s181 = sadd.s32 %s180, 1
      %p184 = scmp.eq.s32.totalorder %s20, 1
      %p185 = scmp.ne.s32.totalorder %s180, %s182
      %p186 = scmp.eq.s32.totalorder %s20, 0
      %p187 = por %p185, %p186
      %p188 = scmp.ne.s32.totalorder %s180, %s182
      %p189 = scmp.eq.s32.totalorder %s25, 1
      %p190 = por %p188, %p189
      %p191 = scmp.ne.s32.totalorder %s182, %s183
      %p192 = scmp.eq.s32.totalorder %s25, 0
      %p193 = por %p191, %p192
      %p194 = scmp.ne.s32.totalorder %s182, %s183
      %p195 = scmp.eq.s32.totalorder %s26, 1
      %p196 = por %p194, %p195
      %p198 = scmp.ne.s32.totalorder %s183, %s197
      %p199 = scmp.eq.s32.totalorder %s26, 0
      %p200 = por %p198, %p199
      %s201 = ssub.s32 %s20, %s27
      %p202 = scmp.eq.s32.totalorder %s201, 0
      %s204 = sadd.s32 %s203, 1
      %s205 = scalar_select %p202, %s203, %s204
      %p208 = pneg %p202
      %p209 = scmp.eq.s32.totalorder %s20, 1
      %p210 = por %p208, %p209
      %p211 = scmp.ne.s32.totalorder %s203, %s206
      %p212 = scmp.eq.s32.totalorder %s20, 0
      %p213 = por %p211, %p212
      %p214 = scmp.ne.s32.totalorder %s203, %s206
      %p215 = scmp.eq.s32.totalorder %s25, 1
      %p216 = por %p214, %p215
      %p217 = scmp.ne.s32.totalorder %s206, %s207
      %p218 = scmp.eq.s32.totalorder %s25, 0
      %p219 = por %p217, %p218
      %p220 = scmp.ne.s32.totalorder %s206, %s207
      %p221 = scmp.eq.s32.totalorder %s26, 1
      %p222 = por %p220, %p221
      %p224 = scmp.ne.s32.totalorder %s207, %s223
      %p225 = scmp.eq.s32.totalorder %s26, 0
      %p226 = por %p224, %p225
      %p227 = scmp.le.s32.totalorder 1, %s20
      %p228 = scmp.lt.s32.totalorder %s20, 3
      %p229 = pnand %p227, %p228
      %p230 = pneg %p229
      // Predicated region
      $region9: #{tpu_custom_call.1} parent=5 // pred_check
        _
      $region10: #{tpu_custom_call.1} parent=5 // pred_check_branch
        %232 = sbr.rel (%p229) target = $region12
      $region11: #{tpu_custom_call.1} parent=5 // pred_region
        %s233 = ssub.s32 %s20, 1
        // Predicated region
        $region13: #{tpu_custom_call.1} parent=11 // pred_check
          %p234 = pneg %p67
        $region14: #{tpu_custom_call.1} parent=11 // pred_check_branch
          %236 = sbr.rel (%p234) target = $region16
        $region15: #{tpu_custom_call.1} parent=11 // pred_region
          _
        $region16: #{tpu_custom_call.1} parent=11 // pred_fallthru
          _
        // Predicated region
        $region17: #{tpu_custom_call.1} parent=11 // pred_check
          %p237 = pneg %p88
        $region18: #{tpu_custom_call.1} parent=11 // pred_check_branch
          %239 = sbr.rel (%p237) target = $region20
        $region19: #{tpu_custom_call.1} parent=11 // pred_region
          _
        $region20: #{tpu_custom_call.1} parent=11 // pred_fallthru
          _
        // Predicated region
        $region21: #{tpu_custom_call.1} parent=11 // pred_check
          %p240 = pneg %p109
        $region22: #{tpu_custom_call.1} parent=11 // pred_check_branch
          %242 = sbr.rel (%p240) target = $region24
        $region23: #{tpu_custom_call.1} parent=11 // pred_region
          _
        $region24: #{tpu_custom_call.1} parent=11 // pred_fallthru
          _
        // Predicated region
        $region25: #{tpu_custom_call.1} parent=11 // pred_check
          %p243 = pneg %p130
        $region26: #{tpu_custom_call.1} parent=11 // pred_check_branch
          %245 = sbr.rel (%p243) target = $region28
        $region27: #{tpu_custom_call.1} parent=11 // pred_region
          _
        $region28: #{tpu_custom_call.1} parent=11 // pred_fallthru
          _
        // Predicated region
        $region29: #{tpu_custom_call.1} parent=11 // pred_check
          %p246 = pneg %p151
        $region30: #{tpu_custom_call.1} parent=11 // pred_check_branch
          %248 = sbr.rel (%p246) target = $region32
        $region31: #{tpu_custom_call.1} parent=11 // pred_region
          _
        $region32: #{tpu_custom_call.1} parent=11 // pred_fallthru
          _
        // Predicated region
        $region33: #{tpu_custom_call.1} parent=11 // pred_check
          %p249 = pneg %p172
        $region34: #{tpu_custom_call.1} parent=11 // pred_check_branch
          %251 = sbr.rel (%p249) target = $region36
        $region35: #{tpu_custom_call.1} parent=11 // pred_region
          _
        $region36: #{tpu_custom_call.1} parent=11 // pred_fallthru
          _
        // Predicated region
        $region37: #{tpu_custom_call.1} parent=11 // pred_check
          %p252 = pneg %p193
        $region38: #{tpu_custom_call.1} parent=11 // pred_check_branch
          %254 = sbr.rel (%p252) target = $region40
        $region39: #{tpu_custom_call.1} parent=11 // pred_region
          _
        $region40: #{tpu_custom_call.1} parent=11 // pred_fallthru
          _
      $region12: #{tpu_custom_call.1} parent=5 // pred_fallthru
        _
      %p255 = scmp.lt.s32.totalorder %s20, 2
      // Predicated region
      $region41: #{tpu_custom_call.1} parent=5 // pred_check
        %p256 = pneg %p255
      $region42: #{tpu_custom_call.1} parent=5 // pred_check_branch
        %258 = sbr.rel (%p256) target = $region44
      $region43: #{tpu_custom_call.1} parent=5 // pred_region
        // Predicated region
        $region45: #{tpu_custom_call.1} parent=43 // pred_check
          %p259 = pneg %p40
        $region46: #{tpu_custom_call.1} parent=43 // pred_check_branch
          %261 = sbr.rel (%p259) target = $region48
        $region47: #{tpu_custom_call.1} parent=43 // pred_region
          %s262 = sand.u32 %s30, 1
          %s263 = scalar_lea.sflag [#allocation4], %s262
          %s264 = sand.u32 %s30, 1
          %s265 = smul.addr %s264, 384
          %s266 = scalar_lea.vmem [#allocation3], %s265
          %s268 = ssub.s32 6144, 6144
          %269 = vsyncadd %s263, %s268
          %s270 = smul.addr %s20, 48
          %s271 = smul.addr %s270, 128
          %s272 = scalar_lea.hbm %s0, %s271
          %s273 = sshll.u32 %s266, 4
          %s274 = int_to_ptr.vmem [resolvable:$true] %s273
          %279 = dma.hbm_to_vmem [thread:$0]  %s272, 6144, %s274, %s263, 128, 128, 8
        $region48: #{tpu_custom_call.1} parent=43 // pred_fallthru
          _
      $region44: #{tpu_custom_call.1} parent=5 // pred_fallthru
        _
      %p280 = scmp.le.s32.totalorder 1, %s20
      %p281 = scmp.lt.s32.totalorder %s20, 3
      %p282 = pnand %p280, %p281
      %p283 = pneg %p282
      // Predicated region
      $region49: #{tpu_custom_call.1} parent=5 // pred_check
        _
      $region50: #{tpu_custom_call.1} parent=5 // pred_check_branch
        %285 = sbr.rel (%p282) target = $region52
      $region51: #{tpu_custom_call.1} parent=5 // pred_region
        %s286 = ssub.s32 %s20, 1
        %s287 = sand.u32 %s33, 1
        %s288 = scalar_lea.sflag [#allocation4], %s287
        %s289 = sand.u32 %s33, 1
        %s290 = smul.addr %s289, 384
        %s291 = scalar_lea.vmem [#allocation3], %s290
        // Predicated region
        $region53: #{tpu_custom_call.1} parent=51 // pred_check
          %p292 = pneg %p46
        $region54: #{tpu_custom_call.1} parent=51 // pred_check_branch
          %294 = sbr.rel (%p292) target = $region56
        $region55: #{tpu_custom_call.1} parent=51 // pred_region
          %295 = dma.done %s288, 6144
        $region56: #{tpu_custom_call.1} parent=51 // pred_fallthru
          _
        %s296 = sand.u32 %s33, 1
        %s297 = scalar_lea.sflag [#allocation4], %s296
        %s298 = sand.u32 %s33, 1
        %s299 = smul.addr %s298, 384
        %s300 = scalar_lea.vmem [#allocation3], %s299
        %p301 = pneg %p46
        %p302 = pneg %p43
        %p303 = pneg %p67
        %p304 = pneg %p64
        %p305 = pneg %p88
        %p306 = pneg %p85
        %p307 = pneg %p109
        %p308 = pneg %p106
        %p309 = pneg %p130
        %p310 = pneg %p127
        %p311 = pneg %p151
        %p312 = pneg %p148
        %p313 = pneg %p172
        %p314 = pneg %p169
        %p315 = pneg %p193
        %p316 = pneg %p190
        %p317 = pneg %p219
        %p318 = pneg %p216
        %s319 = sand.u32 %s206, 1
        %s320 = scalar_lea.sflag [#allocation5], %s319
        %s321 = sand.u32 %s206, 1
        %s322 = smul.addr %s321, 384
        %s323 = scalar_lea.vmem [#allocation6], %s322
        %v325 = vld [vmem:[%s291] sm:$0xff]
        %v326 = vld [vmem:[%s291 + $0x8] sm:$0xff]
        %v327 = vld [vmem:[%s291 + $0x10] sm:$0xff]
        %v328 = vld [vmem:[%s291 + $0x18] sm:$0xff]
        %v329 = vld [vmem:[%s291 + $0x20] sm:$0xff]
        %v330 = vld [vmem:[%s291 + $0x28] sm:$0xff]
        %v331 = vld [vmem:[%s291 + $0x30] sm:$0xff]
        %v332 = vld [vmem:[%s291 + $0x38] sm:$0xff]
        %v333 = vld [vmem:[%s291 + $0x40] sm:$0xff]
        %v334 = vld [vmem:[%s291 + $0x48] sm:$0xff]
        %v335 = vld [vmem:[%s291 + $0x50] sm:$0xff]
        %v336 = vld [vmem:[%s291 + $0x58] sm:$0xff]
        %v337 = vld [vmem:[%s291 + $0x60] sm:$0xff]
        %v338 = vld [vmem:[%s291 + $0x68] sm:$0xff]
        %v339 = vld [vmem:[%s291 + $0x70] sm:$0xff]
        %v340 = vld [vmem:[%s291 + $0x78] sm:$0xff]
        %v341 = vld [vmem:[%s291 + $0x80] sm:$0xff]
        %v342 = vld [vmem:[%s291 + $0x88] sm:$0xff]
        %v343 = vld [vmem:[%s291 + $0x90] sm:$0xff]
        %v344 = vld [vmem:[%s291 + $0x98] sm:$0xff]
        %v345 = vld [vmem:[%s291 + $0xa0] sm:$0xff]
        %v346 = vld [vmem:[%s291 + $0xa8] sm:$0xff]
        %v347 = vld [vmem:[%s291 + $0xb0] sm:$0xff]
        %v348 = vld [vmem:[%s291 + $0xb8] sm:$0xff]
        %v349 = vld [vmem:[%s291 + $0xc0] sm:$0xff]
        %v350 = vld [vmem:[%s291 + $0xc8] sm:$0xff]
        %v351 = vld [vmem:[%s291 + $0xd0] sm:$0xff]
        %v352 = vld [vmem:[%s291 + $0xd8] sm:$0xff]
        %v353 = vld [vmem:[%s291 + $0xe0] sm:$0xff]
        %v354 = vld [vmem:[%s291 + $0xe8] sm:$0xff]
        %v355 = vld [vmem:[%s291 + $0xf0] sm:$0xff]
        %v356 = vld [vmem:[%s291 + $0xf8] sm:$0xff]
        %v357 = vld [vmem:[%s291 + $0x100] sm:$0xff]
        %v358 = vld [vmem:[%s291 + $0x108] sm:$0xff]
        %v359 = vld [vmem:[%s291 + $0x110] sm:$0xff]
        %v360 = vld [vmem:[%s291 + $0x118] sm:$0xff]
        %v361 = vld [vmem:[%s291 + $0x120] sm:$0xff]
        %v362 = vld [vmem:[%s291 + $0x128] sm:$0xff]
        %v363 = vld [vmem:[%s291 + $0x130] sm:$0xff]
        %v364 = vld [vmem:[%s291 + $0x138] sm:$0xff]
        %v365 = vld [vmem:[%s291 + $0x140] sm:$0xff]
        %v366 = vld [vmem:[%s291 + $0x148] sm:$0xff]
        %v367 = vld [vmem:[%s291 + $0x150] sm:$0xff]
        %v368 = vld [vmem:[%s291 + $0x158] sm:$0xff]
        %v369 = vld [vmem:[%s291 + $0x160] sm:$0xff]
        %v370 = vld [vmem:[%s291 + $0x168] sm:$0xff]
        %v371 = vld [vmem:[%s291 + $0x170] sm:$0xff]
        %v372 = vld [vmem:[%s291 + $0x178] sm:$0xff]
        %v373 = vld [vmem:[%s1] sm:$0xff]
        %v374 = vld [vmem:[%s1 + $0x8] sm:$0xff]
        %v375 = vld [vmem:[%s1 + $0x10] sm:$0xff]
        %v376 = vld [vmem:[%s1 + $0x18] sm:$0xff]
        %v377 = vld [vmem:[%s1 + $0x20] sm:$0xff]
        %v378 = vld [vmem:[%s1 + $0x28] sm:$0xff]
        %v379 = vld [vmem:[%s1 + $0x30] sm:$0xff]
        %v380 = vld [vmem:[%s1 + $0x38] sm:$0xff]
        %v381 = vld [vmem:[%s1 + $0x40] sm:$0xff]
        %v382 = vld [vmem:[%s1 + $0x48] sm:$0xff]
        %v383 = vld [vmem:[%s1 + $0x50] sm:$0xff]
        %v384 = vld [vmem:[%s1 + $0x58] sm:$0xff]
        %v385 = vld [vmem:[%s1 + $0x60] sm:$0xff]
        %v386 = vld [vmem:[%s1 + $0x68] sm:$0xff]
        %v387 = vld [vmem:[%s1 + $0x70] sm:$0xff]
        %v388 = vld [vmem:[%s1 + $0x78] sm:$0xff]
        %v389 = vld [vmem:[%s1 + $0x80] sm:$0xff]
        %v390 = vld [vmem:[%s1 + $0x88] sm:$0xff]
        %v391 = vld [vmem:[%s1 + $0x90] sm:$0xff]
        %v392 = vld [vmem:[%s1 + $0x98] sm:$0xff]
        %v393 = vld [vmem:[%s1 + $0xa0] sm:$0xff]
        %v394 = vld [vmem:[%s1 + $0xa8] sm:$0xff]
        %v395 = vld [vmem:[%s1 + $0xb0] sm:$0xff]
        %v396 = vld [vmem:[%s1 + $0xb8] sm:$0xff]
        %v397 = vld [vmem:[%s1 + $0xc0] sm:$0xff]
        %v398 = vld [vmem:[%s1 + $0xc8] sm:$0xff]
        %v399 = vld [vmem:[%s1 + $0xd0] sm:$0xff]
        %v400 = vld [vmem:[%s1 + $0xd8] sm:$0xff]
        %v401 = vld [vmem:[%s1 + $0xe0] sm:$0xff]
        %v402 = vld [vmem:[%s1 + $0xe8] sm:$0xff]
        %v403 = vld [vmem:[%s1 + $0xf0] sm:$0xff]
        %v404 = vld [vmem:[%s1 + $0xf8] sm:$0xff]
        %v405 = vld [vmem:[%s1 + $0x100] sm:$0xff]
        %v406 = vld [vmem:[%s1 + $0x108] sm:$0xff]
        %v407 = vld [vmem:[%s1 + $0x110] sm:$0xff]
        %v408 = vld [vmem:[%s1 + $0x118] sm:$0xff]
        %v409 = vld [vmem:[%s1 + $0x120] sm:$0xff]
        %v410 = vld [vmem:[%s1 + $0x128] sm:$0xff]
        %v411 = vld [vmem:[%s1 + $0x130] sm:$0xff]
        %v412 = vld [vmem:[%s1 + $0x138] sm:$0xff]
        %v413 = vld [vmem:[%s1 + $0x140] sm:$0xff]
        %v414 = vld [vmem:[%s1 + $0x148] sm:$0xff]
        %v415 = vld [vmem:[%s1 + $0x150] sm:$0xff]
        %v416 = vld [vmem:[%s1 + $0x158] sm:$0xff]
        %v417 = vld [vmem:[%s1 + $0x160] sm:$0xff]
        %v418 = vld [vmem:[%s1 + $0x168] sm:$0xff]
        %v419 = vld [vmem:[%s1 + $0x170] sm:$0xff]
        %v420 = vld [vmem:[%s1 + $0x178] sm:$0xff]
        %v421 = vpack.c.bf16 %v326, %v325
        %v422 = vpack.c.bf16 %v328, %v327
        %v423 = vpack.c.bf16 %v330, %v329
        %v424 = vpack.c.bf16 %v332, %v331
        %v425 = vpack.c.bf16 %v334, %v333
        %v426 = vpack.c.bf16 %v336, %v335
        %v427 = vpack.c.bf16 %v338, %v337
        %v428 = vpack.c.bf16 %v340, %v339
        %v429 = vpack.c.bf16 %v342, %v341
        %v430 = vpack.c.bf16 %v344, %v343
        %v431 = vpack.c.bf16 %v346, %v345
        %v432 = vpack.c.bf16 %v348, %v347
        %v433 = vpack.c.bf16 %v350, %v349
        %v434 = vpack.c.bf16 %v352, %v351
        %v435 = vpack.c.bf16 %v354, %v353
        %v436 = vpack.c.bf16 %v356, %v355
        %v437 = vpack.c.bf16 %v358, %v357
        %v438 = vpack.c.bf16 %v360, %v359
        %v439 = vpack.c.bf16 %v362, %v361
        %v440 = vpack.c.bf16 %v364, %v363
        %v441 = vpack.c.bf16 %v366, %v365
        %v442 = vpack.c.bf16 %v368, %v367
        %v443 = vpack.c.bf16 %v370, %v369
        %v444 = vpack.c.bf16 %v372, %v371
        %v445 = vld [vmem:[%s2] sm:$0xf]
        %v446 = vld [vmem:[%s2 + $0x4] sm:$0xf]
        %v447 = vld [vmem:[%s2 + $0x8] sm:$0xf]
        %v448 = vld [vmem:[%s2 + $0xc] sm:$0xf]
        %v449 = vld [vmem:[%s2 + $0x10] sm:$0xf]
        %v450 = vld [vmem:[%s2 + $0x14] sm:$0xf]
        %v451 = vld [vmem:[%s2 + $0x18] sm:$0xf]
        %v452 = vld [vmem:[%s2 + $0x1c] sm:$0xf]
        %v453 = vld [vmem:[%s2 + $0x20] sm:$0xf]
        %v454 = vld [vmem:[%s2 + $0x24] sm:$0xf]
        %v455 = vld [vmem:[%s2 + $0x28] sm:$0xf]
        %v456 = vld [vmem:[%s2 + $0x2c] sm:$0xf]
        %v457 = vld [vmem:[%s2 + $0x30] sm:$0xf]
        %v458 = vld [vmem:[%s2 + $0x34] sm:$0xf]
        %v459 = vld [vmem:[%s2 + $0x38] sm:$0xf]
        %v460 = vld [vmem:[%s2 + $0x3c] sm:$0xf]
        %v461 = vld [vmem:[%s3] sm:$0x1]
        %v463 = vlaneseq
        %v464 = vshrl.u32 %v463, 7
        %v465 = vsub.s32 0, %v464
        %v466 = vrot.slane %v461, %v465
        %v484 = vunpack.c.l.b16 %v445
        %v485 = vunpack.c.l.b16 %v446
        %v486 = vunpack.c.l.b16 %v447
        %v487 = vunpack.c.l.b16 %v448
        %v488 = vunpack.c.l.b16 %v449
        %v489 = vunpack.c.l.b16 %v450
        %v490 = vunpack.c.l.b16 %v451
        %v491 = vunpack.c.l.b16 %v452
        %v492 = vunpack.c.l.b16 %v453
        %v493 = vunpack.c.l.b16 %v454
        %v494 = vunpack.c.l.b16 %v455
        %v495 = vunpack.c.l.b16 %v456
        %v496 = vunpack.c.l.b16 %v457
        %v497 = vunpack.c.l.b16 %v458
        %v498 = vunpack.c.l.b16 %v459
        %v499 = vunpack.c.l.b16 %v460
        %v500 = vpack.c.b16 %v485, %v484
        %v501 = vpack.c.b16 %v487, %v486
        %v502 = vpack.c.b16 %v489, %v488
        %v503 = vpack.c.b16 %v491, %v490
        %v504 = vpack.c.b16 %v493, %v492
        %v505 = vpack.c.b16 %v495, %v494
        %v506 = vpack.c.b16 %v497, %v496
        %v507 = vpack.c.b16 %v499, %v498
        %516 = vmatprep.subr.bf16.mxu0 0
        %517 = vmatpush1.bf16.msra.mxu0 %v507
        %518 = vmatprep.subr.bf16.mxu0 0
        %519 = vmatpush1.bf16.msra.mxu0 %v506
        %520 = vmatprep.subr.bf16.mxu0 0
        %521 = vmatpush1.bf16.msra.mxu0 %v505
        %522 = vmatprep.subr.bf16.mxu0 0
        %523 = vmatpush1.bf16.msra.mxu0 %v504
        %524 = vmatprep.subr.bf16.mxu0 0
        %525 = vmatpush1.bf16.msra.mxu0 %v503
        %526 = vmatprep.subr.bf16.mxu0 0
        %527 = vmatpush1.bf16.msra.mxu0 %v502
        %528 = vmatprep.subr.bf16.mxu0 0
        %529 = vmatpush1.bf16.msra.mxu0 %v501
        %530 = vmatprep.subr.bf16.mxu0 0
        %531 = vmatpush1.bf16.msra.mxu0 %v500
        %532 = vmatprep.subr.bf16.mxu0 0
        %533 = vmatpush2.bf16.msra.mxu0 0
        %534 = vmatprep.subr.bf16.mxu0 0
        %535 = vmatpush2.bf16.msra.mxu0 0
        %536 = vmatprep.subr.bf16.mxu0 0
        %537 = vmatpush2.bf16.msra.mxu0 0
        %538 = vmatprep.subr.bf16.mxu0 0
        %539 = vmatpush2.bf16.msra.mxu0 0
        %540 = vmatprep.subr.bf16.mxu0 0
        %541 = vmatpush2.bf16.msra.mxu0 0
        %542 = vmatprep.subr.bf16.mxu0 0
        %543 = vmatpush2.bf16.msra.mxu0 0
        %544 = vmatprep.subr.bf16.mxu0 0
        %545 = vmatpush2.bf16.msra.mxu0 0
        %546 = vmatprep.subr.bf16.mxu0 0
        %547 = vmatpush2.bf16.msra.mxu0 0
        %548 = vmatprep.mubr.bf16.mxu0 0
        %549 = vmatmul.mubr.bf16.gmra.mxu0 %v421
        %v550 = vpop.f32.mrf.mxu0
        %v551 = vadd.f32 %v466, %v550
        %v552 = vpop.f32.mrf.mxu0
        %v553 = vpop.f32.mrf.mxu0
        %v554 = vadd.f32 %v466, %v553
        %v555 = vpop.f32.mrf.mxu0
        %556 = vmatprep.mubr.bf16.mxu0 0
        %557 = vmatmul.mubr.bf16.gmra.mxu0 %v422
        %v558 = vpop.f32.mrf.mxu0
        %v559 = vadd.f32 %v466, %v558
        %v560 = vpop.f32.mrf.mxu0
        %v561 = vpop.f32.mrf.mxu0
        %v562 = vadd.f32 %v466, %v561
        %v563 = vpop.f32.mrf.mxu0
        %564 = vmatprep.mubr.bf16.mxu0 0
        %565 = vmatmul.mubr.bf16.gmra.mxu0 %v423
        %v566 = vpop.f32.mrf.mxu0
        %v567 = vadd.f32 %v466, %v566
        %v568 = vpop.f32.mrf.mxu0
        %v569 = vpop.f32.mrf.mxu0
        %v570 = vadd.f32 %v466, %v569
        %v571 = vpop.f32.mrf.mxu0
        %572 = vmatprep.mubr.bf16.mxu0 0
        %573 = vmatmul.mubr.bf16.gmra.mxu0 %v424
        %v574 = vpop.f32.mrf.mxu0
        %v575 = vadd.f32 %v466, %v574
        %v576 = vpop.f32.mrf.mxu0
        %v577 = vpop.f32.mrf.mxu0
        %v578 = vadd.f32 %v466, %v577
        %v579 = vpop.f32.mrf.mxu0
        %580 = vmatprep.mubr.bf16.mxu0 0
        %581 = vmatmul.mubr.bf16.gmra.mxu0 %v425
        %v582 = vpop.f32.mrf.mxu0
        %v583 = vadd.f32 %v466, %v582
        %v584 = vpop.f32.mrf.mxu0
        %v585 = vpop.f32.mrf.mxu0
        %v586 = vadd.f32 %v466, %v585
        %v587 = vpop.f32.mrf.mxu0
        %588 = vmatprep.mubr.bf16.mxu0 0
        %589 = vmatmul.mubr.bf16.gmra.mxu0 %v426
        %v590 = vpop.f32.mrf.mxu0
        %v591 = vadd.f32 %v466, %v590
        %v592 = vpop.f32.mrf.mxu0
        %v593 = vpop.f32.mrf.mxu0
        %v594 = vadd.f32 %v466, %v593
        %v595 = vpop.f32.mrf.mxu0
        %596 = vmatprep.mubr.bf16.mxu0 0
        %597 = vmatmul.mubr.bf16.gmra.mxu0 %v427
        %v598 = vpop.f32.mrf.mxu0
        %v599 = vadd.f32 %v466, %v598
        %v600 = vpop.f32.mrf.mxu0
        %v601 = vpop.f32.mrf.mxu0
        %v602 = vadd.f32 %v466, %v601
        %v603 = vpop.f32.mrf.mxu0
        %604 = vmatprep.mubr.bf16.mxu0 0
        %605 = vmatmul.mubr.bf16.gmra.mxu0 %v428
        %v606 = vpop.f32.mrf.mxu0
        %v607 = vadd.f32 %v466, %v606
        %v608 = vpop.f32.mrf.mxu0
        %v609 = vpop.f32.mrf.mxu0
        %v610 = vadd.f32 %v466, %v609
        %v611 = vpop.f32.mrf.mxu0
        %612 = vmatprep.mubr.bf16.mxu0 0
        %613 = vmatmul.mubr.bf16.gmra.mxu0 %v429
        %v614 = vpop.f32.mrf.mxu0
        %v615 = vadd.f32 %v466, %v614
        %v616 = vpop.f32.mrf.mxu0
        %v617 = vpop.f32.mrf.mxu0
        %v618 = vadd.f32 %v466, %v617
        %v619 = vpop.f32.mrf.mxu0
        %620 = vmatprep.mubr.bf16.mxu0 0
        %621 = vmatmul.mubr.bf16.gmra.mxu0 %v430
        %v622 = vpop.f32.mrf.mxu0
        %v623 = vadd.f32 %v466, %v622
        %v624 = vpop.f32.mrf.mxu0
        %v625 = vpop.f32.mrf.mxu0
        %v626 = vadd.f32 %v466, %v625
        %v627 = vpop.f32.mrf.mxu0
        %628 = vmatprep.mubr.bf16.mxu0 0
        %629 = vmatmul.mubr.bf16.gmra.mxu0 %v431
        %v630 = vpop.f32.mrf.mxu0
        %v631 = vadd.f32 %v466, %v630
        %v632 = vpop.f32.mrf.mxu0
        %v633 = vpop.f32.mrf.mxu0
        %v634 = vadd.f32 %v466, %v633
        %v635 = vpop.f32.mrf.mxu0
        %636 = vmatprep.mubr.bf16.mxu0 0
        %637 = vmatmul.mubr.bf16.gmra.mxu0 %v432
        %v638 = vpop.f32.mrf.mxu0
        %v639 = vadd.f32 %v466, %v638
        %v640 = vpop.f32.mrf.mxu0
        %v641 = vpop.f32.mrf.mxu0
        %v642 = vadd.f32 %v466, %v641
        %v643 = vpop.f32.mrf.mxu0
        %644 = vmatprep.mubr.bf16.mxu0 0
        %645 = vmatmul.mubr.bf16.gmra.mxu0 %v433
        %v646 = vpop.f32.mrf.mxu0
        %v647 = vadd.f32 %v466, %v646
        %v648 = vpop.f32.mrf.mxu0
        %v649 = vpop.f32.mrf.mxu0
        %v650 = vadd.f32 %v466, %v649
        %v651 = vpop.f32.mrf.mxu0
        %652 = vmatprep.mubr.bf16.mxu0 0
        %653 = vmatmul.mubr.bf16.gmra.mxu0 %v434
        %v654 = vpop.f32.mrf.mxu0
        %v655 = vadd.f32 %v466, %v654
        %v656 = vpop.f32.mrf.mxu0
        %v657 = vpop.f32.mrf.mxu0
        %v658 = vadd.f32 %v466, %v657
        %v659 = vpop.f32.mrf.mxu0
        %660 = vmatprep.mubr.bf16.mxu0 0
        %661 = vmatmul.mubr.bf16.gmra.mxu0 %v435
        %v662 = vpop.f32.mrf.mxu0
        %v663 = vadd.f32 %v466, %v662
        %v664 = vpop.f32.mrf.mxu0
        %v665 = vpop.f32.mrf.mxu0
        %v666 = vadd.f32 %v466, %v665
        %v667 = vpop.f32.mrf.mxu0
        %668 = vmatprep.mubr.bf16.mxu0 0
        %669 = vmatmul.mubr.bf16.gmra.mxu0 %v436
        %v670 = vpop.f32.mrf.mxu0
        %v671 = vadd.f32 %v466, %v670
        %v672 = vpop.f32.mrf.mxu0
        %v673 = vpop.f32.mrf.mxu0
        %v674 = vadd.f32 %v466, %v673
        %v675 = vpop.f32.mrf.mxu0
        %676 = vmatprep.mubr.bf16.mxu0 0
        %677 = vmatmul.mubr.bf16.gmra.mxu0 %v437
        %v678 = vpop.f32.mrf.mxu0
        %v679 = vadd.f32 %v466, %v678
        %v680 = vpop.f32.mrf.mxu0
        %v681 = vpop.f32.mrf.mxu0
        %v682 = vadd.f32 %v466, %v681
        %v683 = vpop.f32.mrf.mxu0
        %684 = vmatprep.mubr.bf16.mxu0 0
        %685 = vmatmul.mubr.bf16.gmra.mxu0 %v438
        %v686 = vpop.f32.mrf.mxu0
        %v687 = vadd.f32 %v466, %v686
        %v688 = vpop.f32.mrf.mxu0
        %v689 = vpop.f32.mrf.mxu0
        %v690 = vadd.f32 %v466, %v689
        %v691 = vpop.f32.mrf.mxu0
        %692 = vmatprep.mubr.bf16.mxu0 0
        %693 = vmatmul.mubr.bf16.gmra.mxu0 %v439
        %v694 = vpop.f32.mrf.mxu0
        %v695 = vadd.f32 %v466, %v694
        %v696 = vpop.f32.mrf.mxu0
        %v697 = vpop.f32.mrf.mxu0
        %v698 = vadd.f32 %v466, %v697
        %v699 = vpop.f32.mrf.mxu0
        %700 = vmatprep.mubr.bf16.mxu0 0
        %701 = vmatmul.mubr.bf16.gmra.mxu0 %v440
        %v702 = vpop.f32.mrf.mxu0
        %v703 = vadd.f32 %v466, %v702
        %v704 = vpop.f32.mrf.mxu0
        %v705 = vpop.f32.mrf.mxu0
        %v706 = vadd.f32 %v466, %v705
        %v707 = vpop.f32.mrf.mxu0
        %708 = vmatprep.mubr.bf16.mxu0 0
        %709 = vmatmul.mubr.bf16.gmra.mxu0 %v441
        %v710 = vpop.f32.mrf.mxu0
        %v711 = vadd.f32 %v466, %v710
        %v712 = vpop.f32.mrf.mxu0
        %v713 = vpop.f32.mrf.mxu0
        %v714 = vadd.f32 %v466, %v713
        %v715 = vpop.f32.mrf.mxu0
        %716 = vmatprep.mubr.bf16.mxu0 0
        %717 = vmatmul.mubr.bf16.gmra.mxu0 %v442
        %v718 = vpop.f32.mrf.mxu0
        %v719 = vadd.f32 %v466, %v718
        %v720 = vpop.f32.mrf.mxu0
        %v721 = vpop.f32.mrf.mxu0
        %v722 = vadd.f32 %v466, %v721
        %v723 = vpop.f32.mrf.mxu0
        %724 = vmatprep.mubr.bf16.mxu0 0
        %725 = vmatmul.mubr.bf16.gmra.mxu0 %v443
        %v726 = vpop.f32.mrf.mxu0
        %v727 = vadd.f32 %v466, %v726
        %v728 = vpop.f32.mrf.mxu0
        %v729 = vpop.f32.mrf.mxu0
        %v730 = vadd.f32 %v466, %v729
        %v731 = vpop.f32.mrf.mxu0
        %732 = vmatprep.mubr.bf16.mxu0 0
        %733 = vmatmul.mubr.bf16.gmra.mxu0 %v444
        %v734 = vpop.f32.mrf.mxu0
        %v735 = vadd.f32 %v466, %v734
        %v736 = vpop.f32.mrf.mxu0
        %v737 = vpop.f32.mrf.mxu0
        %v738 = vadd.f32 %v466, %v737
        %v739 = vpop.f32.mrf.mxu0
        %740 = vdwg.mxu0
        %v741 = vmax.f32 %v551, 0.0
        %v742 = vmax.f32 %v554, 0.0
        %v743 = vmax.f32 %v559, 0.0
        %v744 = vmax.f32 %v562, 0.0
        %v745 = vmax.f32 %v567, 0.0
        %v746 = vmax.f32 %v570, 0.0
        %v747 = vmax.f32 %v575, 0.0
        %v748 = vmax.f32 %v578, 0.0
        %v749 = vmax.f32 %v583, 0.0
        %v750 = vmax.f32 %v586, 0.0
        %v751 = vmax.f32 %v591, 0.0
        %v752 = vmax.f32 %v594, 0.0
        %v753 = vmax.f32 %v599, 0.0
        %v754 = vmax.f32 %v602, 0.0
        %v755 = vmax.f32 %v607, 0.0
        %v756 = vmax.f32 %v610, 0.0
        %v757 = vmax.f32 %v615, 0.0
        %v758 = vmax.f32 %v618, 0.0
        %v759 = vmax.f32 %v623, 0.0
        %v760 = vmax.f32 %v626, 0.0
        %v761 = vmax.f32 %v631, 0.0
        %v762 = vmax.f32 %v634, 0.0
        %v763 = vmax.f32 %v639, 0.0
        %v764 = vmax.f32 %v642, 0.0
        %v765 = vmax.f32 %v647, 0.0
        %v766 = vmax.f32 %v650, 0.0
        %v767 = vmax.f32 %v655, 0.0
        %v768 = vmax.f32 %v658, 0.0
        %v769 = vmax.f32 %v663, 0.0
        %v770 = vmax.f32 %v666, 0.0
        %v771 = vmax.f32 %v671, 0.0
        %v772 = vmax.f32 %v674, 0.0
        %v773 = vmax.f32 %v679, 0.0
        %v774 = vmax.f32 %v682, 0.0
        %v775 = vmax.f32 %v687, 0.0
        %v776 = vmax.f32 %v690, 0.0
        %v777 = vmax.f32 %v695, 0.0
        %v778 = vmax.f32 %v698, 0.0
        %v779 = vmax.f32 %v703, 0.0
        %v780 = vmax.f32 %v706, 0.0
        %v781 = vmax.f32 %v711, 0.0
        %v782 = vmax.f32 %v714, 0.0
        %v783 = vmax.f32 %v719, 0.0
        %v784 = vmax.f32 %v722, 0.0
        %v785 = vmax.f32 %v727, 0.0
        %v786 = vmax.f32 %v730, 0.0
        %v787 = vmax.f32 %v735, 0.0
        %v788 = vmax.f32 %v738, 0.0
        %790 = vset.pattern.permute.xlu0 0
        %791 = vperm.xlu0 %790, %v373
        %v792 = vpop.permute.xlu0 %791
        %795 = vset.pattern.permute.xlu0 0
        %796 = vperm.xlu0 %795, %v374
        %v797 = vpop.permute.xlu0 %796
        %800 = vset.pattern.permute.xlu0 0
        %801 = vperm.xlu0 %800, %v375
        %v802 = vpop.permute.xlu0 %801
        %805 = vset.pattern.permute.xlu0 0
        %806 = vperm.xlu0 %805, %v376
        %v807 = vpop.permute.xlu0 %806
        %810 = vset.pattern.permute.xlu0 0
        %811 = vperm.xlu0 %810, %v377
        %v812 = vpop.permute.xlu0 %811
        %815 = vset.pattern.permute.xlu0 0
        %816 = vperm.xlu0 %815, %v378
        %v817 = vpop.permute.xlu0 %816
        %820 = vset.pattern.permute.xlu0 0
        %821 = vperm.xlu0 %820, %v379
        %v822 = vpop.permute.xlu0 %821
        %825 = vset.pattern.permute.xlu0 0
        %826 = vperm.xlu0 %825, %v380
        %v827 = vpop.permute.xlu0 %826
        %830 = vset.pattern.permute.xlu0 0
        %831 = vperm.xlu0 %830, %v381
        %v832 = vpop.permute.xlu0 %831
        %835 = vset.pattern.permute.xlu0 0
        %836 = vperm.xlu0 %835, %v382
        %v837 = vpop.permute.xlu0 %836
        %840 = vset.pattern.permute.xlu0 0
        %841 = vperm.xlu0 %840, %v383
        %v842 = vpop.permute.xlu0 %841
        %845 = vset.pattern.permute.xlu0 0
        %846 = vperm.xlu0 %845, %v384
        %v847 = vpop.permute.xlu0 %846
        %850 = vset.pattern.permute.xlu0 0
        %851 = vperm.xlu0 %850, %v385
        %v852 = vpop.permute.xlu0 %851
        %855 = vset.pattern.permute.xlu0 0
        %856 = vperm.xlu0 %855, %v386
        %v857 = vpop.permute.xlu0 %856
        %860 = vset.pattern.permute.xlu0 0
        %861 = vperm.xlu0 %860, %v387
        %v862 = vpop.permute.xlu0 %861
        %865 = vset.pattern.permute.xlu0 0
        %866 = vperm.xlu0 %865, %v388
        %v867 = vpop.permute.xlu0 %866
        %870 = vset.pattern.permute.xlu0 0
        %871 = vperm.xlu0 %870, %v389
        %v872 = vpop.permute.xlu0 %871
        %875 = vset.pattern.permute.xlu0 0
        %876 = vperm.xlu0 %875, %v390
        %v877 = vpop.permute.xlu0 %876
        %880 = vset.pattern.permute.xlu0 0
        %881 = vperm.xlu0 %880, %v391
        %v882 = vpop.permute.xlu0 %881
        %885 = vset.pattern.permute.xlu0 0
        %886 = vperm.xlu0 %885, %v392
        %v887 = vpop.permute.xlu0 %886
        %890 = vset.pattern.permute.xlu0 0
        %891 = vperm.xlu0 %890, %v393
        %v892 = vpop.permute.xlu0 %891
        %895 = vset.pattern.permute.xlu0 0
        %896 = vperm.xlu0 %895, %v394
        %v897 = vpop.permute.xlu0 %896
        %900 = vset.pattern.permute.xlu0 0
        %901 = vperm.xlu0 %900, %v395
        %v902 = vpop.permute.xlu0 %901
        %905 = vset.pattern.permute.xlu0 0
        %906 = vperm.xlu0 %905, %v396
        %v907 = vpop.permute.xlu0 %906
        %910 = vset.pattern.permute.xlu0 0
        %911 = vperm.xlu0 %910, %v397
        %v912 = vpop.permute.xlu0 %911
        %915 = vset.pattern.permute.xlu0 0
        %916 = vperm.xlu0 %915, %v398
        %v917 = vpop.permute.xlu0 %916
        %920 = vset.pattern.permute.xlu0 0
        %921 = vperm.xlu0 %920, %v399
        %v922 = vpop.permute.xlu0 %921
        %925 = vset.pattern.permute.xlu0 0
        %926 = vperm.xlu0 %925, %v400
        %v927 = vpop.permute.xlu0 %926
        %930 = vset.pattern.permute.xlu0 0
        %931 = vperm.xlu0 %930, %v401
        %v932 = vpop.permute.xlu0 %931
        %935 = vset.pattern.permute.xlu0 0
        %936 = vperm.xlu0 %935, %v402
        %v937 = vpop.permute.xlu0 %936
        %940 = vset.pattern.permute.xlu0 0
        %941 = vperm.xlu0 %940, %v403
        %v942 = vpop.permute.xlu0 %941
        %945 = vset.pattern.permute.xlu0 0
        %946 = vperm.xlu0 %945, %v404
        %v947 = vpop.permute.xlu0 %946
        %950 = vset.pattern.permute.xlu0 0
        %951 = vperm.xlu0 %950, %v405
        %v952 = vpop.permute.xlu0 %951
        %955 = vset.pattern.permute.xlu0 0
        %956 = vperm.xlu0 %955, %v406
        %v957 = vpop.permute.xlu0 %956
        %960 = vset.pattern.permute.xlu0 0
        %961 = vperm.xlu0 %960, %v407
        %v962 = vpop.permute.xlu0 %961
        %965 = vset.pattern.permute.xlu0 0
        %966 = vperm.xlu0 %965, %v408
        %v967 = vpop.permute.xlu0 %966
        %970 = vset.pattern.permute.xlu0 0
        %971 = vperm.xlu0 %970, %v409
        %v972 = vpop.permute.xlu0 %971
        %975 = vset.pattern.permute.xlu0 0
        %976 = vperm.xlu0 %975, %v410
        %v977 = vpop.permute.xlu0 %976
        %980 = vset.pattern.permute.xlu0 0
        %981 = vperm.xlu0 %980, %v411
        %v982 = vpop.permute.xlu0 %981
        %985 = vset.pattern.permute.xlu0 0
        %986 = vperm.xlu0 %985, %v412
        %v987 = vpop.permute.xlu0 %986
        %990 = vset.pattern.permute.xlu0 0
        %991 = vperm.xlu0 %990, %v413
        %v992 = vpop.permute.xlu0 %991
        %995 = vset.pattern.permute.xlu0 0
        %996 = vperm.xlu0 %995, %v414
        %v997 = vpop.permute.xlu0 %996
        %1000 = vset.pattern.permute.xlu0 0
        %1001 = vperm.xlu0 %1000, %v415
        %v1002 = vpop.permute.xlu0 %1001
        %1005 = vset.pattern.permute.xlu0 0
        %1006 = vperm.xlu0 %1005, %v416
        %v1007 = vpop.permute.xlu0 %1006
        %1010 = vset.pattern.permute.xlu0 0
        %1011 = vperm.xlu0 %1010, %v417
        %v1012 = vpop.permute.xlu0 %1011
        %1015 = vset.pattern.permute.xlu0 0
        %1016 = vperm.xlu0 %1015, %v418
        %v1017 = vpop.permute.xlu0 %1016
        %1020 = vset.pattern.permute.xlu0 0
        %1021 = vperm.xlu0 %1020, %v419
        %v1022 = vpop.permute.xlu0 %1021
        %1025 = vset.pattern.permute.xlu0 0
        %1026 = vperm.xlu0 %1025, %v420
        %v1027 = vpop.permute.xlu0 %1026
        %v1029 = vmul.f32 %v741, %v792
        %v1030 = vmul.f32 %v742, %v797
        %v1031 = vmul.f32 %v743, %v802
        %v1032 = vmul.f32 %v744, %v807
        %v1033 = vmul.f32 %v745, %v812
        %v1034 = vmul.f32 %v746, %v817
        %v1035 = vmul.f32 %v747, %v822
        %v1036 = vmul.f32 %v748, %v827
        %v1037 = vmul.f32 %v749, %v832
        %v1038 = vmul.f32 %v750, %v837
        %v1039 = vmul.f32 %v751, %v842
        %v1040 = vmul.f32 %v752, %v847
        %v1041 = vmul.f32 %v753, %v852
        %v1042 = vmul.f32 %v754, %v857
        %v1043 = vmul.f32 %v755, %v862
        %v1044 = vmul.f32 %v756, %v867
        %v1045 = vmul.f32 %v757, %v872
        %v1046 = vmul.f32 %v758, %v877
        %v1047 = vmul.f32 %v759, %v882
        %v1048 = vmul.f32 %v760, %v887
        %v1049 = vmul.f32 %v761, %v892
        %v1050 = vmul.f32 %v762, %v897
        %v1051 = vmul.f32 %v763, %v902
        %v1052 = vmul.f32 %v764, %v907
        %v1053 = vmul.f32 %v765, %v912
        %v1054 = vmul.f32 %v766, %v917
        %v1055 = vmul.f32 %v767, %v922
        %v1056 = vmul.f32 %v768, %v927
        %v1057 = vmul.f32 %v769, %v932
        %v1058 = vmul.f32 %v770, %v937
        %v1059 = vmul.f32 %v771, %v942
        %v1060 = vmul.f32 %v772, %v947
        %v1061 = vmul.f32 %v773, %v952
        %v1062 = vmul.f32 %v774, %v957
        %v1063 = vmul.f32 %v775, %v962
        %v1064 = vmul.f32 %v776, %v967
        %v1065 = vmul.f32 %v777, %v972
        %v1066 = vmul.f32 %v778, %v977
        %v1067 = vmul.f32 %v779, %v982
        %v1068 = vmul.f32 %v780, %v987
        %v1069 = vmul.f32 %v781, %v992
        %v1070 = vmul.f32 %v782, %v997
        %v1071 = vmul.f32 %v783, %v1002
        %v1072 = vmul.f32 %v784, %v1007
        %v1073 = vmul.f32 %v785, %v1012
        %v1074 = vmul.f32 %v786, %v1017
        %v1075 = vmul.f32 %v787, %v1022
        %v1076 = vmul.f32 %v788, %v1027
        %v1077 = vpack.c.bf16 %v1030, %v1029
        %v1078 = vpack.c.bf16 %v1032, %v1031
        %v1079 = vpack.c.bf16 %v1034, %v1033
        %v1080 = vpack.c.bf16 %v1036, %v1035
        %v1081 = vpack.c.bf16 %v1038, %v1037
        %v1082 = vpack.c.bf16 %v1040, %v1039
        %v1083 = vpack.c.bf16 %v1042, %v1041
        %v1084 = vpack.c.bf16 %v1044, %v1043
        %v1085 = vpack.c.bf16 %v1046, %v1045
        %v1086 = vpack.c.bf16 %v1048, %v1047
        %v1087 = vpack.c.bf16 %v1050, %v1049
        %v1088 = vpack.c.bf16 %v1052, %v1051
        %v1089 = vpack.c.bf16 %v1054, %v1053
        %v1090 = vpack.c.bf16 %v1056, %v1055
        %v1091 = vpack.c.bf16 %v1058, %v1057
        %v1092 = vpack.c.bf16 %v1060, %v1059
        %v1093 = vpack.c.bf16 %v1062, %v1061
        %v1094 = vpack.c.bf16 %v1064, %v1063
        %v1095 = vpack.c.bf16 %v1066, %v1065
        %v1096 = vpack.c.bf16 %v1068, %v1067
        %v1097 = vpack.c.bf16 %v1070, %v1069
        %v1098 = vpack.c.bf16 %v1072, %v1071
        %v1099 = vpack.c.bf16 %v1074, %v1073
        %v1100 = vpack.c.bf16 %v1076, %v1075
        %vm1101 = vcmask 257024
        %1102 = vst.msk [vmem:[#allocation2] sm:$0xf] %vm1101, 0
        %1103 = vst.msk [vmem:[#allocation2 + $0x4] sm:$0xf] %vm1101, 0
        %1104 = vst.msk [vmem:[#allocation2 + $0x8] sm:$0xf] %vm1101, 0
        %1105 = vst.msk [vmem:[#allocation2 + $0xc] sm:$0xf] %vm1101, 0
        %1106 = vst.msk [vmem:[#allocation2 + $0xd0] sm:$0xf] %vm1101, 0
        %1107 = vst.msk [vmem:[#allocation2 + $0xd4] sm:$0xf] %vm1101, 0
        %1108 = vst.msk [vmem:[#allocation2 + $0xd8] sm:$0xf] %vm1101, 0
        %1109 = vst.msk [vmem:[#allocation2 + $0xdc] sm:$0xf] %vm1101, 0
        %v1134 = vunpack.c.l.b16 %v1077
        %v1135 = vunpack.c.h.b16 %v1077
        %v1136 = vunpack.c.l.b16 %v1078
        %v1137 = vunpack.c.h.b16 %v1078
        %v1138 = vunpack.c.l.b16 %v1079
        %v1139 = vunpack.c.h.b16 %v1079
        %v1140 = vunpack.c.l.b16 %v1080
        %v1141 = vunpack.c.h.b16 %v1080
        %v1142 = vunpack.c.l.b16 %v1081
        %v1143 = vunpack.c.h.b16 %v1081
        %v1144 = vunpack.c.l.b16 %v1082
        %v1145 = vunpack.c.h.b16 %v1082
        %v1146 = vunpack.c.l.b16 %v1083
        %v1147 = vunpack.c.h.b16 %v1083
        %v1148 = vunpack.c.l.b16 %v1084
        %v1149 = vunpack.c.h.b16 %v1084
        %v1150 = vunpack.c.l.b16 %v1085
        %v1151 = vunpack.c.h.b16 %v1085
        %v1152 = vunpack.c.l.b16 %v1086
        %v1153 = vunpack.c.h.b16 %v1086
        %v1154 = vunpack.c.l.b16 %v1087
        %v1155 = vunpack.c.h.b16 %v1087
        %v1156 = vunpack.c.l.b16 %v1088
        %v1157 = vunpack.c.h.b16 %v1088
        %v1158 = vunpack.c.l.b16 %v1089
        %v1159 = vunpack.c.h.b16 %v1089
        %v1160 = vunpack.c.l.b16 %v1090
        %v1161 = vunpack.c.h.b16 %v1090
        %v1162 = vunpack.c.l.b16 %v1091
        %v1163 = vunpack.c.h.b16 %v1091
        %v1164 = vunpack.c.l.b16 %v1092
        %v1165 = vunpack.c.h.b16 %v1092
        %v1166 = vunpack.c.l.b16 %v1093
        %v1167 = vunpack.c.h.b16 %v1093
        %v1168 = vunpack.c.l.b16 %v1094
        %v1169 = vunpack.c.h.b16 %v1094
        %v1170 = vunpack.c.l.b16 %v1095
        %v1171 = vunpack.c.h.b16 %v1095
        %v1172 = vunpack.c.l.b16 %v1096
        %v1173 = vunpack.c.h.b16 %v1096
        %v1174 = vunpack.c.l.b16 %v1097
        %v1175 = vunpack.c.h.b16 %v1097
        %v1176 = vunpack.c.l.b16 %v1098
        %v1177 = vunpack.c.h.b16 %v1098
        %v1178 = vunpack.c.l.b16 %v1099
        %v1179 = vunpack.c.h.b16 %v1099
        %v1180 = vunpack.c.l.b16 %v1100
        %v1181 = vunpack.c.h.b16 %v1100
        %v1182 = vpack.c.b16 %v1134, %v1134
        %v1183 = vpack.c.b16 %v1135, %v1135
        %v1184 = vpack.c.b16 %v1136, %v1136
        %v1185 = vpack.c.b16 %v1137, %v1137
        %v1186 = vpack.c.b16 %v1138, %v1138
        %v1187 = vpack.c.b16 %v1139, %v1139
        %v1188 = vpack.c.b16 %v1140, %v1140
        %v1189 = vpack.c.b16 %v1141, %v1141
        %v1190 = vpack.c.b16 %v1142, %v1142
        %v1191 = vpack.c.b16 %v1143, %v1143
        %v1192 = vpack.c.b16 %v1144, %v1144
        %v1193 = vpack.c.b16 %v1145, %v1145
        %v1194 = vpack.c.b16 %v1146, %v1146
        %v1195 = vpack.c.b16 %v1147, %v1147
        %v1196 = vpack.c.b16 %v1148, %v1148
        %v1197 = vpack.c.b16 %v1149, %v1149
        %v1198 = vpack.c.b16 %v1150, %v1150
        %v1199 = vpack.c.b16 %v1151, %v1151
        %v1200 = vpack.c.b16 %v1152, %v1152
        %v1201 = vpack.c.b16 %v1153, %v1153
        %v1202 = vpack.c.b16 %v1154, %v1154
        %v1203 = vpack.c.b16 %v1155, %v1155
        %v1204 = vpack.c.b16 %v1156, %v1156
        %v1205 = vpack.c.b16 %v1157, %v1157
        %v1206 = vpack.c.b16 %v1158, %v1158
        %v1207 = vpack.c.b16 %v1159, %v1159
        %v1208 = vpack.c.b16 %v1160, %v1160
        %v1209 = vpack.c.b16 %v1161, %v1161
        %v1210 = vpack.c.b16 %v1162, %v1162
        %v1211 = vpack.c.b16 %v1163, %v1163
        %v1212 = vpack.c.b16 %v1164, %v1164
        %v1213 = vpack.c.b16 %v1165, %v1165
        %v1214 = vpack.c.b16 %v1166, %v1166
        %v1215 = vpack.c.b16 %v1167, %v1167
        %v1216 = vpack.c.b16 %v1168, %v1168
        %v1217 = vpack.c.b16 %v1169, %v1169
        %v1218 = vpack.c.b16 %v1170, %v1170
        %v1219 = vpack.c.b16 %v1171, %v1171
        %v1220 = vpack.c.b16 %v1172, %v1172
        %v1221 = vpack.c.b16 %v1173, %v1173
        %v1222 = vpack.c.b16 %v1174, %v1174
        %v1223 = vpack.c.b16 %v1175, %v1175
        %v1224 = vpack.c.b16 %v1176, %v1176
        %v1225 = vpack.c.b16 %v1177, %v1177
        %v1226 = vpack.c.b16 %v1178, %v1178
        %v1227 = vpack.c.b16 %v1179, %v1179
        %v1228 = vpack.c.b16 %v1180, %v1180
        %v1229 = vpack.c.b16 %v1181, %v1181
        %1278 = vst.msk [vmem:[#allocation2 + $0x10] sm:$0xf] %vm1101, %v1182
        %1279 = vst.msk [vmem:[#allocation2 + $0x14] sm:$0xf] %vm1101, %v1183
        %1280 = vst.msk [vmem:[#allocation2 + $0x18] sm:$0xf] %vm1101, %v1184
        %1281 = vst.msk [vmem:[#allocation2 + $0x1c] sm:$0xf] %vm1101, %v1185
        %1282 = vst.msk [vmem:[#allocation2 + $0x20] sm:$0xf] %vm1101, %v1186
        %1283 = vst.msk [vmem:[#allocation2 + $0x24] sm:$0xf] %vm1101, %v1187
        %1284 = vst.msk [vmem:[#allocation2 + $0x28] sm:$0xf] %vm1101, %v1188
        %1285 = vst.msk [vmem:[#allocation2 + $0x2c] sm:$0xf] %vm1101, %v1189
        %1286 = vst.msk [vmem:[#allocation2 + $0x30] sm:$0xf] %vm1101, %v1190
        %1287 = vst.msk [vmem:[#allocation2 + $0x34] sm:$0xf] %vm1101, %v1191
        %1288 = vst.msk [vmem:[#allocation2 + $0x38] sm:$0xf] %vm1101, %v1192
        %1289 = vst.msk [vmem:[#allocation2 + $0x3c] sm:$0xf] %vm1101, %v1193
        %1290 = vst.msk [vmem:[#allocation2 + $0x40] sm:$0xf] %vm1101, %v1194
        %1291 = vst.msk [vmem:[#allocation2 + $0x44] sm:$0xf] %vm1101, %v1195
        %1292 = vst.msk [vmem:[#allocation2 + $0x48] sm:$0xf] %vm1101, %v1196
        %1293 = vst.msk [vmem:[#allocation2 + $0x4c] sm:$0xf] %vm1101, %v1197
        %1294 = vst.msk [vmem:[#allocation2 + $0x50] sm:$0xf] %vm1101, %v1198
        %1295 = vst.msk [vmem:[#allocation2 + $0x54] sm:$0xf] %vm1101, %v1199
        %1296 = vst.msk [vmem:[#allocation2 + $0x58] sm:$0xf] %vm1101, %v1200
        %1297 = vst.msk [vmem:[#allocation2 + $0x5c] sm:$0xf] %vm1101, %v1201
        %1298 = vst.msk [vmem:[#allocation2 + $0x60] sm:$0xf] %vm1101, %v1202
        %1299 = vst.msk [vmem:[#allocation2 + $0x64] sm:$0xf] %vm1101, %v1203
        %1300 = vst.msk [vmem:[#allocation2 + $0x68] sm:$0xf] %vm1101, %v1204
        %1301 = vst.msk [vmem:[#allocation2 + $0x6c] sm:$0xf] %vm1101, %v1205
        %1302 = vst.msk [vmem:[#allocation2 + $0x70] sm:$0xf] %vm1101, %v1206
        %1303 = vst.msk [vmem:[#allocation2 + $0x74] sm:$0xf] %vm1101, %v1207
        %1304 = vst.msk [vmem:[#allocation2 + $0x78] sm:$0xf] %vm1101, %v1208
        %1305 = vst.msk [vmem:[#allocation2 + $0x7c] sm:$0xf] %vm1101, %v1209
        %1306 = vst.msk [vmem:[#allocation2 + $0x80] sm:$0xf] %vm1101, %v1210
        %1307 = vst.msk [vmem:[#allocation2 + $0x84] sm:$0xf] %vm1101, %v1211
        %1308 = vst.msk [vmem:[#allocation2 + $0x88] sm:$0xf] %vm1101, %v1212
        %1309 = vst.msk [vmem:[#allocation2 + $0x8c] sm:$0xf] %vm1101, %v1213
        %1310 = vst.msk [vmem:[#allocation2 + $0x90] sm:$0xf] %vm1101, %v1214
        %1311 = vst.msk [vmem:[#allocation2 + $0x94] sm:$0xf] %vm1101, %v1215
        %1312 = vst.msk [vmem:[#allocation2 + $0x98] sm:$0xf] %vm1101, %v1216
        %1313 = vst.msk [vmem:[#allocation2 + $0x9c] sm:$0xf] %vm1101, %v1217
        %1314 = vst.msk [vmem:[#allocation2 + $0xa0] sm:$0xf] %vm1101, %v1218
        %1315 = vst.msk [vmem:[#allocation2 + $0xa4] sm:$0xf] %vm1101, %v1219
        %1316 = vst.msk [vmem:[#allocation2 + $0xa8] sm:$0xf] %vm1101, %v1220
        %1317 = vst.msk [vmem:[#allocation2 + $0xac] sm:$0xf] %vm1101, %v1221
        %1318 = vst.msk [vmem:[#allocation2 + $0xb0] sm:$0xf] %vm1101, %v1222
        %1319 = vst.msk [vmem:[#allocation2 + $0xb4] sm:$0xf] %vm1101, %v1223
        %1320 = vst.msk [vmem:[#allocation2 + $0xb8] sm:$0xf] %vm1101, %v1224
        %1321 = vst.msk [vmem:[#allocation2 + $0xbc] sm:$0xf] %vm1101, %v1225
        %1322 = vst.msk [vmem:[#allocation2 + $0xc0] sm:$0xf] %vm1101, %v1226
        %1323 = vst.msk [vmem:[#allocation2 + $0xc4] sm:$0xf] %vm1101, %v1227
        %1324 = vst.msk [vmem:[#allocation2 + $0xc8] sm:$0xf] %vm1101, %v1228
        %1325 = vst.msk [vmem:[#allocation2 + $0xcc] sm:$0xf] %vm1101, %v1229
        %v1326 = vld [vmem:[#allocation2] sm:$0x8]
        %v1327 = vld [vmem:[#allocation2 + $0x4] sm:$0xf]
        %v1328 = vld [vmem:[#allocation2 + $0x8] sm:$0xf]
        %v1329 = vld [vmem:[#allocation2 + $0xc] sm:$0xf]
        %v1330 = vld [vmem:[#allocation2 + $0x10] sm:$0xf]
        %v1331 = vld [vmem:[#allocation2 + $0x14] sm:$0xf]
        %v1332 = vld [vmem:[#allocation2 + $0x18] sm:$0xf]
        %v1333 = vld [vmem:[#allocation2 + $0x1c] sm:$0xf]
        %v1334 = vld [vmem:[#allocation2 + $0x20] sm:$0xf]
        %v1335 = vld [vmem:[#allocation2 + $0x24] sm:$0xf]
        %v1336 = vld [vmem:[#allocation2 + $0x28] sm:$0xf]
        %v1337 = vld [vmem:[#allocation2 + $0x2c] sm:$0xf]
        %v1338 = vld [vmem:[#allocation2 + $0x30] sm:$0xf]
        %v1339 = vld [vmem:[#allocation2 + $0x34] sm:$0xf]
        %v1340 = vld [vmem:[#allocation2 + $0x38] sm:$0xf]
        %v1341 = vld [vmem:[#allocation2 + $0x3c] sm:$0xf]
        %v1342 = vld [vmem:[#allocation2 + $0x40] sm:$0xf]
        %v1343 = vld [vmem:[#allocation2 + $0x44] sm:$0xf]
        %v1344 = vld [vmem:[#allocation2 + $0x48] sm:$0xf]
        %v1345 = vld [vmem:[#allocation2 + $0x4c] sm:$0xf]
        %v1346 = vld [vmem:[#allocation2 + $0x50] sm:$0xf]
        %v1347 = vld [vmem:[#allocation2 + $0x54] sm:$0xf]
        %v1348 = vld [vmem:[#allocation2 + $0x58] sm:$0xf]
        %v1349 = vld [vmem:[#allocation2 + $0x5c] sm:$0xf]
        %v1350 = vld [vmem:[#allocation2 + $0x60] sm:$0xf]
        %v1351 = vld [vmem:[#allocation2 + $0x64] sm:$0xf]
        %v1352 = vld [vmem:[#allocation2 + $0x68] sm:$0xf]
        %v1353 = vld [vmem:[#allocation2 + $0x6c] sm:$0xf]
        %v1354 = vld [vmem:[#allocation2 + $0x70] sm:$0xf]
        %v1355 = vld [vmem:[#allocation2 + $0x74] sm:$0xf]
        %v1356 = vld [vmem:[#allocation2 + $0x78] sm:$0xf]
        %v1357 = vld [vmem:[#allocation2 + $0x7c] sm:$0xf]
        %v1358 = vld [vmem:[#allocation2 + $0x80] sm:$0xf]
        %v1359 = vld [vmem:[#allocation2 + $0x84] sm:$0xf]
        %v1360 = vld [vmem:[#allocation2 + $0x88] sm:$0xf]
        %v1361 = vld [vmem:[#allocation2 + $0x8c] sm:$0xf]
        %v1362 = vld [vmem:[#allocation2 + $0x90] sm:$0xf]
        %v1363 = vld [vmem:[#allocation2 + $0x94] sm:$0xf]
        %v1364 = vld [vmem:[#allocation2 + $0x98] sm:$0xf]
        %v1365 = vld [vmem:[#allocation2 + $0x9c] sm:$0xf]
        %v1366 = vld [vmem:[#allocation2 + $0xa0] sm:$0xf]
        %v1367 = vld [vmem:[#allocation2 + $0xa4] sm:$0xf]
        %v1368 = vld [vmem:[#allocation2 + $0xa8] sm:$0xf]
        %v1369 = vld [vmem:[#allocation2 + $0xac] sm:$0xf]
        %v1370 = vld [vmem:[#allocation2 + $0xb0] sm:$0xf]
        %v1371 = vld [vmem:[#allocation2 + $0xb4] sm:$0xf]
        %v1372 = vld [vmem:[#allocation2 + $0xb8] sm:$0xf]
        %v1373 = vld [vmem:[#allocation2 + $0xbc] sm:$0xf]
        %v1374 = vld [vmem:[#allocation2 + $0xc0] sm:$0xf]
        %v1375 = vld [vmem:[#allocation2 + $0xc4] sm:$0x1]
        %v1425 = vunpack.c.l.b16 %v1326
        %v1426 = vunpack.c.l.b16 %v1327
        %v1427 = vunpack.c.l.b16 %v1328
        %v1428 = vunpack.c.l.b16 %v1329
        %v1429 = vunpack.c.l.b16 %v1330
        %v1430 = vunpack.c.l.b16 %v1331
        %v1431 = vunpack.c.l.b16 %v1332
        %v1432 = vunpack.c.l.b16 %v1333
        %v1433 = vunpack.c.l.b16 %v1334
        %v1434 = vunpack.c.l.b16 %v1335
        %v1435 = vunpack.c.l.b16 %v1336
        %v1436 = vunpack.c.l.b16 %v1337
        %v1437 = vunpack.c.l.b16 %v1338
        %v1438 = vunpack.c.l.b16 %v1339
        %v1439 = vunpack.c.l.b16 %v1340
        %v1440 = vunpack.c.l.b16 %v1341
        %v1441 = vunpack.c.l.b16 %v1342
        %v1442 = vunpack.c.l.b16 %v1343
        %v1443 = vunpack.c.l.b16 %v1344
        %v1444 = vunpack.c.l.b16 %v1345
        %v1445 = vunpack.c.l.b16 %v1346
        %v1446 = vunpack.c.l.b16 %v1347
        %v1447 = vunpack.c.l.b16 %v1348
        %v1448 = vunpack.c.l.b16 %v1349
        %v1449 = vunpack.c.l.b16 %v1350
        %v1450 = vunpack.c.l.b16 %v1351
        %v1451 = vunpack.c.l.b16 %v1352
        %v1452 = vunpack.c.l.b16 %v1353
        %v1453 = vunpack.c.l.b16 %v1354
        %v1454 = vunpack.c.l.b16 %v1355
        %v1455 = vunpack.c.l.b16 %v1356
        %v1456 = vunpack.c.l.b16 %v1357
        %v1457 = vunpack.c.l.b16 %v1358
        %v1458 = vunpack.c.l.b16 %v1359
        %v1459 = vunpack.c.l.b16 %v1360
        %v1460 = vunpack.c.l.b16 %v1361
        %v1461 = vunpack.c.l.b16 %v1362
        %v1462 = vunpack.c.l.b16 %v1363
        %v1463 = vunpack.c.l.b16 %v1364
        %v1464 = vunpack.c.l.b16 %v1365
        %v1465 = vunpack.c.l.b16 %v1366
        %v1466 = vunpack.c.l.b16 %v1367
        %v1467 = vunpack.c.l.b16 %v1368
        %v1468 = vunpack.c.l.b16 %v1369
        %v1469 = vunpack.c.l.b16 %v1370
        %v1470 = vunpack.c.l.b16 %v1371
        %v1471 = vunpack.c.l.b16 %v1372
        %v1472 = vunpack.c.l.b16 %v1373
        %v1473 = vunpack.c.l.b16 %v1374
        %v1474 = vpack.c.b16 %v1426, %v1425
        %v1475 = vpack.c.b16 %v1428, %v1427
        %v1476 = vpack.c.b16 %v1430, %v1429
        %v1477 = vpack.c.b16 %v1432, %v1431
        %v1478 = vpack.c.b16 %v1434, %v1433
        %v1479 = vpack.c.b16 %v1436, %v1435
        %v1480 = vpack.c.b16 %v1438, %v1437
        %v1481 = vpack.c.b16 %v1440, %v1439
        %v1482 = vpack.c.b16 %v1442, %v1441
        %v1483 = vpack.c.b16 %v1444, %v1443
        %v1484 = vpack.c.b16 %v1446, %v1445
        %v1485 = vpack.c.b16 %v1448, %v1447
        %v1486 = vpack.c.b16 %v1450, %v1449
        %v1487 = vpack.c.b16 %v1452, %v1451
        %v1488 = vpack.c.b16 %v1454, %v1453
        %v1489 = vpack.c.b16 %v1456, %v1455
        %v1490 = vpack.c.b16 %v1458, %v1457
        %v1491 = vpack.c.b16 %v1460, %v1459
        %v1492 = vpack.c.b16 %v1462, %v1461
        %v1493 = vpack.c.b16 %v1464, %v1463
        %v1494 = vpack.c.b16 %v1466, %v1465
        %v1495 = vpack.c.b16 %v1468, %v1467
        %v1496 = vpack.c.b16 %v1470, %v1469
        %v1497 = vpack.c.b16 %v1472, %v1471
        %v1498 = vpack.c.b16 %v1473, %v1473
        %v1499 = vpack.c.b16 %v1427, %v1426
        %v1500 = vpack.c.b16 %v1429, %v1428
        %v1501 = vpack.c.b16 %v1431, %v1430
        %v1502 = vpack.c.b16 %v1433, %v1432
        %v1503 = vpack.c.b16 %v1435, %v1434
        %v1504 = vpack.c.b16 %v1437, %v1436
        %v1505 = vpack.c.b16 %v1439, %v1438
        %v1506 = vpack.c.b16 %v1441, %v1440
        %v1507 = vpack.c.b16 %v1443, %v1442
        %v1508 = vpack.c.b16 %v1445, %v1444
        %v1509 = vpack.c.b16 %v1447, %v1446
        %v1510 = vpack.c.b16 %v1449, %v1448
        %v1511 = vpack.c.b16 %v1451, %v1450
        %v1512 = vpack.c.b16 %v1453, %v1452
        %v1513 = vpack.c.b16 %v1455, %v1454
        %v1514 = vpack.c.b16 %v1457, %v1456
        %v1515 = vpack.c.b16 %v1459, %v1458
        %v1516 = vpack.c.b16 %v1461, %v1460
        %v1517 = vpack.c.b16 %v1463, %v1462
        %v1518 = vpack.c.b16 %v1465, %v1464
        %v1519 = vpack.c.b16 %v1467, %v1466
        %v1520 = vpack.c.b16 %v1469, %v1468
        %v1521 = vpack.c.b16 %v1471, %v1470
        %v1522 = vpack.c.b16 %v1473, %v1472
        %vm1523 = vsmask.f32 3328
        %v1525 = vshrl.u32 %v1499, 16
        %v1527 = vrot.slane %v1525, 4
        %v1528 = vshll.u32 %v1499, 16
        %v1530 = vrot.slane %v1528, 5
        %v1531 = vor.u32 %v1527, %v1530
        %v1533 = vshrl.u32 %v1500, 16
        %v1535 = vrot.slane %v1533, 4
        %v1536 = vshll.u32 %v1500, 16
        %v1538 = vrot.slane %v1536, 5
        %v1539 = vor.u32 %v1535, %v1538
        %v1540 = vsel %vm1523, %v1531, %v1539
        %v1542 = vshrl.u32 %v1501, 16
        %v1544 = vrot.slane %v1542, 4
        %v1545 = vshll.u32 %v1501, 16
        %v1547 = vrot.slane %v1545, 5
        %v1548 = vor.u32 %v1544, %v1547
        %v1549 = vsel %vm1523, %v1539, %v1548
        %v1551 = vshrl.u32 %v1502, 16
        %v1553 = vrot.slane %v1551, 4
        %v1554 = vshll.u32 %v1502, 16
        %v1556 = vrot.slane %v1554, 5
        %v1557 = vor.u32 %v1553, %v1556
        %v1558 = vsel %vm1523, %v1548, %v1557
        %v1560 = vshrl.u32 %v1503, 16
        %v1562 = vrot.slane %v1560, 4
        %v1563 = vshll.u32 %v1503, 16
        %v1565 = vrot.slane %v1563, 5
        %v1566 = vor.u32 %v1562, %v1565
        %v1567 = vsel %vm1523, %v1557, %v1566
        %v1569 = vshrl.u32 %v1504, 16
        %v1571 = vrot.slane %v1569, 4
        %v1572 = vshll.u32 %v1504, 16
        %v1574 = vrot.slane %v1572, 5
        %v1575 = vor.u32 %v1571, %v1574
        %v1576 = vsel %vm1523, %v1566, %v1575
        %v1578 = vshrl.u32 %v1505, 16
        %v1580 = vrot.slane %v1578, 4
        %v1581 = vshll.u32 %v1505, 16
        %v1583 = vrot.slane %v1581, 5
        %v1584 = vor.u32 %v1580, %v1583
        %v1585 = vsel %vm1523, %v1575, %v1584
        %v1587 = vshrl.u32 %v1506, 16
        %v1589 = vrot.slane %v1587, 4
        %v1590 = vshll.u32 %v1506, 16
        %v1592 = vrot.slane %v1590, 5
        %v1593 = vor.u32 %v1589, %v1592
        %v1594 = vsel %vm1523, %v1584, %v1593
        %v1596 = vshrl.u32 %v1507, 16
        %v1598 = vrot.slane %v1596, 4
        %v1599 = vshll.u32 %v1507, 16
        %v1601 = vrot.slane %v1599, 5
        %v1602 = vor.u32 %v1598, %v1601
        %v1603 = vsel %vm1523, %v1593, %v1602
        %v1605 = vshrl.u32 %v1508, 16
        %v1607 = vrot.slane %v1605, 4
        %v1608 = vshll.u32 %v1508, 16
        %v1610 = vrot.slane %v1608, 5
        %v1611 = vor.u32 %v1607, %v1610
        %v1612 = vsel %vm1523, %v1602, %v1611
        %v1614 = vshrl.u32 %v1509, 16
        %v1616 = vrot.slane %v1614, 4
        %v1617 = vshll.u32 %v1509, 16
        %v1619 = vrot.slane %v1617, 5
        %v1620 = vor.u32 %v1616, %v1619
        %v1621 = vsel %vm1523, %v1611, %v1620
        %v1623 = vshrl.u32 %v1510, 16
        %v1625 = vrot.slane %v1623, 4
        %v1626 = vshll.u32 %v1510, 16
        %v1628 = vrot.slane %v1626, 5
        %v1629 = vor.u32 %v1625, %v1628
        %v1630 = vsel %vm1523, %v1620, %v1629
        %v1632 = vshrl.u32 %v1511, 16
        %v1634 = vrot.slane %v1632, 4
        %v1635 = vshll.u32 %v1511, 16
        %v1637 = vrot.slane %v1635, 5
        %v1638 = vor.u32 %v1634, %v1637
        %v1639 = vsel %vm1523, %v1629, %v1638
        %v1641 = vshrl.u32 %v1512, 16
        %v1643 = vrot.slane %v1641, 4
        %v1644 = vshll.u32 %v1512, 16
        %v1646 = vrot.slane %v1644, 5
        %v1647 = vor.u32 %v1643, %v1646
        %v1648 = vsel %vm1523, %v1638, %v1647
        %v1650 = vshrl.u32 %v1513, 16
        %v1652 = vrot.slane %v1650, 4
        %v1653 = vshll.u32 %v1513, 16
        %v1655 = vrot.slane %v1653, 5
        %v1656 = vor.u32 %v1652, %v1655
        %v1657 = vsel %vm1523, %v1647, %v1656
        %v1659 = vshrl.u32 %v1514, 16
        %v1661 = vrot.slane %v1659, 4
        %v1662 = vshll.u32 %v1514, 16
        %v1664 = vrot.slane %v1662, 5
        %v1665 = vor.u32 %v1661, %v1664
        %v1666 = vsel %vm1523, %v1656, %v1665
        %v1668 = vshrl.u32 %v1515, 16
        %v1670 = vrot.slane %v1668, 4
        %v1671 = vshll.u32 %v1515, 16
        %v1673 = vrot.slane %v1671, 5
        %v1674 = vor.u32 %v1670, %v1673
        %v1675 = vsel %vm1523, %v1665, %v1674
        %v1677 = vshrl.u32 %v1516, 16
        %v1679 = vrot.slane %v1677, 4
        %v1680 = vshll.u32 %v1516, 16
        %v1682 = vrot.slane %v1680, 5
        %v1683 = vor.u32 %v1679, %v1682
        %v1684 = vsel %vm1523, %v1674, %v1683
        %v1686 = vshrl.u32 %v1517, 16
        %v1688 = vrot.slane %v1686, 4
        %v1689 = vshll.u32 %v1517, 16
        %v1691 = vrot.slane %v1689, 5
        %v1692 = vor.u32 %v1688, %v1691
        %v1693 = vsel %vm1523, %v1683, %v1692
        %v1695 = vshrl.u32 %v1518, 16
        %v1697 = vrot.slane %v1695, 4
        %v1698 = vshll.u32 %v1518, 16
        %v1700 = vrot.slane %v1698, 5
        %v1701 = vor.u32 %v1697, %v1700
        %v1702 = vsel %vm1523, %v1692, %v1701
        %v1704 = vshrl.u32 %v1519, 16
        %v1706 = vrot.slane %v1704, 4
        %v1707 = vshll.u32 %v1519, 16
        %v1709 = vrot.slane %v1707, 5
        %v1710 = vor.u32 %v1706, %v1709
        %v1711 = vsel %vm1523, %v1701, %v1710
        %v1713 = vshrl.u32 %v1520, 16
        %v1715 = vrot.slane %v1713, 4
        %v1716 = vshll.u32 %v1520, 16
        %v1718 = vrot.slane %v1716, 5
        %v1719 = vor.u32 %v1715, %v1718
        %v1720 = vsel %vm1523, %v1710, %v1719
        %v1722 = vshrl.u32 %v1521, 16
        %v1724 = vrot.slane %v1722, 4
        %v1725 = vshll.u32 %v1521, 16
        %v1727 = vrot.slane %v1725, 5
        %v1728 = vor.u32 %v1724, %v1727
        %v1729 = vsel %vm1523, %v1719, %v1728
        %v1731 = vshrl.u32 %v1522, 16
        %v1733 = vrot.slane %v1731, 4
        %v1734 = vshll.u32 %v1522, 16
        %v1736 = vrot.slane %v1734, 5
        %v1737 = vor.u32 %v1733, %v1736
        %v1738 = vsel %vm1523, %v1728, %v1737
        %1739 = vrot.lane.b32.xlu0 %v1531, 32
        %v1740 = vpop.permute.xlu0 %1739
        %1741 = vrot.lane.b32.xlu0 %v1540, 32
        %v1742 = vpop.permute.xlu0 %1741
        %1743 = vrot.lane.b32.xlu0 %v1549, 32
        %v1744 = vpop.permute.xlu0 %1743
        %1745 = vrot.lane.b32.xlu0 %v1558, 32
        %v1746 = vpop.permute.xlu0 %1745
        %1747 = vrot.lane.b32.xlu0 %v1567, 32
        %v1748 = vpop.permute.xlu0 %1747
        %1749 = vrot.lane.b32.xlu0 %v1576, 32
        %v1750 = vpop.permute.xlu0 %1749
        %1751 = vrot.lane.b32.xlu0 %v1585, 32
        %v1752 = vpop.permute.xlu0 %1751
        %1753 = vrot.lane.b32.xlu0 %v1594, 32
        %v1754 = vpop.permute.xlu0 %1753
        %1755 = vrot.lane.b32.xlu0 %v1603, 32
        %v1756 = vpop.permute.xlu0 %1755
        %1757 = vrot.lane.b32.xlu0 %v1612, 32
        %v1758 = vpop.permute.xlu0 %1757
        %1759 = vrot.lane.b32.xlu0 %v1621, 32
        %v1760 = vpop.permute.xlu0 %1759
        %1761 = vrot.lane.b32.xlu0 %v1630, 32
        %v1762 = vpop.permute.xlu0 %1761
        %1763 = vrot.lane.b32.xlu0 %v1639, 32
        %v1764 = vpop.permute.xlu0 %1763
        %1765 = vrot.lane.b32.xlu0 %v1648, 32
        %v1766 = vpop.permute.xlu0 %1765
        %1767 = vrot.lane.b32.xlu0 %v1657, 32
        %v1768 = vpop.permute.xlu0 %1767
        %1769 = vrot.lane.b32.xlu0 %v1666, 32
        %v1770 = vpop.permute.xlu0 %1769
        %1771 = vrot.lane.b32.xlu0 %v1675, 32
        %v1772 = vpop.permute.xlu0 %1771
        %1773 = vrot.lane.b32.xlu0 %v1684, 32
        %v1774 = vpop.permute.xlu0 %1773
        %1775 = vrot.lane.b32.xlu0 %v1693, 32
        %v1776 = vpop.permute.xlu0 %1775
        %1777 = vrot.lane.b32.xlu0 %v1702, 32
        %v1778 = vpop.permute.xlu0 %1777
        %1779 = vrot.lane.b32.xlu0 %v1711, 32
        %v1780 = vpop.permute.xlu0 %1779
        %1781 = vrot.lane.b32.xlu0 %v1720, 32
        %v1782 = vpop.permute.xlu0 %1781
        %1783 = vrot.lane.b32.xlu0 %v1729, 32
        %v1784 = vpop.permute.xlu0 %1783
        %1785 = vrot.lane.b32.xlu0 %v1738, 32
        %v1786 = vpop.permute.xlu0 %1785
        %1787 = vrot.lane.b32.xlu0 %v1737, 32
        %v1788 = vpop.permute.xlu0 %1787
        %v1790 = vunpack.c.l.b16 %v1375
        %v1791 = vpack.c.b16 %v1790, %v1790
        %vm1792 = vcmask 1042432
        %v1793 = vrot.slane %v1499, 5
        %v1794 = vrot.slane %v1500, 5
        %v1795 = vsel %vm1792, %v1793, %v1794
        %v1796 = vrot.slane %v1501, 5
        %v1797 = vsel %vm1792, %v1794, %v1796
        %v1798 = vrot.slane %v1502, 5
        %v1799 = vsel %vm1792, %v1796, %v1798
        %v1800 = vrot.slane %v1503, 5
        %v1801 = vsel %vm1792, %v1798, %v1800
        %v1802 = vrot.slane %v1504, 5
        %v1803 = vsel %vm1792, %v1800, %v1802
        %v1804 = vrot.slane %v1505, 5
        %v1805 = vsel %vm1792, %v1802, %v1804
        %v1806 = vrot.slane %v1506, 5
        %v1807 = vsel %vm1792, %v1804, %v1806
        %v1808 = vrot.slane %v1507, 5
        %v1809 = vsel %vm1792, %v1806, %v1808
        %v1810 = vrot.slane %v1508, 5
        %v1811 = vsel %vm1792, %v1808, %v1810
        %v1812 = vrot.slane %v1509, 5
        %v1813 = vsel %vm1792, %v1810, %v1812
        %v1814 = vrot.slane %v1510, 5
        %v1815 = vsel %vm1792, %v1812, %v1814
        %v1816 = vrot.slane %v1511, 5
        %v1817 = vsel %vm1792, %v1814, %v1816
        %v1818 = vrot.slane %v1512, 5
        %v1819 = vsel %vm1792, %v1816, %v1818
        %v1820 = vrot.slane %v1513, 5
        %v1821 = vsel %vm1792, %v1818, %v1820
        %v1822 = vrot.slane %v1514, 5
        %v1823 = vsel %vm1792, %v1820, %v1822
        %v1824 = vrot.slane %v1515, 5
        %v1825 = vsel %vm1792, %v1822, %v1824
        %v1826 = vrot.slane %v1516, 5
        %v1827 = vsel %vm1792, %v1824, %v1826
        %v1828 = vrot.slane %v1517, 5
        %v1829 = vsel %vm1792, %v1826, %v1828
        %v1830 = vrot.slane %v1518, 5
        %v1831 = vsel %vm1792, %v1828, %v1830
        %v1832 = vrot.slane %v1519, 5
        %v1833 = vsel %vm1792, %v1830, %v1832
        %v1834 = vrot.slane %v1520, 5
        %v1835 = vsel %vm1792, %v1832, %v1834
        %v1836 = vrot.slane %v1521, 5
        %v1837 = vsel %vm1792, %v1834, %v1836
        %v1838 = vrot.slane %v1522, 5
        %v1839 = vsel %vm1792, %v1836, %v1838
        %v1840 = vrot.slane %v1791, 5
        %v1841 = vsel %vm1792, %v1838, %v1840
        %1842 = vrot.lane.b32.xlu0 %v1793, 64
        %v1843 = vpop.permute.xlu0 %1842
        %1844 = vrot.lane.b32.xlu0 %v1795, 64
        %v1845 = vpop.permute.xlu0 %1844
        %1846 = vrot.lane.b32.xlu0 %v1797, 64
        %v1847 = vpop.permute.xlu0 %1846
        %1848 = vrot.lane.b32.xlu0 %v1799, 64
        %v1849 = vpop.permute.xlu0 %1848
        %1850 = vrot.lane.b32.xlu0 %v1801, 64
        %v1851 = vpop.permute.xlu0 %1850
        %1852 = vrot.lane.b32.xlu0 %v1803, 64
        %v1853 = vpop.permute.xlu0 %1852
        %1854 = vrot.lane.b32.xlu0 %v1805, 64
        %v1855 = vpop.permute.xlu0 %1854
        %1856 = vrot.lane.b32.xlu0 %v1807, 64
        %v1857 = vpop.permute.xlu0 %1856
        %1858 = vrot.lane.b32.xlu0 %v1809, 64
        %v1859 = vpop.permute.xlu0 %1858
        %1860 = vrot.lane.b32.xlu0 %v1811, 64
        %v1861 = vpop.permute.xlu0 %1860
        %1862 = vrot.lane.b32.xlu0 %v1813, 64
        %v1863 = vpop.permute.xlu0 %1862
        %1864 = vrot.lane.b32.xlu0 %v1815, 64
        %v1865 = vpop.permute.xlu0 %1864
        %1866 = vrot.lane.b32.xlu0 %v1817, 64
        %v1867 = vpop.permute.xlu0 %1866
        %1868 = vrot.lane.b32.xlu0 %v1819, 64
        %v1869 = vpop.permute.xlu0 %1868
        %1870 = vrot.lane.b32.xlu0 %v1821, 64
        %v1871 = vpop.permute.xlu0 %1870
        %1872 = vrot.lane.b32.xlu0 %v1823, 64
        %v1873 = vpop.permute.xlu0 %1872
        %1874 = vrot.lane.b32.xlu0 %v1825, 64
        %v1875 = vpop.permute.xlu0 %1874
        %1876 = vrot.lane.b32.xlu0 %v1827, 64
        %v1877 = vpop.permute.xlu0 %1876
        %1878 = vrot.lane.b32.xlu0 %v1829, 64
        %v1879 = vpop.permute.xlu0 %1878
        %1880 = vrot.lane.b32.xlu0 %v1831, 64
        %v1881 = vpop.permute.xlu0 %1880
        %1882 = vrot.lane.b32.xlu0 %v1833, 64
        %v1883 = vpop.permute.xlu0 %1882
        %1884 = vrot.lane.b32.xlu0 %v1835, 64
        %v1885 = vpop.permute.xlu0 %1884
        %1886 = vrot.lane.b32.xlu0 %v1837, 64
        %v1887 = vpop.permute.xlu0 %1886
        %1888 = vrot.lane.b32.xlu0 %v1839, 64
        %v1889 = vpop.permute.xlu0 %1888
        %1890 = vrot.lane.b32.xlu0 %v1841, 64
        %v1891 = vpop.permute.xlu0 %1890
        %vm1892 = vcmask 261120
        %v1895 = vsel %vm1892, %v1474, %v1740
        %v1898 = vsel %vm1892, %v1475, %v1742
        %v1901 = vsel %vm1892, %v1476, %v1744
        %v1904 = vsel %vm1892, %v1477, %v1746
        %v1907 = vsel %vm1892, %v1478, %v1748
        %v1910 = vsel %vm1892, %v1479, %v1750
        %v1913 = vsel %vm1892, %v1480, %v1752
        %v1916 = vsel %vm1892, %v1481, %v1754
        %v1919 = vsel %vm1892, %v1482, %v1756
        %v1922 = vsel %vm1892, %v1483, %v1758
        %v1925 = vsel %vm1892, %v1484, %v1760
        %v1928 = vsel %vm1892, %v1485, %v1762
        %v1931 = vsel %vm1892, %v1486, %v1764
        %v1934 = vsel %vm1892, %v1487, %v1766
        %v1937 = vsel %vm1892, %v1488, %v1768
        %v1940 = vsel %vm1892, %v1489, %v1770
        %v1943 = vsel %vm1892, %v1490, %v1772
        %v1946 = vsel %vm1892, %v1491, %v1774
        %v1949 = vsel %vm1892, %v1492, %v1776
        %v1952 = vsel %vm1892, %v1493, %v1778
        %v1955 = vsel %vm1892, %v1494, %v1780
        %v1958 = vsel %vm1892, %v1495, %v1782
        %v1961 = vsel %vm1892, %v1496, %v1784
        %v1964 = vsel %vm1892, %v1497, %v1786
        %v1967 = vsel %vm1892, %v1498, %v1788
        %vm1968 = vcmask 523264
        %v1970 = vsel %vm1968, %v1895, %v1843
        %v1972 = vsel %vm1968, %v1898, %v1845
        %v1974 = vsel %vm1968, %v1901, %v1847
        %v1976 = vsel %vm1968, %v1904, %v1849
        %v1978 = vsel %vm1968, %v1907, %v1851
        %v1980 = vsel %vm1968, %v1910, %v1853
        %v1982 = vsel %vm1968, %v1913, %v1855
        %v1984 = vsel %vm1968, %v1916, %v1857
        %v1986 = vsel %vm1968, %v1919, %v1859
        %v1988 = vsel %vm1968, %v1922, %v1861
        %v1990 = vsel %vm1968, %v1925, %v1863
        %v1992 = vsel %vm1968, %v1928, %v1865
        %v1994 = vsel %vm1968, %v1931, %v1867
        %v1996 = vsel %vm1968, %v1934, %v1869
        %v1998 = vsel %vm1968, %v1937, %v1871
        %v2000 = vsel %vm1968, %v1940, %v1873
        %v2002 = vsel %vm1968, %v1943, %v1875
        %v2004 = vsel %vm1968, %v1946, %v1877
        %v2006 = vsel %vm1968, %v1949, %v1879
        %v2008 = vsel %vm1968, %v1952, %v1881
        %v2010 = vsel %vm1968, %v1955, %v1883
        %v2012 = vsel %vm1968, %v1958, %v1885
        %v2014 = vsel %vm1968, %v1961, %v1887
        %v2016 = vsel %vm1968, %v1964, %v1889
        %v2018 = vsel %vm1968, %v1967, %v1891
        %v2019 = vld [vmem:[%s4] sm:$0xf]
        %v2020 = vld [vmem:[%s4 + $0x4] sm:$0xf]
        %v2021 = vld [vmem:[%s4 + $0x8] sm:$0xf]
        %v2022 = vld [vmem:[%s4 + $0xc] sm:$0xf]
        %v2023 = vld [vmem:[%s4 + $0x10] sm:$0xf]
        %v2024 = vld [vmem:[%s4 + $0x14] sm:$0xf]
        %v2025 = vld [vmem:[%s4 + $0x18] sm:$0xf]
        %v2026 = vld [vmem:[%s4 + $0x1c] sm:$0xf]
        %v2027 = vld [vmem:[%s4 + $0x20] sm:$0xf]
        %v2028 = vld [vmem:[%s4 + $0x24] sm:$0xf]
        %v2029 = vld [vmem:[%s4 + $0x28] sm:$0xf]
        %v2030 = vld [vmem:[%s4 + $0x2c] sm:$0xf]
        %v2031 = vld [vmem:[#allocation2 + $0xc] sm:$0x8]
        %v2032 = vld [vmem:[#allocation2 + $0xc4] sm:$0xf]
        %v2033 = vld [vmem:[#allocation2 + $0xc8] sm:$0xf]
        %v2034 = vld [vmem:[#allocation2 + $0xcc] sm:$0xf]
        %v2035 = vld [vmem:[#allocation2 + $0xd0] sm:$0x1]
        %v2040 = vunpack.c.l.b16 %v2031
        %v2041 = vunpack.c.l.b16 %v2032
        %v2042 = vunpack.c.l.b16 %v2033
        %v2043 = vunpack.c.l.b16 %v2034
        %v2044 = vpack.c.b16 %v1429, %v2040
        %v2045 = vpack.c.b16 %v2042, %v2041
        %v2046 = vpack.c.b16 %v2043, %v2043
        %v2047 = vpack.c.b16 %v2041, %v1473
        %v2048 = vpack.c.b16 %v2043, %v2042
        %v2049 = vshrl.u32 %v1476, 16
        %v2051 = vrot.slane %v2049, 4
        %v2052 = vshll.u32 %v1476, 16
        %v2054 = vrot.slane %v2052, 5
        %v2055 = vor.u32 %v2051, %v2054
        %v2056 = vshrl.u32 %v1477, 16
        %v2058 = vrot.slane %v2056, 4
        %v2059 = vshll.u32 %v1477, 16
        %v2061 = vrot.slane %v2059, 5
        %v2062 = vor.u32 %v2058, %v2061
        %v2063 = vsel %vm1523, %v2055, %v2062
        %v2064 = vshrl.u32 %v1478, 16
        %v2066 = vrot.slane %v2064, 4
        %v2067 = vshll.u32 %v1478, 16
        %v2069 = vrot.slane %v2067, 5
        %v2070 = vor.u32 %v2066, %v2069
        %v2071 = vsel %vm1523, %v2062, %v2070
        %v2072 = vshrl.u32 %v1479, 16
        %v2074 = vrot.slane %v2072, 4
        %v2075 = vshll.u32 %v1479, 16
        %v2077 = vrot.slane %v2075, 5
        %v2078 = vor.u32 %v2074, %v2077
        %v2079 = vsel %vm1523, %v2070, %v2078
        %v2080 = vshrl.u32 %v1480, 16
        %v2082 = vrot.slane %v2080, 4
        %v2083 = vshll.u32 %v1480, 16
        %v2085 = vrot.slane %v2083, 5
        %v2086 = vor.u32 %v2082, %v2085
        %v2087 = vsel %vm1523, %v2078, %v2086
        %v2088 = vshrl.u32 %v1481, 16
        %v2090 = vrot.slane %v2088, 4
        %v2091 = vshll.u32 %v1481, 16
        %v2093 = vrot.slane %v2091, 5
        %v2094 = vor.u32 %v2090, %v2093
        %v2095 = vsel %vm1523, %v2086, %v2094
        %v2096 = vshrl.u32 %v1482, 16
        %v2098 = vrot.slane %v2096, 4
        %v2099 = vshll.u32 %v1482, 16
        %v2101 = vrot.slane %v2099, 5
        %v2102 = vor.u32 %v2098, %v2101
        %v2103 = vsel %vm1523, %v2094, %v2102
        %v2104 = vshrl.u32 %v1483, 16
        %v2106 = vrot.slane %v2104, 4
        %v2107 = vshll.u32 %v1483, 16
        %v2109 = vrot.slane %v2107, 5
        %v2110 = vor.u32 %v2106, %v2109
        %v2111 = vsel %vm1523, %v2102, %v2110
        %v2112 = vshrl.u32 %v1484, 16
        %v2114 = vrot.slane %v2112, 4
        %v2115 = vshll.u32 %v1484, 16
        %v2117 = vrot.slane %v2115, 5
        %v2118 = vor.u32 %v2114, %v2117
        %v2119 = vsel %vm1523, %v2110, %v2118
        %v2120 = vshrl.u32 %v1485, 16
        %v2122 = vrot.slane %v2120, 4
        %v2123 = vshll.u32 %v1485, 16
        %v2125 = vrot.slane %v2123, 5
        %v2126 = vor.u32 %v2122, %v2125
        %v2127 = vsel %vm1523, %v2118, %v2126
        %v2128 = vshrl.u32 %v1486, 16
        %v2130 = vrot.slane %v2128, 4
        %v2131 = vshll.u32 %v1486, 16
        %v2133 = vrot.slane %v2131, 5
        %v2134 = vor.u32 %v2130, %v2133
        %v2135 = vsel %vm1523, %v2126, %v2134
        %v2136 = vshrl.u32 %v1487, 16
        %v2138 = vrot.slane %v2136, 4
        %v2139 = vshll.u32 %v1487, 16
        %v2141 = vrot.slane %v2139, 5
        %v2142 = vor.u32 %v2138, %v2141
        %v2143 = vsel %vm1523, %v2134, %v2142
        %v2144 = vshrl.u32 %v1488, 16
        %v2146 = vrot.slane %v2144, 4
        %v2147 = vshll.u32 %v1488, 16
        %v2149 = vrot.slane %v2147, 5
        %v2150 = vor.u32 %v2146, %v2149
        %v2151 = vsel %vm1523, %v2142, %v2150
        %v2152 = vshrl.u32 %v1489, 16
        %v2154 = vrot.slane %v2152, 4
        %v2155 = vshll.u32 %v1489, 16
        %v2157 = vrot.slane %v2155, 5
        %v2158 = vor.u32 %v2154, %v2157
        %v2159 = vsel %vm1523, %v2150, %v2158
        %v2160 = vshrl.u32 %v1490, 16
        %v2162 = vrot.slane %v2160, 4
        %v2163 = vshll.u32 %v1490, 16
        %v2165 = vrot.slane %v2163, 5
        %v2166 = vor.u32 %v2162, %v2165
        %v2167 = vsel %vm1523, %v2158, %v2166
        %v2168 = vshrl.u32 %v1491, 16
        %v2170 = vrot.slane %v2168, 4
        %v2171 = vshll.u32 %v1491, 16
        %v2173 = vrot.slane %v2171, 5
        %v2174 = vor.u32 %v2170, %v2173
        %v2175 = vsel %vm1523, %v2166, %v2174
        %v2176 = vshrl.u32 %v1492, 16
        %v2178 = vrot.slane %v2176, 4
        %v2179 = vshll.u32 %v1492, 16
        %v2181 = vrot.slane %v2179, 5
        %v2182 = vor.u32 %v2178, %v2181
        %v2183 = vsel %vm1523, %v2174, %v2182
        %v2184 = vshrl.u32 %v1493, 16
        %v2186 = vrot.slane %v2184, 4
        %v2187 = vshll.u32 %v1493, 16
        %v2189 = vrot.slane %v2187, 5
        %v2190 = vor.u32 %v2186, %v2189
        %v2191 = vsel %vm1523, %v2182, %v2190
        %v2192 = vshrl.u32 %v1494, 16
        %v2194 = vrot.slane %v2192, 4
        %v2195 = vshll.u32 %v1494, 16
        %v2197 = vrot.slane %v2195, 5
        %v2198 = vor.u32 %v2194, %v2197
        %v2199 = vsel %vm1523, %v2190, %v2198
        %v2200 = vshrl.u32 %v1495, 16
        %v2202 = vrot.slane %v2200, 4
        %v2203 = vshll.u32 %v1495, 16
        %v2205 = vrot.slane %v2203, 5
        %v2206 = vor.u32 %v2202, %v2205
        %v2207 = vsel %vm1523, %v2198, %v2206
        %v2208 = vshrl.u32 %v1496, 16
        %v2210 = vrot.slane %v2208, 4
        %v2211 = vshll.u32 %v1496, 16
        %v2213 = vrot.slane %v2211, 5
        %v2214 = vor.u32 %v2210, %v2213
        %v2215 = vsel %vm1523, %v2206, %v2214
        %v2216 = vshrl.u32 %v1497, 16
        %v2218 = vrot.slane %v2216, 4
        %v2219 = vshll.u32 %v1497, 16
        %v2221 = vrot.slane %v2219, 5
        %v2222 = vor.u32 %v2218, %v2221
        %v2223 = vsel %vm1523, %v2214, %v2222
        %v2225 = vshrl.u32 %v2047, 16
        %v2227 = vrot.slane %v2225, 4
        %v2228 = vshll.u32 %v2047, 16
        %v2230 = vrot.slane %v2228, 5
        %v2231 = vor.u32 %v2227, %v2230
        %v2232 = vsel %vm1523, %v2222, %v2231
        %v2234 = vshrl.u32 %v2048, 16
        %v2236 = vrot.slane %v2234, 4
        %v2237 = vshll.u32 %v2048, 16
        %v2239 = vrot.slane %v2237, 5
        %v2240 = vor.u32 %v2236, %v2239
        %v2241 = vsel %vm1523, %v2231, %v2240
        %2242 = vrot.lane.b32.xlu0 %v2055, 32
        %v2243 = vpop.permute.xlu0 %2242
        %2244 = vrot.lane.b32.xlu0 %v2063, 32
        %v2245 = vpop.permute.xlu0 %2244
        %2246 = vrot.lane.b32.xlu0 %v2071, 32
        %v2247 = vpop.permute.xlu0 %2246
        %2248 = vrot.lane.b32.xlu0 %v2079, 32
        %v2249 = vpop.permute.xlu0 %2248
        %2250 = vrot.lane.b32.xlu0 %v2087, 32
        %v2251 = vpop.permute.xlu0 %2250
        %2252 = vrot.lane.b32.xlu0 %v2095, 32
        %v2253 = vpop.permute.xlu0 %2252
        %2254 = vrot.lane.b32.xlu0 %v2103, 32
        %v2255 = vpop.permute.xlu0 %2254
        %2256 = vrot.lane.b32.xlu0 %v2111, 32
        %v2257 = vpop.permute.xlu0 %2256
        %2258 = vrot.lane.b32.xlu0 %v2119, 32
        %v2259 = vpop.permute.xlu0 %2258
        %2260 = vrot.lane.b32.xlu0 %v2127, 32
        %v2261 = vpop.permute.xlu0 %2260
        %2262 = vrot.lane.b32.xlu0 %v2135, 32
        %v2263 = vpop.permute.xlu0 %2262
        %2264 = vrot.lane.b32.xlu0 %v2143, 32
        %v2265 = vpop.permute.xlu0 %2264
        %2266 = vrot.lane.b32.xlu0 %v2151, 32
        %v2267 = vpop.permute.xlu0 %2266
        %2268 = vrot.lane.b32.xlu0 %v2159, 32
        %v2269 = vpop.permute.xlu0 %2268
        %2270 = vrot.lane.b32.xlu0 %v2167, 32
        %v2271 = vpop.permute.xlu0 %2270
        %2272 = vrot.lane.b32.xlu0 %v2175, 32
        %v2273 = vpop.permute.xlu0 %2272
        %2274 = vrot.lane.b32.xlu0 %v2183, 32
        %v2275 = vpop.permute.xlu0 %2274
        %2276 = vrot.lane.b32.xlu0 %v2191, 32
        %v2277 = vpop.permute.xlu0 %2276
        %2278 = vrot.lane.b32.xlu0 %v2199, 32
        %v2279 = vpop.permute.xlu0 %2278
        %2280 = vrot.lane.b32.xlu0 %v2207, 32
        %v2281 = vpop.permute.xlu0 %2280
        %2282 = vrot.lane.b32.xlu0 %v2215, 32
        %v2283 = vpop.permute.xlu0 %2282
        %2284 = vrot.lane.b32.xlu0 %v2223, 32
        %v2285 = vpop.permute.xlu0 %2284
        %2286 = vrot.lane.b32.xlu0 %v2232, 32
        %v2287 = vpop.permute.xlu0 %2286
        %2288 = vrot.lane.b32.xlu0 %v2241, 32
        %v2289 = vpop.permute.xlu0 %2288
        %2290 = vrot.lane.b32.xlu0 %v2240, 32
        %v2291 = vpop.permute.xlu0 %2290
        %v2293 = vunpack.c.l.b16 %v2035
        %v2294 = vpack.c.b16 %v2293, %v2293
        %v2295 = vrot.slane %v1476, 5
        %v2296 = vrot.slane %v1477, 5
        %v2297 = vsel %vm1792, %v2295, %v2296
        %v2298 = vrot.slane %v1478, 5
        %v2299 = vsel %vm1792, %v2296, %v2298
        %v2300 = vrot.slane %v1479, 5
        %v2301 = vsel %vm1792, %v2298, %v2300
        %v2302 = vrot.slane %v1480, 5
        %v2303 = vsel %vm1792, %v2300, %v2302
        %v2304 = vrot.slane %v1481, 5
        %v2305 = vsel %vm1792, %v2302, %v2304
        %v2306 = vrot.slane %v1482, 5
        %v2307 = vsel %vm1792, %v2304, %v2306
        %v2308 = vrot.slane %v1483, 5
        %v2309 = vsel %vm1792, %v2306, %v2308
        %v2310 = vrot.slane %v1484, 5
        %v2311 = vsel %vm1792, %v2308, %v2310
        %v2312 = vrot.slane %v1485, 5
        %v2313 = vsel %vm1792, %v2310, %v2312
        %v2314 = vrot.slane %v1486, 5
        %v2315 = vsel %vm1792, %v2312, %v2314
        %v2316 = vrot.slane %v1487, 5
        %v2317 = vsel %vm1792, %v2314, %v2316
        %v2318 = vrot.slane %v1488, 5
        %v2319 = vsel %vm1792, %v2316, %v2318
        %v2320 = vrot.slane %v1489, 5
        %v2321 = vsel %vm1792, %v2318, %v2320
        %v2322 = vrot.slane %v1490, 5
        %v2323 = vsel %vm1792, %v2320, %v2322
        %v2324 = vrot.slane %v1491, 5
        %v2325 = vsel %vm1792, %v2322, %v2324
        %v2326 = vrot.slane %v1492, 5
        %v2327 = vsel %vm1792, %v2324, %v2326
        %v2328 = vrot.slane %v1493, 5
        %v2329 = vsel %vm1792, %v2326, %v2328
        %v2330 = vrot.slane %v1494, 5
        %v2331 = vsel %vm1792, %v2328, %v2330
        %v2332 = vrot.slane %v1495, 5
        %v2333 = vsel %vm1792, %v2330, %v2332
        %v2334 = vrot.slane %v1496, 5
        %v2335 = vsel %vm1792, %v2332, %v2334
        %v2336 = vrot.slane %v1497, 5
        %v2337 = vsel %vm1792, %v2334, %v2336
        %v2338 = vrot.slane %v2047, 5
        %v2339 = vsel %vm1792, %v2336, %v2338
        %v2340 = vrot.slane %v2048, 5
        %v2341 = vsel %vm1792, %v2338, %v2340
        %v2342 = vrot.slane %v2294, 5
        %v2343 = vsel %vm1792, %v2340, %v2342
        %2344 = vrot.lane.b32.xlu0 %v2295, 64
        %v2345 = vpop.permute.xlu0 %2344
        %2346 = vrot.lane.b32.xlu0 %v2297, 64
        %v2347 = vpop.permute.xlu0 %2346
        %2348 = vrot.lane.b32.xlu0 %v2299, 64
        %v2349 = vpop.permute.xlu0 %2348
        %2350 = vrot.lane.b32.xlu0 %v2301, 64
        %v2351 = vpop.permute.xlu0 %2350
        %2352 = vrot.lane.b32.xlu0 %v2303, 64
        %v2353 = vpop.permute.xlu0 %2352
        %2354 = vrot.lane.b32.xlu0 %v2305, 64
        %v2355 = vpop.permute.xlu0 %2354
        %2356 = vrot.lane.b32.xlu0 %v2307, 64
        %v2357 = vpop.permute.xlu0 %2356
        %2358 = vrot.lane.b32.xlu0 %v2309, 64
        %v2359 = vpop.permute.xlu0 %2358
        %2360 = vrot.lane.b32.xlu0 %v2311, 64
        %v2361 = vpop.permute.xlu0 %2360
        %2362 = vrot.lane.b32.xlu0 %v2313, 64
        %v2363 = vpop.permute.xlu0 %2362
        %2364 = vrot.lane.b32.xlu0 %v2315, 64
        %v2365 = vpop.permute.xlu0 %2364
        %2366 = vrot.lane.b32.xlu0 %v2317, 64
        %v2367 = vpop.permute.xlu0 %2366
        %2368 = vrot.lane.b32.xlu0 %v2319, 64
        %v2369 = vpop.permute.xlu0 %2368
        %2370 = vrot.lane.b32.xlu0 %v2321, 64
        %v2371 = vpop.permute.xlu0 %2370
        %2372 = vrot.lane.b32.xlu0 %v2323, 64
        %v2373 = vpop.permute.xlu0 %2372
        %2374 = vrot.lane.b32.xlu0 %v2325, 64
        %v2375 = vpop.permute.xlu0 %2374
        %2376 = vrot.lane.b32.xlu0 %v2327, 64
        %v2377 = vpop.permute.xlu0 %2376
        %2378 = vrot.lane.b32.xlu0 %v2329, 64
        %v2379 = vpop.permute.xlu0 %2378
        %2380 = vrot.lane.b32.xlu0 %v2331, 64
        %v2381 = vpop.permute.xlu0 %2380
        %2382 = vrot.lane.b32.xlu0 %v2333, 64
        %v2383 = vpop.permute.xlu0 %2382
        %2384 = vrot.lane.b32.xlu0 %v2335, 64
        %v2385 = vpop.permute.xlu0 %2384
        %2386 = vrot.lane.b32.xlu0 %v2337, 64
        %v2387 = vpop.permute.xlu0 %2386
        %2388 = vrot.lane.b32.xlu0 %v2339, 64
        %v2389 = vpop.permute.xlu0 %2388
        %2390 = vrot.lane.b32.xlu0 %v2341, 64
        %v2391 = vpop.permute.xlu0 %2390
        %2392 = vrot.lane.b32.xlu0 %v2343, 64
        %v2393 = vpop.permute.xlu0 %2392
        %v2396 = vsel %vm1892, %v2044, %v2243
        %v2398 = vsel %vm1892, %v1501, %v2245
        %v2400 = vsel %vm1892, %v1502, %v2247
        %v2402 = vsel %vm1892, %v1503, %v2249
        %v2404 = vsel %vm1892, %v1504, %v2251
        %v2406 = vsel %vm1892, %v1505, %v2253
        %v2408 = vsel %vm1892, %v1506, %v2255
        %v2410 = vsel %vm1892, %v1507, %v2257
        %v2412 = vsel %vm1892, %v1508, %v2259
        %v2414 = vsel %vm1892, %v1509, %v2261
        %v2416 = vsel %vm1892, %v1510, %v2263
        %v2418 = vsel %vm1892, %v1511, %v2265
        %v2420 = vsel %vm1892, %v1512, %v2267
        %v2422 = vsel %vm1892, %v1513, %v2269
        %v2424 = vsel %vm1892, %v1514, %v2271
        %v2426 = vsel %vm1892, %v1515, %v2273
        %v2428 = vsel %vm1892, %v1516, %v2275
        %v2430 = vsel %vm1892, %v1517, %v2277
        %v2432 = vsel %vm1892, %v1518, %v2279
        %v2434 = vsel %vm1892, %v1519, %v2281
        %v2436 = vsel %vm1892, %v1520, %v2283
        %v2438 = vsel %vm1892, %v1521, %v2285
        %v2440 = vsel %vm1892, %v1522, %v2287
        %v2443 = vsel %vm1892, %v2045, %v2289
        %v2446 = vsel %vm1892, %v2046, %v2291
        %v2448 = vsel %vm1968, %v2396, %v2345
        %v2450 = vsel %vm1968, %v2398, %v2347
        %v2452 = vsel %vm1968, %v2400, %v2349
        %v2454 = vsel %vm1968, %v2402, %v2351
        %v2456 = vsel %vm1968, %v2404, %v2353
        %v2458 = vsel %vm1968, %v2406, %v2355
        %v2460 = vsel %vm1968, %v2408, %v2357
        %v2462 = vsel %vm1968, %v2410, %v2359
        %v2464 = vsel %vm1968, %v2412, %v2361
        %v2466 = vsel %vm1968, %v2414, %v2363
        %v2468 = vsel %vm1968, %v2416, %v2365
        %v2470 = vsel %vm1968, %v2418, %v2367
        %v2472 = vsel %vm1968, %v2420, %v2369
        %v2474 = vsel %vm1968, %v2422, %v2371
        %v2476 = vsel %vm1968, %v2424, %v2373
        %v2478 = vsel %vm1968, %v2426, %v2375
        %v2480 = vsel %vm1968, %v2428, %v2377
        %v2482 = vsel %vm1968, %v2430, %v2379
        %v2484 = vsel %vm1968, %v2432, %v2381
        %v2486 = vsel %vm1968, %v2434, %v2383
        %v2488 = vsel %vm1968, %v2436, %v2385
        %v2490 = vsel %vm1968, %v2438, %v2387
        %v2492 = vsel %vm1968, %v2440, %v2389
        %v2494 = vsel %vm1968, %v2443, %v2391
        %v2496 = vsel %vm1968, %v2446, %v2393
        %s2497 = scalar_lea.vmem %s4, 48
        %v2498 = vld [vmem:[%s2497] sm:$0xf]
        %v2499 = vld [vmem:[%s2497 + $0x4] sm:$0xf]
        %v2500 = vld [vmem:[%s2497 + $0x8] sm:$0xf]
        %v2501 = vld [vmem:[%s2497 + $0xc] sm:$0xf]
        %v2502 = vld [vmem:[%s2497 + $0x10] sm:$0xf]
        %v2503 = vld [vmem:[%s2497 + $0x14] sm:$0xf]
        %v2504 = vld [vmem:[%s2497 + $0x18] sm:$0xf]
        %v2505 = vld [vmem:[%s2497 + $0x1c] sm:$0xf]
        %v2506 = vld [vmem:[%s2497 + $0x20] sm:$0xf]
        %v2507 = vld [vmem:[%s2497 + $0x24] sm:$0xf]
        %v2508 = vld [vmem:[%s2497 + $0x28] sm:$0xf]
        %v2509 = vld [vmem:[%s2497 + $0x2c] sm:$0xf]
        %vm2510 = vsmask.f32 4352
        %v2511 = vshrl.u32 %v2448, 16
        %v2513 = vrot.slane %v2511, 3
        %v2514 = vshll.u32 %v2448, 16
        %v2516 = vrot.slane %v2514, 4
        %v2517 = vor.u32 %v2513, %v2516
        %v2518 = vshrl.u32 %v2450, 16
        %v2520 = vrot.slane %v2518, 3
        %v2521 = vshll.u32 %v2450, 16
        %v2523 = vrot.slane %v2521, 4
        %v2524 = vor.u32 %v2520, %v2523
        %v2525 = vsel %vm2510, %v2517, %v2524
        %v2526 = vshrl.u32 %v2452, 16
        %v2528 = vrot.slane %v2526, 3
        %v2529 = vshll.u32 %v2452, 16
        %v2531 = vrot.slane %v2529, 4
        %v2532 = vor.u32 %v2528, %v2531
        %v2533 = vsel %vm2510, %v2524, %v2532
        %v2534 = vshrl.u32 %v2454, 16
        %v2536 = vrot.slane %v2534, 3
        %v2537 = vshll.u32 %v2454, 16
        %v2539 = vrot.slane %v2537, 4
        %v2540 = vor.u32 %v2536, %v2539
        %v2541 = vsel %vm2510, %v2532, %v2540
        %v2542 = vshrl.u32 %v2456, 16
        %v2544 = vrot.slane %v2542, 3
        %v2545 = vshll.u32 %v2456, 16
        %v2547 = vrot.slane %v2545, 4
        %v2548 = vor.u32 %v2544, %v2547
        %v2549 = vsel %vm2510, %v2540, %v2548
        %v2550 = vshrl.u32 %v2458, 16
        %v2552 = vrot.slane %v2550, 3
        %v2553 = vshll.u32 %v2458, 16
        %v2555 = vrot.slane %v2553, 4
        %v2556 = vor.u32 %v2552, %v2555
        %v2557 = vsel %vm2510, %v2548, %v2556
        %v2558 = vshrl.u32 %v2460, 16
        %v2560 = vrot.slane %v2558, 3
        %v2561 = vshll.u32 %v2460, 16
        %v2563 = vrot.slane %v2561, 4
        %v2564 = vor.u32 %v2560, %v2563
        %v2565 = vsel %vm2510, %v2556, %v2564
        %v2566 = vshrl.u32 %v2462, 16
        %v2568 = vrot.slane %v2566, 3
        %v2569 = vshll.u32 %v2462, 16
        %v2571 = vrot.slane %v2569, 4
        %v2572 = vor.u32 %v2568, %v2571
        %v2573 = vsel %vm2510, %v2564, %v2572
        %v2574 = vshrl.u32 %v2464, 16
        %v2576 = vrot.slane %v2574, 3
        %v2577 = vshll.u32 %v2464, 16
        %v2579 = vrot.slane %v2577, 4
        %v2580 = vor.u32 %v2576, %v2579
        %v2581 = vsel %vm2510, %v2572, %v2580
        %v2582 = vshrl.u32 %v2466, 16
        %v2584 = vrot.slane %v2582, 3
        %v2585 = vshll.u32 %v2466, 16
        %v2587 = vrot.slane %v2585, 4
        %v2588 = vor.u32 %v2584, %v2587
        %v2589 = vsel %vm2510, %v2580, %v2588
        %v2590 = vshrl.u32 %v2468, 16
        %v2592 = vrot.slane %v2590, 3
        %v2593 = vshll.u32 %v2468, 16
        %v2595 = vrot.slane %v2593, 4
        %v2596 = vor.u32 %v2592, %v2595
        %v2597 = vsel %vm2510, %v2588, %v2596
        %v2598 = vshrl.u32 %v2470, 16
        %v2600 = vrot.slane %v2598, 3
        %v2601 = vshll.u32 %v2470, 16
        %v2603 = vrot.slane %v2601, 4
        %v2604 = vor.u32 %v2600, %v2603
        %v2605 = vsel %vm2510, %v2596, %v2604
        %v2606 = vshrl.u32 %v2472, 16
        %v2608 = vrot.slane %v2606, 3
        %v2609 = vshll.u32 %v2472, 16
        %v2611 = vrot.slane %v2609, 4
        %v2612 = vor.u32 %v2608, %v2611
        %v2613 = vsel %vm2510, %v2604, %v2612
        %v2614 = vshrl.u32 %v2474, 16
        %v2616 = vrot.slane %v2614, 3
        %v2617 = vshll.u32 %v2474, 16
        %v2619 = vrot.slane %v2617, 4
        %v2620 = vor.u32 %v2616, %v2619
        %v2621 = vsel %vm2510, %v2612, %v2620
        %v2622 = vshrl.u32 %v2476, 16
        %v2624 = vrot.slane %v2622, 3
        %v2625 = vshll.u32 %v2476, 16
        %v2627 = vrot.slane %v2625, 4
        %v2628 = vor.u32 %v2624, %v2627
        %v2629 = vsel %vm2510, %v2620, %v2628
        %v2630 = vshrl.u32 %v2478, 16
        %v2632 = vrot.slane %v2630, 3
        %v2633 = vshll.u32 %v2478, 16
        %v2635 = vrot.slane %v2633, 4
        %v2636 = vor.u32 %v2632, %v2635
        %v2637 = vsel %vm2510, %v2628, %v2636
        %v2638 = vshrl.u32 %v2480, 16
        %v2640 = vrot.slane %v2638, 3
        %v2641 = vshll.u32 %v2480, 16
        %v2643 = vrot.slane %v2641, 4
        %v2644 = vor.u32 %v2640, %v2643
        %v2645 = vsel %vm2510, %v2636, %v2644
        %v2646 = vshrl.u32 %v2482, 16
        %v2648 = vrot.slane %v2646, 3
        %v2649 = vshll.u32 %v2482, 16
        %v2651 = vrot.slane %v2649, 4
        %v2652 = vor.u32 %v2648, %v2651
        %v2653 = vsel %vm2510, %v2644, %v2652
        %v2654 = vshrl.u32 %v2484, 16
        %v2656 = vrot.slane %v2654, 3
        %v2657 = vshll.u32 %v2484, 16
        %v2659 = vrot.slane %v2657, 4
        %v2660 = vor.u32 %v2656, %v2659
        %v2661 = vsel %vm2510, %v2652, %v2660
        %v2662 = vshrl.u32 %v2486, 16
        %v2664 = vrot.slane %v2662, 3
        %v2665 = vshll.u32 %v2486, 16
        %v2667 = vrot.slane %v2665, 4
        %v2668 = vor.u32 %v2664, %v2667
        %v2669 = vsel %vm2510, %v2660, %v2668
        %v2670 = vshrl.u32 %v2488, 16
        %v2672 = vrot.slane %v2670, 3
        %v2673 = vshll.u32 %v2488, 16
        %v2675 = vrot.slane %v2673, 4
        %v2676 = vor.u32 %v2672, %v2675
        %v2677 = vsel %vm2510, %v2668, %v2676
        %v2678 = vshrl.u32 %v2490, 16
        %v2680 = vrot.slane %v2678, 3
        %v2681 = vshll.u32 %v2490, 16
        %v2683 = vrot.slane %v2681, 4
        %v2684 = vor.u32 %v2680, %v2683
        %v2685 = vsel %vm2510, %v2676, %v2684
        %v2686 = vshrl.u32 %v2492, 16
        %v2688 = vrot.slane %v2686, 3
        %v2689 = vshll.u32 %v2492, 16
        %v2691 = vrot.slane %v2689, 4
        %v2692 = vor.u32 %v2688, %v2691
        %v2693 = vsel %vm2510, %v2684, %v2692
        %v2694 = vshrl.u32 %v2494, 16
        %v2696 = vrot.slane %v2694, 3
        %v2697 = vshll.u32 %v2494, 16
        %v2699 = vrot.slane %v2697, 4
        %v2700 = vor.u32 %v2696, %v2699
        %v2701 = vsel %vm2510, %v2692, %v2700
        %v2702 = vshrl.u32 %v2496, 16
        %v2704 = vrot.slane %v2702, 3
        %v2705 = vshll.u32 %v2496, 16
        %v2707 = vrot.slane %v2705, 4
        %v2708 = vor.u32 %v2704, %v2707
        %v2709 = vsel %vm2510, %v2700, %v2708
        %v2722 = vunpack.c.l.b16 %v2498
        %v2723 = vunpack.c.l.b16 %v2499
        %v2724 = vunpack.c.l.b16 %v2500
        %v2725 = vunpack.c.l.b16 %v2501
        %v2726 = vunpack.c.l.b16 %v2502
        %v2727 = vunpack.c.l.b16 %v2503
        %v2728 = vunpack.c.l.b16 %v2504
        %v2729 = vunpack.c.l.b16 %v2505
        %v2730 = vunpack.c.l.b16 %v2506
        %v2731 = vunpack.c.l.b16 %v2507
        %v2732 = vunpack.c.l.b16 %v2508
        %v2733 = vunpack.c.l.b16 %v2509
        %v2734 = vpack.c.b16 %v2723, %v2722
        %v2735 = vpack.c.b16 %v2725, %v2724
        %v2736 = vpack.c.b16 %v2727, %v2726
        %v2737 = vpack.c.b16 %v2729, %v2728
        %v2738 = vpack.c.b16 %v2731, %v2730
        %v2739 = vpack.c.b16 %v2733, %v2732
        %vm2746 = vcmask 785408
        %v2748 = vsel %vm2746, %v2525, 0
        %v2751 = vsel %vm2746, %v2533, 0
        %v2754 = vsel %vm2746, %v2541, 0
        %v2757 = vsel %vm2746, %v2549, 0
        %v2760 = vsel %vm2746, %v2557, 0
        %v2763 = vsel %vm2746, %v2565, 0
        %v2766 = vsel %vm2746, %v2573, 0
        %v2769 = vsel %vm2746, %v2581, 0
        %v2772 = vsel %vm2746, %v2589, 0
        %v2775 = vsel %vm2746, %v2597, 0
        %v2778 = vsel %vm2746, %v2605, 0
        %v2781 = vsel %vm2746, %v2613, 0
        %v2784 = vsel %vm2746, %v2621, 0
        %v2787 = vsel %vm2746, %v2629, 0
        %v2790 = vsel %vm2746, %v2637, 0
        %v2793 = vsel %vm2746, %v2645, 0
        %v2796 = vsel %vm2746, %v2653, 0
        %v2799 = vsel %vm2746, %v2661, 0
        %v2802 = vsel %vm2746, %v2669, 0
        %v2805 = vsel %vm2746, %v2677, 0
        %v2808 = vsel %vm2746, %v2685, 0
        %v2811 = vsel %vm2746, %v2693, 0
        %v2814 = vsel %vm2746, %v2701, 0
        %v2817 = vsel %vm2746, %v2709, 0
        %2819 = vmatprep.subr.bf16.mxu0 0
        %2820 = vmatpush1.bf16.msra.mxu0 0
        %2821 = vmatprep.subr.bf16.mxu0 0
        %2822 = vmatpush1.bf16.msra.mxu0 0
        %2823 = vmatprep.subr.bf16.mxu0 0
        %2824 = vmatpush1.bf16.msra.mxu0 %v2739
        %2825 = vmatprep.subr.bf16.mxu0 0
        %2826 = vmatpush1.bf16.msra.mxu0 %v2738
        %2827 = vmatprep.subr.bf16.mxu0 0
        %2828 = vmatpush1.bf16.msra.mxu0 %v2737
        %2829 = vmatprep.subr.bf16.mxu0 0
        %2830 = vmatpush1.bf16.msra.mxu0 %v2736
        %2831 = vmatprep.subr.bf16.mxu0 0
        %2832 = vmatpush1.bf16.msra.mxu0 %v2735
        %2833 = vmatprep.subr.bf16.mxu0 0
        %2834 = vmatpush1.bf16.msra.mxu0 %v2734
        %2835 = vmatprep.subr.bf16.mxu0 0
        %2836 = vmatpush2.bf16.msra.mxu0 0
        %2837 = vmatprep.subr.bf16.mxu0 0
        %2838 = vmatpush2.bf16.msra.mxu0 0
        %2839 = vmatprep.subr.bf16.mxu0 0
        %2840 = vmatpush2.bf16.msra.mxu0 0
        %2841 = vmatprep.subr.bf16.mxu0 0
        %2842 = vmatpush2.bf16.msra.mxu0 0
        %2843 = vmatprep.subr.bf16.mxu0 0
        %2844 = vmatpush2.bf16.msra.mxu0 0
        %2845 = vmatprep.subr.bf16.mxu0 0
        %2846 = vmatpush2.bf16.msra.mxu0 0
        %2847 = vmatprep.subr.bf16.mxu0 0
        %2848 = vmatpush2.bf16.msra.mxu0 0
        %2849 = vmatprep.subr.bf16.mxu0 0
        %2850 = vmatpush2.bf16.msra.mxu0 0
        %2851 = vmatprep.mubr.bf16.mxu0 0
        %2852 = vmatmul.mubr.bf16.gmra.mxu0 %v2748
        %v2853 = vpop.f32.mrf.mxu0
        %v2854 = vadd.f32 0.0, %v2853
        %v2855 = vpop.f32.mrf.mxu0
        %v2856 = vpop.f32.mrf.mxu0
        %v2857 = vadd.f32 0.0, %v2856
        %v2858 = vpop.f32.mrf.mxu0
        %2859 = vmatprep.mubr.bf16.mxu0 0
        %2860 = vmatmul.mubr.bf16.gmra.mxu0 %v2751
        %v2861 = vpop.f32.mrf.mxu0
        %v2862 = vadd.f32 0.0, %v2861
        %v2863 = vpop.f32.mrf.mxu0
        %v2864 = vpop.f32.mrf.mxu0
        %v2865 = vadd.f32 0.0, %v2864
        %v2866 = vpop.f32.mrf.mxu0
        %2867 = vmatprep.mubr.bf16.mxu0 0
        %2868 = vmatmul.mubr.bf16.gmra.mxu0 %v2754
        %v2869 = vpop.f32.mrf.mxu0
        %v2870 = vadd.f32 0.0, %v2869
        %v2871 = vpop.f32.mrf.mxu0
        %v2872 = vpop.f32.mrf.mxu0
        %v2873 = vadd.f32 0.0, %v2872
        %v2874 = vpop.f32.mrf.mxu0
        %2875 = vmatprep.mubr.bf16.mxu0 0
        %2876 = vmatmul.mubr.bf16.gmra.mxu0 %v2757
        %v2877 = vpop.f32.mrf.mxu0
        %v2878 = vadd.f32 0.0, %v2877
        %v2879 = vpop.f32.mrf.mxu0
        %v2880 = vpop.f32.mrf.mxu0
        %v2881 = vadd.f32 0.0, %v2880
        %v2882 = vpop.f32.mrf.mxu0
        %2883 = vmatprep.mubr.bf16.mxu0 0
        %2884 = vmatmul.mubr.bf16.gmra.mxu0 %v2760
        %v2885 = vpop.f32.mrf.mxu0
        %v2886 = vadd.f32 0.0, %v2885
        %v2887 = vpop.f32.mrf.mxu0
        %v2888 = vpop.f32.mrf.mxu0
        %v2889 = vadd.f32 0.0, %v2888
        %v2890 = vpop.f32.mrf.mxu0
        %2891 = vmatprep.mubr.bf16.mxu0 0
        %2892 = vmatmul.mubr.bf16.gmra.mxu0 %v2763
        %v2893 = vpop.f32.mrf.mxu0
        %v2894 = vadd.f32 0.0, %v2893
        %v2895 = vpop.f32.mrf.mxu0
        %v2896 = vpop.f32.mrf.mxu0
        %v2897 = vadd.f32 0.0, %v2896
        %v2898 = vpop.f32.mrf.mxu0
        %2899 = vmatprep.mubr.bf16.mxu0 0
        %2900 = vmatmul.mubr.bf16.gmra.mxu0 %v2766
        %v2901 = vpop.f32.mrf.mxu0
        %v2902 = vadd.f32 0.0, %v2901
        %v2903 = vpop.f32.mrf.mxu0
        %v2904 = vpop.f32.mrf.mxu0
        %v2905 = vadd.f32 0.0, %v2904
        %v2906 = vpop.f32.mrf.mxu0
        %2907 = vmatprep.mubr.bf16.mxu0 0
        %2908 = vmatmul.mubr.bf16.gmra.mxu0 %v2769
        %v2909 = vpop.f32.mrf.mxu0
        %v2910 = vadd.f32 0.0, %v2909
        %v2911 = vpop.f32.mrf.mxu0
        %v2912 = vpop.f32.mrf.mxu0
        %v2913 = vadd.f32 0.0, %v2912
        %v2914 = vpop.f32.mrf.mxu0
        %2915 = vmatprep.mubr.bf16.mxu0 0
        %2916 = vmatmul.mubr.bf16.gmra.mxu0 %v2772
        %v2917 = vpop.f32.mrf.mxu0
        %v2918 = vadd.f32 0.0, %v2917
        %v2919 = vpop.f32.mrf.mxu0
        %v2920 = vpop.f32.mrf.mxu0
        %v2921 = vadd.f32 0.0, %v2920
        %v2922 = vpop.f32.mrf.mxu0
        %2923 = vmatprep.mubr.bf16.mxu0 0
        %2924 = vmatmul.mubr.bf16.gmra.mxu0 %v2775
        %v2925 = vpop.f32.mrf.mxu0
        %v2926 = vadd.f32 0.0, %v2925
        %v2927 = vpop.f32.mrf.mxu0
        %v2928 = vpop.f32.mrf.mxu0
        %v2929 = vadd.f32 0.0, %v2928
        %v2930 = vpop.f32.mrf.mxu0
        %2931 = vmatprep.mubr.bf16.mxu0 0
        %2932 = vmatmul.mubr.bf16.gmra.mxu0 %v2778
        %v2933 = vpop.f32.mrf.mxu0
        %v2934 = vadd.f32 0.0, %v2933
        %v2935 = vpop.f32.mrf.mxu0
        %v2936 = vpop.f32.mrf.mxu0
        %v2937 = vadd.f32 0.0, %v2936
        %v2938 = vpop.f32.mrf.mxu0
        %2939 = vmatprep.mubr.bf16.mxu0 0
        %2940 = vmatmul.mubr.bf16.gmra.mxu0 %v2781
        %v2941 = vpop.f32.mrf.mxu0
        %v2942 = vadd.f32 0.0, %v2941
        %v2943 = vpop.f32.mrf.mxu0
        %v2944 = vpop.f32.mrf.mxu0
        %v2945 = vadd.f32 0.0, %v2944
        %v2946 = vpop.f32.mrf.mxu0
        %2947 = vmatprep.mubr.bf16.mxu0 0
        %2948 = vmatmul.mubr.bf16.gmra.mxu0 %v2784
        %v2949 = vpop.f32.mrf.mxu0
        %v2950 = vadd.f32 0.0, %v2949
        %v2951 = vpop.f32.mrf.mxu0
        %v2952 = vpop.f32.mrf.mxu0
        %v2953 = vadd.f32 0.0, %v2952
        %v2954 = vpop.f32.mrf.mxu0
        %2955 = vmatprep.mubr.bf16.mxu0 0
        %2956 = vmatmul.mubr.bf16.gmra.mxu0 %v2787
        %v2957 = vpop.f32.mrf.mxu0
        %v2958 = vadd.f32 0.0, %v2957
        %v2959 = vpop.f32.mrf.mxu0
        %v2960 = vpop.f32.mrf.mxu0
        %v2961 = vadd.f32 0.0, %v2960
        %v2962 = vpop.f32.mrf.mxu0
        %2963 = vmatprep.mubr.bf16.mxu0 0
        %2964 = vmatmul.mubr.bf16.gmra.mxu0 %v2790
        %v2965 = vpop.f32.mrf.mxu0
        %v2966 = vadd.f32 0.0, %v2965
        %v2967 = vpop.f32.mrf.mxu0
        %v2968 = vpop.f32.mrf.mxu0
        %v2969 = vadd.f32 0.0, %v2968
        %v2970 = vpop.f32.mrf.mxu0
        %2971 = vmatprep.mubr.bf16.mxu0 0
        %2972 = vmatmul.mubr.bf16.gmra.mxu0 %v2793
        %v2973 = vpop.f32.mrf.mxu0
        %v2974 = vadd.f32 0.0, %v2973
        %v2975 = vpop.f32.mrf.mxu0
        %v2976 = vpop.f32.mrf.mxu0
        %v2977 = vadd.f32 0.0, %v2976
        %v2978 = vpop.f32.mrf.mxu0
        %2979 = vmatprep.mubr.bf16.mxu0 0
        %2980 = vmatmul.mubr.bf16.gmra.mxu0 %v2796
        %v2981 = vpop.f32.mrf.mxu0
        %v2982 = vadd.f32 0.0, %v2981
        %v2983 = vpop.f32.mrf.mxu0
        %v2984 = vpop.f32.mrf.mxu0
        %v2985 = vadd.f32 0.0, %v2984
        %v2986 = vpop.f32.mrf.mxu0
        %2987 = vmatprep.mubr.bf16.mxu0 0
        %2988 = vmatmul.mubr.bf16.gmra.mxu0 %v2799
        %v2989 = vpop.f32.mrf.mxu0
        %v2990 = vadd.f32 0.0, %v2989
        %v2991 = vpop.f32.mrf.mxu0
        %v2992 = vpop.f32.mrf.mxu0
        %v2993 = vadd.f32 0.0, %v2992
        %v2994 = vpop.f32.mrf.mxu0
        %2995 = vmatprep.mubr.bf16.mxu0 0
        %2996 = vmatmul.mubr.bf16.gmra.mxu0 %v2802
        %v2997 = vpop.f32.mrf.mxu0
        %v2998 = vadd.f32 0.0, %v2997
        %v2999 = vpop.f32.mrf.mxu0
        %v3000 = vpop.f32.mrf.mxu0
        %v3001 = vadd.f32 0.0, %v3000
        %v3002 = vpop.f32.mrf.mxu0
        %3003 = vmatprep.mubr.bf16.mxu0 0
        %3004 = vmatmul.mubr.bf16.gmra.mxu0 %v2805
        %v3005 = vpop.f32.mrf.mxu0
        %v3006 = vadd.f32 0.0, %v3005
        %v3007 = vpop.f32.mrf.mxu0
        %v3008 = vpop.f32.mrf.mxu0
        %v3009 = vadd.f32 0.0, %v3008
        %v3010 = vpop.f32.mrf.mxu0
        %3011 = vmatprep.mubr.bf16.mxu0 0
        %3012 = vmatmul.mubr.bf16.gmra.mxu0 %v2808
        %v3013 = vpop.f32.mrf.mxu0
        %v3014 = vadd.f32 0.0, %v3013
        %v3015 = vpop.f32.mrf.mxu0
        %v3016 = vpop.f32.mrf.mxu0
        %v3017 = vadd.f32 0.0, %v3016
        %v3018 = vpop.f32.mrf.mxu0
        %3019 = vmatprep.mubr.bf16.mxu0 0
        %3020 = vmatmul.mubr.bf16.gmra.mxu0 %v2811
        %v3021 = vpop.f32.mrf.mxu0
        %v3022 = vadd.f32 0.0, %v3021
        %v3023 = vpop.f32.mrf.mxu0
        %v3024 = vpop.f32.mrf.mxu0
        %v3025 = vadd.f32 0.0, %v3024
        %v3026 = vpop.f32.mrf.mxu0
        %3027 = vmatprep.mubr.bf16.mxu0 0
        %3028 = vmatmul.mubr.bf16.gmra.mxu0 %v2814
        %v3029 = vpop.f32.mrf.mxu0
        %v3030 = vadd.f32 0.0, %v3029
        %v3031 = vpop.f32.mrf.mxu0
        %v3032 = vpop.f32.mrf.mxu0
        %v3033 = vadd.f32 0.0, %v3032
        %v3034 = vpop.f32.mrf.mxu0
        %3035 = vmatprep.mubr.bf16.mxu0 0
        %3036 = vmatmul.mubr.bf16.gmra.mxu0 %v2817
        %v3037 = vpop.f32.mrf.mxu0
        %v3038 = vadd.f32 0.0, %v3037
        %v3039 = vpop.f32.mrf.mxu0
        %v3040 = vpop.f32.mrf.mxu0
        %v3041 = vadd.f32 0.0, %v3040
        %v3042 = vpop.f32.mrf.mxu0
        %3043 = vdwg.mxu0
        %v3044 = vshrl.u32 %v1970, 16
        %v3046 = vrot.slane %v3044, 3
        %v3047 = vshll.u32 %v1970, 16
        %v3049 = vrot.slane %v3047, 4
        %v3050 = vor.u32 %v3046, %v3049
        %v3051 = vshrl.u32 %v1972, 16
        %v3053 = vrot.slane %v3051, 3
        %v3054 = vshll.u32 %v1972, 16
        %v3056 = vrot.slane %v3054, 4
        %v3057 = vor.u32 %v3053, %v3056
        %v3058 = vsel %vm2510, %v3050, %v3057
        %v3059 = vshrl.u32 %v1974, 16
        %v3061 = vrot.slane %v3059, 3
        %v3062 = vshll.u32 %v1974, 16
        %v3064 = vrot.slane %v3062, 4
        %v3065 = vor.u32 %v3061, %v3064
        %v3066 = vsel %vm2510, %v3057, %v3065
        %v3067 = vshrl.u32 %v1976, 16
        %v3069 = vrot.slane %v3067, 3
        %v3070 = vshll.u32 %v1976, 16
        %v3072 = vrot.slane %v3070, 4
        %v3073 = vor.u32 %v3069, %v3072
        %v3074 = vsel %vm2510, %v3065, %v3073
        %v3075 = vshrl.u32 %v1978, 16
        %v3077 = vrot.slane %v3075, 3
        %v3078 = vshll.u32 %v1978, 16
        %v3080 = vrot.slane %v3078, 4
        %v3081 = vor.u32 %v3077, %v3080
        %v3082 = vsel %vm2510, %v3073, %v3081
        %v3083 = vshrl.u32 %v1980, 16
        %v3085 = vrot.slane %v3083, 3
        %v3086 = vshll.u32 %v1980, 16
        %v3088 = vrot.slane %v3086, 4
        %v3089 = vor.u32 %v3085, %v3088
        %v3090 = vsel %vm2510, %v3081, %v3089
        %v3091 = vshrl.u32 %v1982, 16
        %v3093 = vrot.slane %v3091, 3
        %v3094 = vshll.u32 %v1982, 16
        %v3096 = vrot.slane %v3094, 4
        %v3097 = vor.u32 %v3093, %v3096
        %v3098 = vsel %vm2510, %v3089, %v3097
        %v3099 = vshrl.u32 %v1984, 16
        %v3101 = vrot.slane %v3099, 3
        %v3102 = vshll.u32 %v1984, 16
        %v3104 = vrot.slane %v3102, 4
        %v3105 = vor.u32 %v3101, %v3104
        %v3106 = vsel %vm2510, %v3097, %v3105
        %v3107 = vshrl.u32 %v1986, 16
        %v3109 = vrot.slane %v3107, 3
        %v3110 = vshll.u32 %v1986, 16
        %v3112 = vrot.slane %v3110, 4
        %v3113 = vor.u32 %v3109, %v3112
        %v3114 = vsel %vm2510, %v3105, %v3113
        %v3115 = vshrl.u32 %v1988, 16
        %v3117 = vrot.slane %v3115, 3
        %v3118 = vshll.u32 %v1988, 16
        %v3120 = vrot.slane %v3118, 4
        %v3121 = vor.u32 %v3117, %v3120
        %v3122 = vsel %vm2510, %v3113, %v3121
        %v3123 = vshrl.u32 %v1990, 16
        %v3125 = vrot.slane %v3123, 3
        %v3126 = vshll.u32 %v1990, 16
        %v3128 = vrot.slane %v3126, 4
        %v3129 = vor.u32 %v3125, %v3128
        %v3130 = vsel %vm2510, %v3121, %v3129
        %v3131 = vshrl.u32 %v1992, 16
        %v3133 = vrot.slane %v3131, 3
        %v3134 = vshll.u32 %v1992, 16
        %v3136 = vrot.slane %v3134, 4
        %v3137 = vor.u32 %v3133, %v3136
        %v3138 = vsel %vm2510, %v3129, %v3137
        %v3139 = vshrl.u32 %v1994, 16
        %v3141 = vrot.slane %v3139, 3
        %v3142 = vshll.u32 %v1994, 16
        %v3144 = vrot.slane %v3142, 4
        %v3145 = vor.u32 %v3141, %v3144
        %v3146 = vsel %vm2510, %v3137, %v3145
        %v3147 = vshrl.u32 %v1996, 16
        %v3149 = vrot.slane %v3147, 3
        %v3150 = vshll.u32 %v1996, 16
        %v3152 = vrot.slane %v3150, 4
        %v3153 = vor.u32 %v3149, %v3152
        %v3154 = vsel %vm2510, %v3145, %v3153
        %v3155 = vshrl.u32 %v1998, 16
        %v3157 = vrot.slane %v3155, 3
        %v3158 = vshll.u32 %v1998, 16
        %v3160 = vrot.slane %v3158, 4
        %v3161 = vor.u32 %v3157, %v3160
        %v3162 = vsel %vm2510, %v3153, %v3161
        %v3163 = vshrl.u32 %v2000, 16
        %v3165 = vrot.slane %v3163, 3
        %v3166 = vshll.u32 %v2000, 16
        %v3168 = vrot.slane %v3166, 4
        %v3169 = vor.u32 %v3165, %v3168
        %v3170 = vsel %vm2510, %v3161, %v3169
        %v3171 = vshrl.u32 %v2002, 16
        %v3173 = vrot.slane %v3171, 3
        %v3174 = vshll.u32 %v2002, 16
        %v3176 = vrot.slane %v3174, 4
        %v3177 = vor.u32 %v3173, %v3176
        %v3178 = vsel %vm2510, %v3169, %v3177
        %v3179 = vshrl.u32 %v2004, 16
        %v3181 = vrot.slane %v3179, 3
        %v3182 = vshll.u32 %v2004, 16
        %v3184 = vrot.slane %v3182, 4
        %v3185 = vor.u32 %v3181, %v3184
        %v3186 = vsel %vm2510, %v3177, %v3185
        %v3187 = vshrl.u32 %v2006, 16
        %v3189 = vrot.slane %v3187, 3
        %v3190 = vshll.u32 %v2006, 16
        %v3192 = vrot.slane %v3190, 4
        %v3193 = vor.u32 %v3189, %v3192
        %v3194 = vsel %vm2510, %v3185, %v3193
        %v3195 = vshrl.u32 %v2008, 16
        %v3197 = vrot.slane %v3195, 3
        %v3198 = vshll.u32 %v2008, 16
        %v3200 = vrot.slane %v3198, 4
        %v3201 = vor.u32 %v3197, %v3200
        %v3202 = vsel %vm2510, %v3193, %v3201
        %v3203 = vshrl.u32 %v2010, 16
        %v3205 = vrot.slane %v3203, 3
        %v3206 = vshll.u32 %v2010, 16
        %v3208 = vrot.slane %v3206, 4
        %v3209 = vor.u32 %v3205, %v3208
        %v3210 = vsel %vm2510, %v3201, %v3209
        %v3211 = vshrl.u32 %v2012, 16
        %v3213 = vrot.slane %v3211, 3
        %v3214 = vshll.u32 %v2012, 16
        %v3216 = vrot.slane %v3214, 4
        %v3217 = vor.u32 %v3213, %v3216
        %v3218 = vsel %vm2510, %v3209, %v3217
        %v3219 = vshrl.u32 %v2014, 16
        %v3221 = vrot.slane %v3219, 3
        %v3222 = vshll.u32 %v2014, 16
        %v3224 = vrot.slane %v3222, 4
        %v3225 = vor.u32 %v3221, %v3224
        %v3226 = vsel %vm2510, %v3217, %v3225
        %v3227 = vshrl.u32 %v2016, 16
        %v3229 = vrot.slane %v3227, 3
        %v3230 = vshll.u32 %v2016, 16
        %v3232 = vrot.slane %v3230, 4
        %v3233 = vor.u32 %v3229, %v3232
        %v3234 = vsel %vm2510, %v3225, %v3233
        %v3235 = vshrl.u32 %v2018, 16
        %v3237 = vrot.slane %v3235, 3
        %v3238 = vshll.u32 %v2018, 16
        %v3240 = vrot.slane %v3238, 4
        %v3241 = vor.u32 %v3237, %v3240
        %v3242 = vsel %vm2510, %v3233, %v3241
        %v3255 = vunpack.c.l.b16 %v2019
        %v3256 = vunpack.c.l.b16 %v2020
        %v3257 = vunpack.c.l.b16 %v2021
        %v3258 = vunpack.c.l.b16 %v2022
        %v3259 = vunpack.c.l.b16 %v2023
        %v3260 = vunpack.c.l.b16 %v2024
        %v3261 = vunpack.c.l.b16 %v2025
        %v3262 = vunpack.c.l.b16 %v2026
        %v3263 = vunpack.c.l.b16 %v2027
        %v3264 = vunpack.c.l.b16 %v2028
        %v3265 = vunpack.c.l.b16 %v2029
        %v3266 = vunpack.c.l.b16 %v2030
        %v3267 = vpack.c.b16 %v3256, %v3255
        %v3268 = vpack.c.b16 %v3258, %v3257
        %v3269 = vpack.c.b16 %v3260, %v3259
        %v3270 = vpack.c.b16 %v3262, %v3261
        %v3271 = vpack.c.b16 %v3264, %v3263
        %v3272 = vpack.c.b16 %v3266, %v3265
        %v3280 = vsel %vm2746, %v3058, 0
        %v3283 = vsel %vm2746, %v3066, 0
        %v3286 = vsel %vm2746, %v3074, 0
        %v3289 = vsel %vm2746, %v3082, 0
        %v3292 = vsel %vm2746, %v3090, 0
        %v3295 = vsel %vm2746, %v3098, 0
        %v3298 = vsel %vm2746, %v3106, 0
        %v3301 = vsel %vm2746, %v3114, 0
        %v3304 = vsel %vm2746, %v3122, 0
        %v3307 = vsel %vm2746, %v3130, 0
        %v3310 = vsel %vm2746, %v3138, 0
        %v3313 = vsel %vm2746, %v3146, 0
        %v3316 = vsel %vm2746, %v3154, 0
        %v3319 = vsel %vm2746, %v3162, 0
        %v3322 = vsel %vm2746, %v3170, 0
        %v3325 = vsel %vm2746, %v3178, 0
        %v3328 = vsel %vm2746, %v3186, 0
        %v3331 = vsel %vm2746, %v3194, 0
        %v3334 = vsel %vm2746, %v3202, 0
        %v3337 = vsel %vm2746, %v3210, 0
        %v3340 = vsel %vm2746, %v3218, 0
        %v3343 = vsel %vm2746, %v3226, 0
        %v3346 = vsel %vm2746, %v3234, 0
        %v3349 = vsel %vm2746, %v3242, 0
        %3351 = vmatprep.subr.bf16.mxu0 0
        %3352 = vmatpush1.bf16.msra.mxu0 0
        %3353 = vmatprep.subr.bf16.mxu0 0
        %3354 = vmatpush1.bf16.msra.mxu0 0
        %3355 = vmatprep.subr.bf16.mxu0 0
        %3356 = vmatpush1.bf16.msra.mxu0 %v3272
        %3357 = vmatprep.subr.bf16.mxu0 0
        %3358 = vmatpush1.bf16.msra.mxu0 %v3271
        %3359 = vmatprep.subr.bf16.mxu0 0
        %3360 = vmatpush1.bf16.msra.mxu0 %v3270
        %3361 = vmatprep.subr.bf16.mxu0 0
        %3362 = vmatpush1.bf16.msra.mxu0 %v3269
        %3363 = vmatprep.subr.bf16.mxu0 0
        %3364 = vmatpush1.bf16.msra.mxu0 %v3268
        %3365 = vmatprep.subr.bf16.mxu0 0
        %3366 = vmatpush1.bf16.msra.mxu0 %v3267
        %3367 = vmatprep.subr.bf16.mxu0 0
        %3368 = vmatpush2.bf16.msra.mxu0 0
        %3369 = vmatprep.subr.bf16.mxu0 0
        %3370 = vmatpush2.bf16.msra.mxu0 0
        %3371 = vmatprep.subr.bf16.mxu0 0
        %3372 = vmatpush2.bf16.msra.mxu0 0
        %3373 = vmatprep.subr.bf16.mxu0 0
        %3374 = vmatpush2.bf16.msra.mxu0 0
        %3375 = vmatprep.subr.bf16.mxu0 0
        %3376 = vmatpush2.bf16.msra.mxu0 0
        %3377 = vmatprep.subr.bf16.mxu0 0
        %3378 = vmatpush2.bf16.msra.mxu0 0
        %3379 = vmatprep.subr.bf16.mxu0 0
        %3380 = vmatpush2.bf16.msra.mxu0 0
        %3381 = vmatprep.subr.bf16.mxu0 0
        %3382 = vmatpush2.bf16.msra.mxu0 0
        %3383 = vmatprep.mubr.bf16.mxu0 0
        %3384 = vmatmul.mubr.bf16.gmra.mxu0 %v3280
        %v3385 = vpop.f32.mrf.mxu0
        %v3386 = vadd.f32 %v2854, %v3385
        %v3387 = vpop.f32.mrf.mxu0
        %v3388 = vpop.f32.mrf.mxu0
        %v3389 = vadd.f32 %v2857, %v3388
        %v3390 = vpop.f32.mrf.mxu0
        %3391 = vmatprep.mubr.bf16.mxu0 0
        %3392 = vmatmul.mubr.bf16.gmra.mxu0 %v3283
        %v3393 = vpop.f32.mrf.mxu0
        %v3394 = vadd.f32 %v2862, %v3393
        %v3395 = vpop.f32.mrf.mxu0
        %v3396 = vpop.f32.mrf.mxu0
        %v3397 = vadd.f32 %v2865, %v3396
        %v3398 = vpop.f32.mrf.mxu0
        %3399 = vmatprep.mubr.bf16.mxu0 0
        %3400 = vmatmul.mubr.bf16.gmra.mxu0 %v3286
        %v3401 = vpop.f32.mrf.mxu0
        %v3402 = vadd.f32 %v2870, %v3401
        %v3403 = vpop.f32.mrf.mxu0
        %v3404 = vpop.f32.mrf.mxu0
        %v3405 = vadd.f32 %v2873, %v3404
        %v3406 = vpop.f32.mrf.mxu0
        %3407 = vmatprep.mubr.bf16.mxu0 0
        %3408 = vmatmul.mubr.bf16.gmra.mxu0 %v3289
        %v3409 = vpop.f32.mrf.mxu0
        %v3410 = vadd.f32 %v2878, %v3409
        %v3411 = vpop.f32.mrf.mxu0
        %v3412 = vpop.f32.mrf.mxu0
        %v3413 = vadd.f32 %v2881, %v3412
        %v3414 = vpop.f32.mrf.mxu0
        %3415 = vmatprep.mubr.bf16.mxu0 0
        %3416 = vmatmul.mubr.bf16.gmra.mxu0 %v3292
        %v3417 = vpop.f32.mrf.mxu0
        %v3418 = vadd.f32 %v2886, %v3417
        %v3419 = vpop.f32.mrf.mxu0
        %v3420 = vpop.f32.mrf.mxu0
        %v3421 = vadd.f32 %v2889, %v3420
        %v3422 = vpop.f32.mrf.mxu0
        %3423 = vmatprep.mubr.bf16.mxu0 0
        %3424 = vmatmul.mubr.bf16.gmra.mxu0 %v3295
        %v3425 = vpop.f32.mrf.mxu0
        %v3426 = vadd.f32 %v2894, %v3425
        %v3427 = vpop.f32.mrf.mxu0
        %v3428 = vpop.f32.mrf.mxu0
        %v3429 = vadd.f32 %v2897, %v3428
        %v3430 = vpop.f32.mrf.mxu0
        %3431 = vmatprep.mubr.bf16.mxu0 0
        %3432 = vmatmul.mubr.bf16.gmra.mxu0 %v3298
        %v3433 = vpop.f32.mrf.mxu0
        %v3434 = vadd.f32 %v2902, %v3433
        %v3435 = vpop.f32.mrf.mxu0
        %v3436 = vpop.f32.mrf.mxu0
        %v3437 = vadd.f32 %v2905, %v3436
        %v3438 = vpop.f32.mrf.mxu0
        %3439 = vmatprep.mubr.bf16.mxu0 0
        %3440 = vmatmul.mubr.bf16.gmra.mxu0 %v3301
        %v3441 = vpop.f32.mrf.mxu0
        %v3442 = vadd.f32 %v2910, %v3441
        %v3443 = vpop.f32.mrf.mxu0
        %v3444 = vpop.f32.mrf.mxu0
        %v3445 = vadd.f32 %v2913, %v3444
        %v3446 = vpop.f32.mrf.mxu0
        %3447 = vmatprep.mubr.bf16.mxu0 0
        %3448 = vmatmul.mubr.bf16.gmra.mxu0 %v3304
        %v3449 = vpop.f32.mrf.mxu0
        %v3450 = vadd.f32 %v2918, %v3449
        %v3451 = vpop.f32.mrf.mxu0
        %v3452 = vpop.f32.mrf.mxu0
        %v3453 = vadd.f32 %v2921, %v3452
        %v3454 = vpop.f32.mrf.mxu0
        %3455 = vmatprep.mubr.bf16.mxu0 0
        %3456 = vmatmul.mubr.bf16.gmra.mxu0 %v3307
        %v3457 = vpop.f32.mrf.mxu0
        %v3458 = vadd.f32 %v2926, %v3457
        %v3459 = vpop.f32.mrf.mxu0
        %v3460 = vpop.f32.mrf.mxu0
        %v3461 = vadd.f32 %v2929, %v3460
        %v3462 = vpop.f32.mrf.mxu0
        %3463 = vmatprep.mubr.bf16.mxu0 0
        %3464 = vmatmul.mubr.bf16.gmra.mxu0 %v3310
        %v3465 = vpop.f32.mrf.mxu0
        %v3466 = vadd.f32 %v2934, %v3465
        %v3467 = vpop.f32.mrf.mxu0
        %v3468 = vpop.f32.mrf.mxu0
        %v3469 = vadd.f32 %v2937, %v3468
        %v3470 = vpop.f32.mrf.mxu0
        %3471 = vmatprep.mubr.bf16.mxu0 0
        %3472 = vmatmul.mubr.bf16.gmra.mxu0 %v3313
        %v3473 = vpop.f32.mrf.mxu0
        %v3474 = vadd.f32 %v2942, %v3473
        %v3475 = vpop.f32.mrf.mxu0
        %v3476 = vpop.f32.mrf.mxu0
        %v3477 = vadd.f32 %v2945, %v3476
        %v3478 = vpop.f32.mrf.mxu0
        %3479 = vmatprep.mubr.bf16.mxu0 0
        %3480 = vmatmul.mubr.bf16.gmra.mxu0 %v3316
        %v3481 = vpop.f32.mrf.mxu0
        %v3482 = vadd.f32 %v2950, %v3481
        %v3483 = vpop.f32.mrf.mxu0
        %v3484 = vpop.f32.mrf.mxu0
        %v3485 = vadd.f32 %v2953, %v3484
        %v3486 = vpop.f32.mrf.mxu0
        %3487 = vmatprep.mubr.bf16.mxu0 0
        %3488 = vmatmul.mubr.bf16.gmra.mxu0 %v3319
        %v3489 = vpop.f32.mrf.mxu0
        %v3490 = vadd.f32 %v2958, %v3489
        %v3491 = vpop.f32.mrf.mxu0
        %v3492 = vpop.f32.mrf.mxu0
        %v3493 = vadd.f32 %v2961, %v3492
        %v3494 = vpop.f32.mrf.mxu0
        %3495 = vmatprep.mubr.bf16.mxu0 0
        %3496 = vmatmul.mubr.bf16.gmra.mxu0 %v3322
        %v3497 = vpop.f32.mrf.mxu0
        %v3498 = vadd.f32 %v2966, %v3497
        %v3499 = vpop.f32.mrf.mxu0
        %v3500 = vpop.f32.mrf.mxu0
        %v3501 = vadd.f32 %v2969, %v3500
        %v3502 = vpop.f32.mrf.mxu0
        %3503 = vmatprep.mubr.bf16.mxu0 0
        %3504 = vmatmul.mubr.bf16.gmra.mxu0 %v3325
        %v3505 = vpop.f32.mrf.mxu0
        %v3506 = vadd.f32 %v2974, %v3505
        %v3507 = vpop.f32.mrf.mxu0
        %v3508 = vpop.f32.mrf.mxu0
        %v3509 = vadd.f32 %v2977, %v3508
        %v3510 = vpop.f32.mrf.mxu0
        %3511 = vmatprep.mubr.bf16.mxu0 0
        %3512 = vmatmul.mubr.bf16.gmra.mxu0 %v3328
        %v3513 = vpop.f32.mrf.mxu0
        %v3514 = vadd.f32 %v2982, %v3513
        %v3515 = vpop.f32.mrf.mxu0
        %v3516 = vpop.f32.mrf.mxu0
        %v3517 = vadd.f32 %v2985, %v3516
        %v3518 = vpop.f32.mrf.mxu0
        %3519 = vmatprep.mubr.bf16.mxu0 0
        %3520 = vmatmul.mubr.bf16.gmra.mxu0 %v3331
        %v3521 = vpop.f32.mrf.mxu0
        %v3522 = vadd.f32 %v2990, %v3521
        %v3523 = vpop.f32.mrf.mxu0
        %v3524 = vpop.f32.mrf.mxu0
        %v3525 = vadd.f32 %v2993, %v3524
        %v3526 = vpop.f32.mrf.mxu0
        %3527 = vmatprep.mubr.bf16.mxu0 0
        %3528 = vmatmul.mubr.bf16.gmra.mxu0 %v3334
        %v3529 = vpop.f32.mrf.mxu0
        %v3530 = vadd.f32 %v2998, %v3529
        %v3531 = vpop.f32.mrf.mxu0
        %v3532 = vpop.f32.mrf.mxu0
        %v3533 = vadd.f32 %v3001, %v3532
        %v3534 = vpop.f32.mrf.mxu0
        %3535 = vmatprep.mubr.bf16.mxu0 0
        %3536 = vmatmul.mubr.bf16.gmra.mxu0 %v3337
        %v3537 = vpop.f32.mrf.mxu0
        %v3538 = vadd.f32 %v3006, %v3537
        %v3539 = vpop.f32.mrf.mxu0
        %v3540 = vpop.f32.mrf.mxu0
        %v3541 = vadd.f32 %v3009, %v3540
        %v3542 = vpop.f32.mrf.mxu0
        %3543 = vmatprep.mubr.bf16.mxu0 0
        %3544 = vmatmul.mubr.bf16.gmra.mxu0 %v3340
        %v3545 = vpop.f32.mrf.mxu0
        %v3546 = vadd.f32 %v3014, %v3545
        %v3547 = vpop.f32.mrf.mxu0
        %v3548 = vpop.f32.mrf.mxu0
        %v3549 = vadd.f32 %v3017, %v3548
        %v3550 = vpop.f32.mrf.mxu0
        %3551 = vmatprep.mubr.bf16.mxu0 0
        %3552 = vmatmul.mubr.bf16.gmra.mxu0 %v3343
        %v3553 = vpop.f32.mrf.mxu0
        %v3554 = vadd.f32 %v3022, %v3553
        %v3555 = vpop.f32.mrf.mxu0
        %v3556 = vpop.f32.mrf.mxu0
        %v3557 = vadd.f32 %v3025, %v3556
        %v3558 = vpop.f32.mrf.mxu0
        %3559 = vmatprep.mubr.bf16.mxu0 0
        %3560 = vmatmul.mubr.bf16.gmra.mxu0 %v3346
        %v3561 = vpop.f32.mrf.mxu0
        %v3562 = vadd.f32 %v3030, %v3561
        %v3563 = vpop.f32.mrf.mxu0
        %v3564 = vpop.f32.mrf.mxu0
        %v3565 = vadd.f32 %v3033, %v3564
        %v3566 = vpop.f32.mrf.mxu0
        %3567 = vmatprep.mubr.bf16.mxu0 0
        %3568 = vmatmul.mubr.bf16.gmra.mxu0 %v3349
        %v3569 = vpop.f32.mrf.mxu0
        %v3570 = vadd.f32 %v3038, %v3569
        %v3571 = vpop.f32.mrf.mxu0
        %v3572 = vpop.f32.mrf.mxu0
        %v3573 = vadd.f32 %v3041, %v3572
        %v3574 = vpop.f32.mrf.mxu0
        %3575 = vdwg.mxu0
        %v3576 = vld [vmem:[#allocation2 + $0x18] sm:$0x8]
        %v3577 = vld [vmem:[#allocation2 + $0x1c] sm:$0xf]
        %v3578 = vld [vmem:[#allocation2 + $0x20] sm:$0xf]
        %v3579 = vld [vmem:[#allocation2 + $0x24] sm:$0xf]
        %v3580 = vld [vmem:[#allocation2 + $0x28] sm:$0xf]
        %v3581 = vld [vmem:[#allocation2 + $0x2c] sm:$0xf]
        %v3582 = vld [vmem:[#allocation2 + $0x30] sm:$0xf]
        %v3583 = vld [vmem:[#allocation2 + $0x34] sm:$0xf]
        %v3584 = vld [vmem:[#allocation2 + $0x38] sm:$0xf]
        %v3585 = vld [vmem:[#allocation2 + $0x3c] sm:$0xf]
        %v3586 = vld [vmem:[#allocation2 + $0x40] sm:$0xf]
        %v3587 = vld [vmem:[#allocation2 + $0x44] sm:$0xf]
        %v3588 = vld [vmem:[#allocation2 + $0x48] sm:$0xf]
        %v3589 = vld [vmem:[#allocation2 + $0x4c] sm:$0xf]
        %v3590 = vld [vmem:[#allocation2 + $0x50] sm:$0xf]
        %v3591 = vld [vmem:[#allocation2 + $0x54] sm:$0xf]
        %v3592 = vld [vmem:[#allocation2 + $0x58] sm:$0xf]
        %v3593 = vld [vmem:[#allocation2 + $0x5c] sm:$0xf]
        %v3594 = vld [vmem:[#allocation2 + $0x60] sm:$0xf]
        %v3595 = vld [vmem:[#allocation2 + $0x64] sm:$0xf]
        %v3596 = vld [vmem:[#allocation2 + $0x68] sm:$0xf]
        %v3597 = vld [vmem:[#allocation2 + $0x6c] sm:$0xf]
        %v3598 = vld [vmem:[#allocation2 + $0x70] sm:$0xf]
        %v3599 = vld [vmem:[#allocation2 + $0x74] sm:$0xf]
        %v3600 = vld [vmem:[#allocation2 + $0x78] sm:$0xf]
        %v3601 = vld [vmem:[#allocation2 + $0x7c] sm:$0xf]
        %v3602 = vld [vmem:[#allocation2 + $0x80] sm:$0xf]
        %v3603 = vld [vmem:[#allocation2 + $0x84] sm:$0xf]
        %v3604 = vld [vmem:[#allocation2 + $0x88] sm:$0xf]
        %v3605 = vld [vmem:[#allocation2 + $0x8c] sm:$0xf]
        %v3606 = vld [vmem:[#allocation2 + $0x90] sm:$0xf]
        %v3607 = vld [vmem:[#allocation2 + $0x94] sm:$0xf]
        %v3608 = vld [vmem:[#allocation2 + $0x98] sm:$0xf]
        %v3609 = vld [vmem:[#allocation2 + $0x9c] sm:$0xf]
        %v3610 = vld [vmem:[#allocation2 + $0xa0] sm:$0xf]
        %v3611 = vld [vmem:[#allocation2 + $0xa4] sm:$0xf]
        %v3612 = vld [vmem:[#allocation2 + $0xa8] sm:$0xf]
        %v3613 = vld [vmem:[#allocation2 + $0xac] sm:$0xf]
        %v3614 = vld [vmem:[#allocation2 + $0xb0] sm:$0xf]
        %v3615 = vld [vmem:[#allocation2 + $0xb4] sm:$0xf]
        %v3616 = vld [vmem:[#allocation2 + $0xb8] sm:$0xf]
        %v3617 = vld [vmem:[#allocation2 + $0xbc] sm:$0xf]
        %v3618 = vld [vmem:[#allocation2 + $0xc0] sm:$0xf]
        %v3619 = vld [vmem:[#allocation2 + $0xc4] sm:$0xf]
        %v3620 = vld [vmem:[#allocation2 + $0xc8] sm:$0xf]
        %v3621 = vld [vmem:[#allocation2 + $0xcc] sm:$0xf]
        %v3622 = vld [vmem:[#allocation2 + $0xd0] sm:$0xf]
        %v3623 = vld [vmem:[#allocation2 + $0xd4] sm:$0xf]
        %v3624 = vld [vmem:[#allocation2 + $0xd8] sm:$0xf]
        %v3625 = vld [vmem:[#allocation2 + $0xdc] sm:$0x1]
        %v3675 = vunpack.c.l.b16 %v3576
        %v3676 = vunpack.c.l.b16 %v3577
        %v3677 = vunpack.c.l.b16 %v3578
        %v3678 = vunpack.c.l.b16 %v3579
        %v3679 = vunpack.c.l.b16 %v3580
        %v3680 = vunpack.c.l.b16 %v3581
        %v3681 = vunpack.c.l.b16 %v3582
        %v3682 = vunpack.c.l.b16 %v3583
        %v3683 = vunpack.c.l.b16 %v3584
        %v3684 = vunpack.c.l.b16 %v3585
        %v3685 = vunpack.c.l.b16 %v3586
        %v3686 = vunpack.c.l.b16 %v3587
        %v3687 = vunpack.c.l.b16 %v3588
        %v3688 = vunpack.c.l.b16 %v3589
        %v3689 = vunpack.c.l.b16 %v3590
        %v3690 = vunpack.c.l.b16 %v3591
        %v3691 = vunpack.c.l.b16 %v3592
        %v3692 = vunpack.c.l.b16 %v3593
        %v3693 = vunpack.c.l.b16 %v3594
        %v3694 = vunpack.c.l.b16 %v3595
        %v3695 = vunpack.c.l.b16 %v3596
        %v3696 = vunpack.c.l.b16 %v3597
        %v3697 = vunpack.c.l.b16 %v3598
        %v3698 = vunpack.c.l.b16 %v3599
        %v3699 = vunpack.c.l.b16 %v3600
        %v3700 = vunpack.c.l.b16 %v3601
        %v3701 = vunpack.c.l.b16 %v3602
        %v3702 = vunpack.c.l.b16 %v3603
        %v3703 = vunpack.c.l.b16 %v3604
        %v3704 = vunpack.c.l.b16 %v3605
        %v3705 = vunpack.c.l.b16 %v3606
        %v3706 = vunpack.c.l.b16 %v3607
        %v3707 = vunpack.c.l.b16 %v3608
        %v3708 = vunpack.c.l.b16 %v3609
        %v3709 = vunpack.c.l.b16 %v3610
        %v3710 = vunpack.c.l.b16 %v3611
        %v3711 = vunpack.c.l.b16 %v3612
        %v3712 = vunpack.c.l.b16 %v3613
        %v3713 = vunpack.c.l.b16 %v3614
        %v3714 = vunpack.c.l.b16 %v3615
        %v3715 = vunpack.c.l.b16 %v3616
        %v3716 = vunpack.c.l.b16 %v3617
        %v3717 = vunpack.c.l.b16 %v3618
        %v3718 = vunpack.c.l.b16 %v3619
        %v3719 = vunpack.c.l.b16 %v3620
        %v3720 = vunpack.c.l.b16 %v3621
        %v3721 = vunpack.c.l.b16 %v3622
        %v3722 = vunpack.c.l.b16 %v3623
        %v3723 = vunpack.c.l.b16 %v3624
        %v3724 = vpack.c.b16 %v3676, %v3675
        %v3725 = vpack.c.b16 %v3678, %v3677
        %v3726 = vpack.c.b16 %v3680, %v3679
        %v3727 = vpack.c.b16 %v3682, %v3681
        %v3728 = vpack.c.b16 %v3684, %v3683
        %v3729 = vpack.c.b16 %v3686, %v3685
        %v3730 = vpack.c.b16 %v3688, %v3687
        %v3731 = vpack.c.b16 %v3690, %v3689
        %v3732 = vpack.c.b16 %v3692, %v3691
        %v3733 = vpack.c.b16 %v3694, %v3693
        %v3734 = vpack.c.b16 %v3696, %v3695
        %v3735 = vpack.c.b16 %v3698, %v3697
        %v3736 = vpack.c.b16 %v3700, %v3699
        %v3737 = vpack.c.b16 %v3702, %v3701
        %v3738 = vpack.c.b16 %v3704, %v3703
        %v3739 = vpack.c.b16 %v3706, %v3705
        %v3740 = vpack.c.b16 %v3708, %v3707
        %v3741 = vpack.c.b16 %v3710, %v3709
        %v3742 = vpack.c.b16 %v3712, %v3711
        %v3743 = vpack.c.b16 %v3714, %v3713
        %v3744 = vpack.c.b16 %v3716, %v3715
        %v3745 = vpack.c.b16 %v3718, %v3717
        %v3746 = vpack.c.b16 %v3720, %v3719
        %v3747 = vpack.c.b16 %v3722, %v3721
        %v3748 = vpack.c.b16 %v3723, %v3723
        %v3749 = vpack.c.b16 %v3677, %v3676
        %v3750 = vpack.c.b16 %v3679, %v3678
        %v3751 = vpack.c.b16 %v3681, %v3680
        %v3752 = vpack.c.b16 %v3683, %v3682
        %v3753 = vpack.c.b16 %v3685, %v3684
        %v3754 = vpack.c.b16 %v3687, %v3686
        %v3755 = vpack.c.b16 %v3689, %v3688
        %v3756 = vpack.c.b16 %v3691, %v3690
        %v3757 = vpack.c.b16 %v3693, %v3692
        %v3758 = vpack.c.b16 %v3695, %v3694
        %v3759 = vpack.c.b16 %v3697, %v3696
        %v3760 = vpack.c.b16 %v3699, %v3698
        %v3761 = vpack.c.b16 %v3701, %v3700
        %v3762 = vpack.c.b16 %v3703, %v3702
        %v3763 = vpack.c.b16 %v3705, %v3704
        %v3764 = vpack.c.b16 %v3707, %v3706
        %v3765 = vpack.c.b16 %v3709, %v3708
        %v3766 = vpack.c.b16 %v3711, %v3710
        %v3767 = vpack.c.b16 %v3713, %v3712
        %v3768 = vpack.c.b16 %v3715, %v3714
        %v3769 = vpack.c.b16 %v3717, %v3716
        %v3770 = vpack.c.b16 %v3719, %v3718
        %v3771 = vpack.c.b16 %v3721, %v3720
        %v3772 = vpack.c.b16 %v3723, %v3722
        %v3774 = vshrl.u32 %v3749, 16
        %v3776 = vrot.slane %v3774, 4
        %v3777 = vshll.u32 %v3749, 16
        %v3779 = vrot.slane %v3777, 5
        %v3780 = vor.u32 %v3776, %v3779
        %v3782 = vshrl.u32 %v3750, 16
        %v3784 = vrot.slane %v3782, 4
        %v3785 = vshll.u32 %v3750, 16
        %v3787 = vrot.slane %v3785, 5
        %v3788 = vor.u32 %v3784, %v3787
        %v3789 = vsel %vm1523, %v3780, %v3788
        %v3791 = vshrl.u32 %v3751, 16
        %v3793 = vrot.slane %v3791, 4
        %v3794 = vshll.u32 %v3751, 16
        %v3796 = vrot.slane %v3794, 5
        %v3797 = vor.u32 %v3793, %v3796
        %v3798 = vsel %vm1523, %v3788, %v3797
        %v3800 = vshrl.u32 %v3752, 16
        %v3802 = vrot.slane %v3800, 4
        %v3803 = vshll.u32 %v3752, 16
        %v3805 = vrot.slane %v3803, 5
        %v3806 = vor.u32 %v3802, %v3805
        %v3807 = vsel %vm1523, %v3797, %v3806
        %v3809 = vshrl.u32 %v3753, 16
        %v3811 = vrot.slane %v3809, 4
        %v3812 = vshll.u32 %v3753, 16
        %v3814 = vrot.slane %v3812, 5
        %v3815 = vor.u32 %v3811, %v3814
        %v3816 = vsel %vm1523, %v3806, %v3815
        %v3818 = vshrl.u32 %v3754, 16
        %v3820 = vrot.slane %v3818, 4
        %v3821 = vshll.u32 %v3754, 16
        %v3823 = vrot.slane %v3821, 5
        %v3824 = vor.u32 %v3820, %v3823
        %v3825 = vsel %vm1523, %v3815, %v3824
        %v3827 = vshrl.u32 %v3755, 16
        %v3829 = vrot.slane %v3827, 4
        %v3830 = vshll.u32 %v3755, 16
        %v3832 = vrot.slane %v3830, 5
        %v3833 = vor.u32 %v3829, %v3832
        %v3834 = vsel %vm1523, %v3824, %v3833
        %v3836 = vshrl.u32 %v3756, 16
        %v3838 = vrot.slane %v3836, 4
        %v3839 = vshll.u32 %v3756, 16
        %v3841 = vrot.slane %v3839, 5
        %v3842 = vor.u32 %v3838, %v3841
        %v3843 = vsel %vm1523, %v3833, %v3842
        %v3845 = vshrl.u32 %v3757, 16
        %v3847 = vrot.slane %v3845, 4
        %v3848 = vshll.u32 %v3757, 16
        %v3850 = vrot.slane %v3848, 5
        %v3851 = vor.u32 %v3847, %v3850
        %v3852 = vsel %vm1523, %v3842, %v3851
        %v3854 = vshrl.u32 %v3758, 16
        %v3856 = vrot.slane %v3854, 4
        %v3857 = vshll.u32 %v3758, 16
        %v3859 = vrot.slane %v3857, 5
        %v3860 = vor.u32 %v3856, %v3859
        %v3861 = vsel %vm1523, %v3851, %v3860
        %v3863 = vshrl.u32 %v3759, 16
        %v3865 = vrot.slane %v3863, 4
        %v3866 = vshll.u32 %v3759, 16
        %v3868 = vrot.slane %v3866, 5
        %v3869 = vor.u32 %v3865, %v3868
        %v3870 = vsel %vm1523, %v3860, %v3869
        %v3872 = vshrl.u32 %v3760, 16
        %v3874 = vrot.slane %v3872, 4
        %v3875 = vshll.u32 %v3760, 16
        %v3877 = vrot.slane %v3875, 5
        %v3878 = vor.u32 %v3874, %v3877
        %v3879 = vsel %vm1523, %v3869, %v3878
        %v3881 = vshrl.u32 %v3761, 16
        %v3883 = vrot.slane %v3881, 4
        %v3884 = vshll.u32 %v3761, 16
        %v3886 = vrot.slane %v3884, 5
        %v3887 = vor.u32 %v3883, %v3886
        %v3888 = vsel %vm1523, %v3878, %v3887
        %v3890 = vshrl.u32 %v3762, 16
        %v3892 = vrot.slane %v3890, 4
        %v3893 = vshll.u32 %v3762, 16
        %v3895 = vrot.slane %v3893, 5
        %v3896 = vor.u32 %v3892, %v3895
        %v3897 = vsel %vm1523, %v3887, %v3896
        %v3899 = vshrl.u32 %v3763, 16
        %v3901 = vrot.slane %v3899, 4
        %v3902 = vshll.u32 %v3763, 16
        %v3904 = vrot.slane %v3902, 5
        %v3905 = vor.u32 %v3901, %v3904
        %v3906 = vsel %vm1523, %v3896, %v3905
        %v3908 = vshrl.u32 %v3764, 16
        %v3910 = vrot.slane %v3908, 4
        %v3911 = vshll.u32 %v3764, 16
        %v3913 = vrot.slane %v3911, 5
        %v3914 = vor.u32 %v3910, %v3913
        %v3915 = vsel %vm1523, %v3905, %v3914
        %v3917 = vshrl.u32 %v3765, 16
        %v3919 = vrot.slane %v3917, 4
        %v3920 = vshll.u32 %v3765, 16
        %v3922 = vrot.slane %v3920, 5
        %v3923 = vor.u32 %v3919, %v3922
        %v3924 = vsel %vm1523, %v3914, %v3923
        %v3926 = vshrl.u32 %v3766, 16
        %v3928 = vrot.slane %v3926, 4
        %v3929 = vshll.u32 %v3766, 16
        %v3931 = vrot.slane %v3929, 5
        %v3932 = vor.u32 %v3928, %v3931
        %v3933 = vsel %vm1523, %v3923, %v3932
        %v3935 = vshrl.u32 %v3767, 16
        %v3937 = vrot.slane %v3935, 4
        %v3938 = vshll.u32 %v3767, 16
        %v3940 = vrot.slane %v3938, 5
        %v3941 = vor.u32 %v3937, %v3940
        %v3942 = vsel %vm1523, %v3932, %v3941
        %v3944 = vshrl.u32 %v3768, 16
        %v3946 = vrot.slane %v3944, 4
        %v3947 = vshll.u32 %v3768, 16
        %v3949 = vrot.slane %v3947, 5
        %v3950 = vor.u32 %v3946, %v3949
        %v3951 = vsel %vm1523, %v3941, %v3950
        %v3953 = vshrl.u32 %v3769, 16
        %v3955 = vrot.slane %v3953, 4
        %v3956 = vshll.u32 %v3769, 16
        %v3958 = vrot.slane %v3956, 5
        %v3959 = vor.u32 %v3955, %v3958
        %v3960 = vsel %vm1523, %v3950, %v3959
        %v3962 = vshrl.u32 %v3770, 16
        %v3964 = vrot.slane %v3962, 4
        %v3965 = vshll.u32 %v3770, 16
        %v3967 = vrot.slane %v3965, 5
        %v3968 = vor.u32 %v3964, %v3967
        %v3969 = vsel %vm1523, %v3959, %v3968
        %v3971 = vshrl.u32 %v3771, 16
        %v3973 = vrot.slane %v3971, 4
        %v3974 = vshll.u32 %v3771, 16
        %v3976 = vrot.slane %v3974, 5
        %v3977 = vor.u32 %v3973, %v3976
        %v3978 = vsel %vm1523, %v3968, %v3977
        %v3980 = vshrl.u32 %v3772, 16
        %v3982 = vrot.slane %v3980, 4
        %v3983 = vshll.u32 %v3772, 16
        %v3985 = vrot.slane %v3983, 5
        %v3986 = vor.u32 %v3982, %v3985
        %v3987 = vsel %vm1523, %v3977, %v3986
        %3988 = vrot.lane.b32.xlu0 %v3780, 32
        %v3989 = vpop.permute.xlu0 %3988
        %3990 = vrot.lane.b32.xlu0 %v3789, 32
        %v3991 = vpop.permute.xlu0 %3990
        %3992 = vrot.lane.b32.xlu0 %v3798, 32
        %v3993 = vpop.permute.xlu0 %3992
        %3994 = vrot.lane.b32.xlu0 %v3807, 32
        %v3995 = vpop.permute.xlu0 %3994
        %3996 = vrot.lane.b32.xlu0 %v3816, 32
        %v3997 = vpop.permute.xlu0 %3996
        %3998 = vrot.lane.b32.xlu0 %v3825, 32
        %v3999 = vpop.permute.xlu0 %3998
        %4000 = vrot.lane.b32.xlu0 %v3834, 32
        %v4001 = vpop.permute.xlu0 %4000
        %4002 = vrot.lane.b32.xlu0 %v3843, 32
        %v4003 = vpop.permute.xlu0 %4002
        %4004 = vrot.lane.b32.xlu0 %v3852, 32
        %v4005 = vpop.permute.xlu0 %4004
        %4006 = vrot.lane.b32.xlu0 %v3861, 32
        %v4007 = vpop.permute.xlu0 %4006
        %4008 = vrot.lane.b32.xlu0 %v3870, 32
        %v4009 = vpop.permute.xlu0 %4008
        %4010 = vrot.lane.b32.xlu0 %v3879, 32
        %v4011 = vpop.permute.xlu0 %4010
        %4012 = vrot.lane.b32.xlu0 %v3888, 32
        %v4013 = vpop.permute.xlu0 %4012
        %4014 = vrot.lane.b32.xlu0 %v3897, 32
        %v4015 = vpop.permute.xlu0 %4014
        %4016 = vrot.lane.b32.xlu0 %v3906, 32
        %v4017 = vpop.permute.xlu0 %4016
        %4018 = vrot.lane.b32.xlu0 %v3915, 32
        %v4019 = vpop.permute.xlu0 %4018
        %4020 = vrot.lane.b32.xlu0 %v3924, 32
        %v4021 = vpop.permute.xlu0 %4020
        %4022 = vrot.lane.b32.xlu0 %v3933, 32
        %v4023 = vpop.permute.xlu0 %4022
        %4024 = vrot.lane.b32.xlu0 %v3942, 32
        %v4025 = vpop.permute.xlu0 %4024
        %4026 = vrot.lane.b32.xlu0 %v3951, 32
        %v4027 = vpop.permute.xlu0 %4026
        %4028 = vrot.lane.b32.xlu0 %v3960, 32
        %v4029 = vpop.permute.xlu0 %4028
        %4030 = vrot.lane.b32.xlu0 %v3969, 32
        %v4031 = vpop.permute.xlu0 %4030
        %4032 = vrot.lane.b32.xlu0 %v3978, 32
        %v4033 = vpop.permute.xlu0 %4032
        %4034 = vrot.lane.b32.xlu0 %v3987, 32
        %v4035 = vpop.permute.xlu0 %4034
        %4036 = vrot.lane.b32.xlu0 %v3986, 32
        %v4037 = vpop.permute.xlu0 %4036
        %v4039 = vunpack.c.l.b16 %v3625
        %v4040 = vpack.c.b16 %v4039, %v4039
        %v4041 = vrot.slane %v3749, 5
        %v4042 = vrot.slane %v3750, 5
        %v4043 = vsel %vm1792, %v4041, %v4042
        %v4044 = vrot.slane %v3751, 5
        %v4045 = vsel %vm1792, %v4042, %v4044
        %v4046 = vrot.slane %v3752, 5
        %v4047 = vsel %vm1792, %v4044, %v4046
        %v4048 = vrot.slane %v3753, 5
        %v4049 = vsel %vm1792, %v4046, %v4048
        %v4050 = vrot.slane %v3754, 5
        %v4051 = vsel %vm1792, %v4048, %v4050
        %v4052 = vrot.slane %v3755, 5
        %v4053 = vsel %vm1792, %v4050, %v4052
        %v4054 = vrot.slane %v3756, 5
        %v4055 = vsel %vm1792, %v4052, %v4054
        %v4056 = vrot.slane %v3757, 5
        %v4057 = vsel %vm1792, %v4054, %v4056
        %v4058 = vrot.slane %v3758, 5
        %v4059 = vsel %vm1792, %v4056, %v4058
        %v4060 = vrot.slane %v3759, 5
        %v4061 = vsel %vm1792, %v4058, %v4060
        %v4062 = vrot.slane %v3760, 5
        %v4063 = vsel %vm1792, %v4060, %v4062
        %v4064 = vrot.slane %v3761, 5
        %v4065 = vsel %vm1792, %v4062, %v4064
        %v4066 = vrot.slane %v3762, 5
        %v4067 = vsel %vm1792, %v4064, %v4066
        %v4068 = vrot.slane %v3763, 5
        %v4069 = vsel %vm1792, %v4066, %v4068
        %v4070 = vrot.slane %v3764, 5
        %v4071 = vsel %vm1792, %v4068, %v4070
        %v4072 = vrot.slane %v3765, 5
        %v4073 = vsel %vm1792, %v4070, %v4072
        %v4074 = vrot.slane %v3766, 5
        %v4075 = vsel %vm1792, %v4072, %v4074
        %v4076 = vrot.slane %v3767, 5
        %v4077 = vsel %vm1792, %v4074, %v4076
        %v4078 = vrot.slane %v3768, 5
        %v4079 = vsel %vm1792, %v4076, %v4078
        %v4080 = vrot.slane %v3769, 5
        %v4081 = vsel %vm1792, %v4078, %v4080
        %v4082 = vrot.slane %v3770, 5
        %v4083 = vsel %vm1792, %v4080, %v4082
        %v4084 = vrot.slane %v3771, 5
        %v4085 = vsel %vm1792, %v4082, %v4084
        %v4086 = vrot.slane %v3772, 5
        %v4087 = vsel %vm1792, %v4084, %v4086
        %v4088 = vrot.slane %v4040, 5
        %v4089 = vsel %vm1792, %v4086, %v4088
        %4090 = vrot.lane.b32.xlu0 %v4041, 64
        %v4091 = vpop.permute.xlu0 %4090
        %4092 = vrot.lane.b32.xlu0 %v4043, 64
        %v4093 = vpop.permute.xlu0 %4092
        %4094 = vrot.lane.b32.xlu0 %v4045, 64
        %v4095 = vpop.permute.xlu0 %4094
        %4096 = vrot.lane.b32.xlu0 %v4047, 64
        %v4097 = vpop.permute.xlu0 %4096
        %4098 = vrot.lane.b32.xlu0 %v4049, 64
        %v4099 = vpop.permute.xlu0 %4098
        %4100 = vrot.lane.b32.xlu0 %v4051, 64
        %v4101 = vpop.permute.xlu0 %4100
        %4102 = vrot.lane.b32.xlu0 %v4053, 64
        %v4103 = vpop.permute.xlu0 %4102
        %4104 = vrot.lane.b32.xlu0 %v4055, 64
        %v4105 = vpop.permute.xlu0 %4104
        %4106 = vrot.lane.b32.xlu0 %v4057, 64
        %v4107 = vpop.permute.xlu0 %4106
        %4108 = vrot.lane.b32.xlu0 %v4059, 64
        %v4109 = vpop.permute.xlu0 %4108
        %4110 = vrot.lane.b32.xlu0 %v4061, 64
        %v4111 = vpop.permute.xlu0 %4110
        %4112 = vrot.lane.b32.xlu0 %v4063, 64
        %v4113 = vpop.permute.xlu0 %4112
        %4114 = vrot.lane.b32.xlu0 %v4065, 64
        %v4115 = vpop.permute.xlu0 %4114
        %4116 = vrot.lane.b32.xlu0 %v4067, 64
        %v4117 = vpop.permute.xlu0 %4116
        %4118 = vrot.lane.b32.xlu0 %v4069, 64
        %v4119 = vpop.permute.xlu0 %4118
        %4120 = vrot.lane.b32.xlu0 %v4071, 64
        %v4121 = vpop.permute.xlu0 %4120
        %4122 = vrot.lane.b32.xlu0 %v4073, 64
        %v4123 = vpop.permute.xlu0 %4122
        %4124 = vrot.lane.b32.xlu0 %v4075, 64
        %v4125 = vpop.permute.xlu0 %4124
        %4126 = vrot.lane.b32.xlu0 %v4077, 64
        %v4127 = vpop.permute.xlu0 %4126
        %4128 = vrot.lane.b32.xlu0 %v4079, 64
        %v4129 = vpop.permute.xlu0 %4128
        %4130 = vrot.lane.b32.xlu0 %v4081, 64
        %v4131 = vpop.permute.xlu0 %4130
        %4132 = vrot.lane.b32.xlu0 %v4083, 64
        %v4133 = vpop.permute.xlu0 %4132
        %4134 = vrot.lane.b32.xlu0 %v4085, 64
        %v4135 = vpop.permute.xlu0 %4134
        %4136 = vrot.lane.b32.xlu0 %v4087, 64
        %v4137 = vpop.permute.xlu0 %4136
        %4138 = vrot.lane.b32.xlu0 %v4089, 64
        %v4139 = vpop.permute.xlu0 %4138
        %v4142 = vsel %vm1892, %v3724, %v3989
        %v4145 = vsel %vm1892, %v3725, %v3991
        %v4148 = vsel %vm1892, %v3726, %v3993
        %v4151 = vsel %vm1892, %v3727, %v3995
        %v4154 = vsel %vm1892, %v3728, %v3997
        %v4157 = vsel %vm1892, %v3729, %v3999
        %v4160 = vsel %vm1892, %v3730, %v4001
        %v4163 = vsel %vm1892, %v3731, %v4003
        %v4166 = vsel %vm1892, %v3732, %v4005
        %v4169 = vsel %vm1892, %v3733, %v4007
        %v4172 = vsel %vm1892, %v3734, %v4009
        %v4175 = vsel %vm1892, %v3735, %v4011
        %v4178 = vsel %vm1892, %v3736, %v4013
        %v4181 = vsel %vm1892, %v3737, %v4015
        %v4184 = vsel %vm1892, %v3738, %v4017
        %v4187 = vsel %vm1892, %v3739, %v4019
        %v4190 = vsel %vm1892, %v3740, %v4021
        %v4193 = vsel %vm1892, %v3741, %v4023
        %v4196 = vsel %vm1892, %v3742, %v4025
        %v4199 = vsel %vm1892, %v3743, %v4027
        %v4202 = vsel %vm1892, %v3744, %v4029
        %v4205 = vsel %vm1892, %v3745, %v4031
        %v4208 = vsel %vm1892, %v3746, %v4033
        %v4211 = vsel %vm1892, %v3747, %v4035
        %v4214 = vsel %vm1892, %v3748, %v4037
        %v4216 = vsel %vm1968, %v4142, %v4091
        %v4218 = vsel %vm1968, %v4145, %v4093
        %v4220 = vsel %vm1968, %v4148, %v4095
        %v4222 = vsel %vm1968, %v4151, %v4097
        %v4224 = vsel %vm1968, %v4154, %v4099
        %v4226 = vsel %vm1968, %v4157, %v4101
        %v4228 = vsel %vm1968, %v4160, %v4103
        %v4230 = vsel %vm1968, %v4163, %v4105
        %v4232 = vsel %vm1968, %v4166, %v4107
        %v4234 = vsel %vm1968, %v4169, %v4109
        %v4236 = vsel %vm1968, %v4172, %v4111
        %v4238 = vsel %vm1968, %v4175, %v4113
        %v4240 = vsel %vm1968, %v4178, %v4115
        %v4242 = vsel %vm1968, %v4181, %v4117
        %v4244 = vsel %vm1968, %v4184, %v4119
        %v4246 = vsel %vm1968, %v4187, %v4121
        %v4248 = vsel %vm1968, %v4190, %v4123
        %v4250 = vsel %vm1968, %v4193, %v4125
        %v4252 = vsel %vm1968, %v4196, %v4127
        %v4254 = vsel %vm1968, %v4199, %v4129
        %v4256 = vsel %vm1968, %v4202, %v4131
        %v4258 = vsel %vm1968, %v4205, %v4133
        %v4260 = vsel %vm1968, %v4208, %v4135
        %v4262 = vsel %vm1968, %v4211, %v4137
        %v4264 = vsel %vm1968, %v4214, %v4139
        %s4265 = scalar_lea.vmem %s4, 96
        %v4266 = vld [vmem:[%s4265] sm:$0xf]
        %v4267 = vld [vmem:[%s4265 + $0x4] sm:$0xf]
        %v4268 = vld [vmem:[%s4265 + $0x8] sm:$0xf]
        %v4269 = vld [vmem:[%s4265 + $0xc] sm:$0xf]
        %v4270 = vld [vmem:[%s4265 + $0x10] sm:$0xf]
        %v4271 = vld [vmem:[%s4265 + $0x14] sm:$0xf]
        %v4272 = vld [vmem:[%s4265 + $0x18] sm:$0xf]
        %v4273 = vld [vmem:[%s4265 + $0x1c] sm:$0xf]
        %v4274 = vld [vmem:[%s4265 + $0x20] sm:$0xf]
        %v4275 = vld [vmem:[%s4265 + $0x24] sm:$0xf]
        %v4276 = vld [vmem:[%s4265 + $0x28] sm:$0xf]
        %v4277 = vld [vmem:[%s4265 + $0x2c] sm:$0xf]
        %v4278 = vshrl.u32 %v4216, 16
        %v4280 = vrot.slane %v4278, 3
        %v4281 = vshll.u32 %v4216, 16
        %v4283 = vrot.slane %v4281, 4
        %v4284 = vor.u32 %v4280, %v4283
        %v4285 = vshrl.u32 %v4218, 16
        %v4287 = vrot.slane %v4285, 3
        %v4288 = vshll.u32 %v4218, 16
        %v4290 = vrot.slane %v4288, 4
        %v4291 = vor.u32 %v4287, %v4290
        %v4292 = vsel %vm2510, %v4284, %v4291
        %v4293 = vshrl.u32 %v4220, 16
        %v4295 = vrot.slane %v4293, 3
        %v4296 = vshll.u32 %v4220, 16
        %v4298 = vrot.slane %v4296, 4
        %v4299 = vor.u32 %v4295, %v4298
        %v4300 = vsel %vm2510, %v4291, %v4299
        %v4301 = vshrl.u32 %v4222, 16
        %v4303 = vrot.slane %v4301, 3
        %v4304 = vshll.u32 %v4222, 16
        %v4306 = vrot.slane %v4304, 4
        %v4307 = vor.u32 %v4303, %v4306
        %v4308 = vsel %vm2510, %v4299, %v4307
        %v4309 = vshrl.u32 %v4224, 16
        %v4311 = vrot.slane %v4309, 3
        %v4312 = vshll.u32 %v4224, 16
        %v4314 = vrot.slane %v4312, 4
        %v4315 = vor.u32 %v4311, %v4314
        %v4316 = vsel %vm2510, %v4307, %v4315
        %v4317 = vshrl.u32 %v4226, 16
        %v4319 = vrot.slane %v4317, 3
        %v4320 = vshll.u32 %v4226, 16
        %v4322 = vrot.slane %v4320, 4
        %v4323 = vor.u32 %v4319, %v4322
        %v4324 = vsel %vm2510, %v4315, %v4323
        %v4325 = vshrl.u32 %v4228, 16
        %v4327 = vrot.slane %v4325, 3
        %v4328 = vshll.u32 %v4228, 16
        %v4330 = vrot.slane %v4328, 4
        %v4331 = vor.u32 %v4327, %v4330
        %v4332 = vsel %vm2510, %v4323, %v4331
        %v4333 = vshrl.u32 %v4230, 16
        %v4335 = vrot.slane %v4333, 3
        %v4336 = vshll.u32 %v4230, 16
        %v4338 = vrot.slane %v4336, 4
        %v4339 = vor.u32 %v4335, %v4338
        %v4340 = vsel %vm2510, %v4331, %v4339
        %v4341 = vshrl.u32 %v4232, 16
        %v4343 = vrot.slane %v4341, 3
        %v4344 = vshll.u32 %v4232, 16
        %v4346 = vrot.slane %v4344, 4
        %v4347 = vor.u32 %v4343, %v4346
        %v4348 = vsel %vm2510, %v4339, %v4347
        %v4349 = vshrl.u32 %v4234, 16
        %v4351 = vrot.slane %v4349, 3
        %v4352 = vshll.u32 %v4234, 16
        %v4354 = vrot.slane %v4352, 4
        %v4355 = vor.u32 %v4351, %v4354
        %v4356 = vsel %vm2510, %v4347, %v4355
        %v4357 = vshrl.u32 %v4236, 16
        %v4359 = vrot.slane %v4357, 3
        %v4360 = vshll.u32 %v4236, 16
        %v4362 = vrot.slane %v4360, 4
        %v4363 = vor.u32 %v4359, %v4362
        %v4364 = vsel %vm2510, %v4355, %v4363
        %v4365 = vshrl.u32 %v4238, 16
        %v4367 = vrot.slane %v4365, 3
        %v4368 = vshll.u32 %v4238, 16
        %v4370 = vrot.slane %v4368, 4
        %v4371 = vor.u32 %v4367, %v4370
        %v4372 = vsel %vm2510, %v4363, %v4371
        %v4373 = vshrl.u32 %v4240, 16
        %v4375 = vrot.slane %v4373, 3
        %v4376 = vshll.u32 %v4240, 16
        %v4378 = vrot.slane %v4376, 4
        %v4379 = vor.u32 %v4375, %v4378
        %v4380 = vsel %vm2510, %v4371, %v4379
        %v4381 = vshrl.u32 %v4242, 16
        %v4383 = vrot.slane %v4381, 3
        %v4384 = vshll.u32 %v4242, 16
        %v4386 = vrot.slane %v4384, 4
        %v4387 = vor.u32 %v4383, %v4386
        %v4388 = vsel %vm2510, %v4379, %v4387
        %v4389 = vshrl.u32 %v4244, 16
        %v4391 = vrot.slane %v4389, 3
        %v4392 = vshll.u32 %v4244, 16
        %v4394 = vrot.slane %v4392, 4
        %v4395 = vor.u32 %v4391, %v4394
        %v4396 = vsel %vm2510, %v4387, %v4395
        %v4397 = vshrl.u32 %v4246, 16
        %v4399 = vrot.slane %v4397, 3
        %v4400 = vshll.u32 %v4246, 16
        %v4402 = vrot.slane %v4400, 4
        %v4403 = vor.u32 %v4399, %v4402
        %v4404 = vsel %vm2510, %v4395, %v4403
        %v4405 = vshrl.u32 %v4248, 16
        %v4407 = vrot.slane %v4405, 3
        %v4408 = vshll.u32 %v4248, 16
        %v4410 = vrot.slane %v4408, 4
        %v4411 = vor.u32 %v4407, %v4410
        %v4412 = vsel %vm2510, %v4403, %v4411
        %v4413 = vshrl.u32 %v4250, 16
        %v4415 = vrot.slane %v4413, 3
        %v4416 = vshll.u32 %v4250, 16
        %v4418 = vrot.slane %v4416, 4
        %v4419 = vor.u32 %v4415, %v4418
        %v4420 = vsel %vm2510, %v4411, %v4419
        %v4421 = vshrl.u32 %v4252, 16
        %v4423 = vrot.slane %v4421, 3
        %v4424 = vshll.u32 %v4252, 16
        %v4426 = vrot.slane %v4424, 4
        %v4427 = vor.u32 %v4423, %v4426
        %v4428 = vsel %vm2510, %v4419, %v4427
        %v4429 = vshrl.u32 %v4254, 16
        %v4431 = vrot.slane %v4429, 3
        %v4432 = vshll.u32 %v4254, 16
        %v4434 = vrot.slane %v4432, 4
        %v4435 = vor.u32 %v4431, %v4434
        %v4436 = vsel %vm2510, %v4427, %v4435
        %v4437 = vshrl.u32 %v4256, 16
        %v4439 = vrot.slane %v4437, 3
        %v4440 = vshll.u32 %v4256, 16
        %v4442 = vrot.slane %v4440, 4
        %v4443 = vor.u32 %v4439, %v4442
        %v4444 = vsel %vm2510, %v4435, %v4443
        %v4445 = vshrl.u32 %v4258, 16
        %v4447 = vrot.slane %v4445, 3
        %v4448 = vshll.u32 %v4258, 16
        %v4450 = vrot.slane %v4448, 4
        %v4451 = vor.u32 %v4447, %v4450
        %v4452 = vsel %vm2510, %v4443, %v4451
        %v4453 = vshrl.u32 %v4260, 16
        %v4455 = vrot.slane %v4453, 3
        %v4456 = vshll.u32 %v4260, 16
        %v4458 = vrot.slane %v4456, 4
        %v4459 = vor.u32 %v4455, %v4458
        %v4460 = vsel %vm2510, %v4451, %v4459
        %v4461 = vshrl.u32 %v4262, 16
        %v4463 = vrot.slane %v4461, 3
        %v4464 = vshll.u32 %v4262, 16
        %v4466 = vrot.slane %v4464, 4
        %v4467 = vor.u32 %v4463, %v4466
        %v4468 = vsel %vm2510, %v4459, %v4467
        %v4469 = vshrl.u32 %v4264, 16
        %v4471 = vrot.slane %v4469, 3
        %v4472 = vshll.u32 %v4264, 16
        %v4474 = vrot.slane %v4472, 4
        %v4475 = vor.u32 %v4471, %v4474
        %v4476 = vsel %vm2510, %v4467, %v4475
        %v4489 = vunpack.c.l.b16 %v4266
        %v4490 = vunpack.c.l.b16 %v4267
        %v4491 = vunpack.c.l.b16 %v4268
        %v4492 = vunpack.c.l.b16 %v4269
        %v4493 = vunpack.c.l.b16 %v4270
        %v4494 = vunpack.c.l.b16 %v4271
        %v4495 = vunpack.c.l.b16 %v4272
        %v4496 = vunpack.c.l.b16 %v4273
        %v4497 = vunpack.c.l.b16 %v4274
        %v4498 = vunpack.c.l.b16 %v4275
        %v4499 = vunpack.c.l.b16 %v4276
        %v4500 = vunpack.c.l.b16 %v4277
        %v4501 = vpack.c.b16 %v4490, %v4489
        %v4502 = vpack.c.b16 %v4492, %v4491
        %v4503 = vpack.c.b16 %v4494, %v4493
        %v4504 = vpack.c.b16 %v4496, %v4495
        %v4505 = vpack.c.b16 %v4498, %v4497
        %v4506 = vpack.c.b16 %v4500, %v4499
        %v4514 = vsel %vm2746, %v4292, 0
        %v4517 = vsel %vm2746, %v4300, 0
        %v4520 = vsel %vm2746, %v4308, 0
        %v4523 = vsel %vm2746, %v4316, 0
        %v4526 = vsel %vm2746, %v4324, 0
        %v4529 = vsel %vm2746, %v4332, 0
        %v4532 = vsel %vm2746, %v4340, 0
        %v4535 = vsel %vm2746, %v4348, 0
        %v4538 = vsel %vm2746, %v4356, 0
        %v4541 = vsel %vm2746, %v4364, 0
        %v4544 = vsel %vm2746, %v4372, 0
        %v4547 = vsel %vm2746, %v4380, 0
        %v4550 = vsel %vm2746, %v4388, 0
        %v4553 = vsel %vm2746, %v4396, 0
        %v4556 = vsel %vm2746, %v4404, 0
        %v4559 = vsel %vm2746, %v4412, 0
        %v4562 = vsel %vm2746, %v4420, 0
        %v4565 = vsel %vm2746, %v4428, 0
        %v4568 = vsel %vm2746, %v4436, 0
        %v4571 = vsel %vm2746, %v4444, 0
        %v4574 = vsel %vm2746, %v4452, 0
        %v4577 = vsel %vm2746, %v4460, 0
        %v4580 = vsel %vm2746, %v4468, 0
        %v4583 = vsel %vm2746, %v4476, 0
        %4585 = vmatprep.subr.bf16.mxu0 0
        %4586 = vmatpush1.bf16.msra.mxu0 0
        %4587 = vmatprep.subr.bf16.mxu0 0
        %4588 = vmatpush1.bf16.msra.mxu0 0
        %4589 = vmatprep.subr.bf16.mxu0 0
        %4590 = vmatpush1.bf16.msra.mxu0 %v4506
        %4591 = vmatprep.subr.bf16.mxu0 0
        %4592 = vmatpush1.bf16.msra.mxu0 %v4505
        %4593 = vmatprep.subr.bf16.mxu0 0
        %4594 = vmatpush1.bf16.msra.mxu0 %v4504
        %4595 = vmatprep.subr.bf16.mxu0 0
        %4596 = vmatpush1.bf16.msra.mxu0 %v4503
        %4597 = vmatprep.subr.bf16.mxu0 0
        %4598 = vmatpush1.bf16.msra.mxu0 %v4502
        %4599 = vmatprep.subr.bf16.mxu0 0
        %4600 = vmatpush1.bf16.msra.mxu0 %v4501
        %4601 = vmatprep.subr.bf16.mxu0 0
        %4602 = vmatpush2.bf16.msra.mxu0 0
        %4603 = vmatprep.subr.bf16.mxu0 0
        %4604 = vmatpush2.bf16.msra.mxu0 0
        %4605 = vmatprep.subr.bf16.mxu0 0
        %4606 = vmatpush2.bf16.msra.mxu0 0
        %4607 = vmatprep.subr.bf16.mxu0 0
        %4608 = vmatpush2.bf16.msra.mxu0 0
        %4609 = vmatprep.subr.bf16.mxu0 0
        %4610 = vmatpush2.bf16.msra.mxu0 0
        %4611 = vmatprep.subr.bf16.mxu0 0
        %4612 = vmatpush2.bf16.msra.mxu0 0
        %4613 = vmatprep.subr.bf16.mxu0 0
        %4614 = vmatpush2.bf16.msra.mxu0 0
        %4615 = vmatprep.subr.bf16.mxu0 0
        %4616 = vmatpush2.bf16.msra.mxu0 0
        %4617 = vmatprep.mubr.bf16.mxu0 0
        %4618 = vmatmul.mubr.bf16.gmra.mxu0 %v4514
        %v4619 = vpop.f32.mrf.mxu0
        %v4620 = vadd.f32 0.0, %v4619
        %v4621 = vpop.f32.mrf.mxu0
        %v4622 = vpop.f32.mrf.mxu0
        %v4623 = vadd.f32 0.0, %v4622
        %v4624 = vpop.f32.mrf.mxu0
        %4625 = vmatprep.mubr.bf16.mxu0 0
        %4626 = vmatmul.mubr.bf16.gmra.mxu0 %v4517
        %v4627 = vpop.f32.mrf.mxu0
        %v4628 = vadd.f32 0.0, %v4627
        %v4629 = vpop.f32.mrf.mxu0
        %v4630 = vpop.f32.mrf.mxu0
        %v4631 = vadd.f32 0.0, %v4630
        %v4632 = vpop.f32.mrf.mxu0
        %4633 = vmatprep.mubr.bf16.mxu0 0
        %4634 = vmatmul.mubr.bf16.gmra.mxu0 %v4520
        %v4635 = vpop.f32.mrf.mxu0
        %v4636 = vadd.f32 0.0, %v4635
        %v4637 = vpop.f32.mrf.mxu0
        %v4638 = vpop.f32.mrf.mxu0
        %v4639 = vadd.f32 0.0, %v4638
        %v4640 = vpop.f32.mrf.mxu0
        %4641 = vmatprep.mubr.bf16.mxu0 0
        %4642 = vmatmul.mubr.bf16.gmra.mxu0 %v4523
        %v4643 = vpop.f32.mrf.mxu0
        %v4644 = vadd.f32 0.0, %v4643
        %v4645 = vpop.f32.mrf.mxu0
        %v4646 = vpop.f32.mrf.mxu0
        %v4647 = vadd.f32 0.0, %v4646
        %v4648 = vpop.f32.mrf.mxu0
        %4649 = vmatprep.mubr.bf16.mxu0 0
        %4650 = vmatmul.mubr.bf16.gmra.mxu0 %v4526
        %v4651 = vpop.f32.mrf.mxu0
        %v4652 = vadd.f32 0.0, %v4651
        %v4653 = vpop.f32.mrf.mxu0
        %v4654 = vpop.f32.mrf.mxu0
        %v4655 = vadd.f32 0.0, %v4654
        %v4656 = vpop.f32.mrf.mxu0
        %4657 = vmatprep.mubr.bf16.mxu0 0
        %4658 = vmatmul.mubr.bf16.gmra.mxu0 %v4529
        %v4659 = vpop.f32.mrf.mxu0
        %v4660 = vadd.f32 0.0, %v4659
        %v4661 = vpop.f32.mrf.mxu0
        %v4662 = vpop.f32.mrf.mxu0
        %v4663 = vadd.f32 0.0, %v4662
        %v4664 = vpop.f32.mrf.mxu0
        %4665 = vmatprep.mubr.bf16.mxu0 0
        %4666 = vmatmul.mubr.bf16.gmra.mxu0 %v4532
        %v4667 = vpop.f32.mrf.mxu0
        %v4668 = vadd.f32 0.0, %v4667
        %v4669 = vpop.f32.mrf.mxu0
        %v4670 = vpop.f32.mrf.mxu0
        %v4671 = vadd.f32 0.0, %v4670
        %v4672 = vpop.f32.mrf.mxu0
        %4673 = vmatprep.mubr.bf16.mxu0 0
        %4674 = vmatmul.mubr.bf16.gmra.mxu0 %v4535
        %v4675 = vpop.f32.mrf.mxu0
        %v4676 = vadd.f32 0.0, %v4675
        %v4677 = vpop.f32.mrf.mxu0
        %v4678 = vpop.f32.mrf.mxu0
        %v4679 = vadd.f32 0.0, %v4678
        %v4680 = vpop.f32.mrf.mxu0
        %4681 = vmatprep.mubr.bf16.mxu0 0
        %4682 = vmatmul.mubr.bf16.gmra.mxu0 %v4538
        %v4683 = vpop.f32.mrf.mxu0
        %v4684 = vadd.f32 0.0, %v4683
        %v4685 = vpop.f32.mrf.mxu0
        %v4686 = vpop.f32.mrf.mxu0
        %v4687 = vadd.f32 0.0, %v4686
        %v4688 = vpop.f32.mrf.mxu0
        %4689 = vmatprep.mubr.bf16.mxu0 0
        %4690 = vmatmul.mubr.bf16.gmra.mxu0 %v4541
        %v4691 = vpop.f32.mrf.mxu0
        %v4692 = vadd.f32 0.0, %v4691
        %v4693 = vpop.f32.mrf.mxu0
        %v4694 = vpop.f32.mrf.mxu0
        %v4695 = vadd.f32 0.0, %v4694
        %v4696 = vpop.f32.mrf.mxu0
        %4697 = vmatprep.mubr.bf16.mxu0 0
        %4698 = vmatmul.mubr.bf16.gmra.mxu0 %v4544
        %v4699 = vpop.f32.mrf.mxu0
        %v4700 = vadd.f32 0.0, %v4699
        %v4701 = vpop.f32.mrf.mxu0
        %v4702 = vpop.f32.mrf.mxu0
        %v4703 = vadd.f32 0.0, %v4702
        %v4704 = vpop.f32.mrf.mxu0
        %4705 = vmatprep.mubr.bf16.mxu0 0
        %4706 = vmatmul.mubr.bf16.gmra.mxu0 %v4547
        %v4707 = vpop.f32.mrf.mxu0
        %v4708 = vadd.f32 0.0, %v4707
        %v4709 = vpop.f32.mrf.mxu0
        %v4710 = vpop.f32.mrf.mxu0
        %v4711 = vadd.f32 0.0, %v4710
        %v4712 = vpop.f32.mrf.mxu0
        %4713 = vmatprep.mubr.bf16.mxu0 0
        %4714 = vmatmul.mubr.bf16.gmra.mxu0 %v4550
        %v4715 = vpop.f32.mrf.mxu0
        %v4716 = vadd.f32 0.0, %v4715
        %v4717 = vpop.f32.mrf.mxu0
        %v4718 = vpop.f32.mrf.mxu0
        %v4719 = vadd.f32 0.0, %v4718
        %v4720 = vpop.f32.mrf.mxu0
        %4721 = vmatprep.mubr.bf16.mxu0 0
        %4722 = vmatmul.mubr.bf16.gmra.mxu0 %v4553
        %v4723 = vpop.f32.mrf.mxu0
        %v4724 = vadd.f32 0.0, %v4723
        %v4725 = vpop.f32.mrf.mxu0
        %v4726 = vpop.f32.mrf.mxu0
        %v4727 = vadd.f32 0.0, %v4726
        %v4728 = vpop.f32.mrf.mxu0
        %4729 = vmatprep.mubr.bf16.mxu0 0
        %4730 = vmatmul.mubr.bf16.gmra.mxu0 %v4556
        %v4731 = vpop.f32.mrf.mxu0
        %v4732 = vadd.f32 0.0, %v4731
        %v4733 = vpop.f32.mrf.mxu0
        %v4734 = vpop.f32.mrf.mxu0
        %v4735 = vadd.f32 0.0, %v4734
        %v4736 = vpop.f32.mrf.mxu0
        %4737 = vmatprep.mubr.bf16.mxu0 0
        %4738 = vmatmul.mubr.bf16.gmra.mxu0 %v4559
        %v4739 = vpop.f32.mrf.mxu0
        %v4740 = vadd.f32 0.0, %v4739
        %v4741 = vpop.f32.mrf.mxu0
        %v4742 = vpop.f32.mrf.mxu0
        %v4743 = vadd.f32 0.0, %v4742
        %v4744 = vpop.f32.mrf.mxu0
        %4745 = vmatprep.mubr.bf16.mxu0 0
        %4746 = vmatmul.mubr.bf16.gmra.mxu0 %v4562
        %v4747 = vpop.f32.mrf.mxu0
        %v4748 = vadd.f32 0.0, %v4747
        %v4749 = vpop.f32.mrf.mxu0
        %v4750 = vpop.f32.mrf.mxu0
        %v4751 = vadd.f32 0.0, %v4750
        %v4752 = vpop.f32.mrf.mxu0
        %4753 = vmatprep.mubr.bf16.mxu0 0
        %4754 = vmatmul.mubr.bf16.gmra.mxu0 %v4565
        %v4755 = vpop.f32.mrf.mxu0
        %v4756 = vadd.f32 0.0, %v4755
        %v4757 = vpop.f32.mrf.mxu0
        %v4758 = vpop.f32.mrf.mxu0
        %v4759 = vadd.f32 0.0, %v4758
        %v4760 = vpop.f32.mrf.mxu0
        %4761 = vmatprep.mubr.bf16.mxu0 0
        %4762 = vmatmul.mubr.bf16.gmra.mxu0 %v4568
        %v4763 = vpop.f32.mrf.mxu0
        %v4764 = vadd.f32 0.0, %v4763
        %v4765 = vpop.f32.mrf.mxu0
        %v4766 = vpop.f32.mrf.mxu0
        %v4767 = vadd.f32 0.0, %v4766
        %v4768 = vpop.f32.mrf.mxu0
        %4769 = vmatprep.mubr.bf16.mxu0 0
        %4770 = vmatmul.mubr.bf16.gmra.mxu0 %v4571
        %v4771 = vpop.f32.mrf.mxu0
        %v4772 = vadd.f32 0.0, %v4771
        %v4773 = vpop.f32.mrf.mxu0
        %v4774 = vpop.f32.mrf.mxu0
        %v4775 = vadd.f32 0.0, %v4774
        %v4776 = vpop.f32.mrf.mxu0
        %4777 = vmatprep.mubr.bf16.mxu0 0
        %4778 = vmatmul.mubr.bf16.gmra.mxu0 %v4574
        %v4779 = vpop.f32.mrf.mxu0
        %v4780 = vadd.f32 0.0, %v4779
        %v4781 = vpop.f32.mrf.mxu0
        %v4782 = vpop.f32.mrf.mxu0
        %v4783 = vadd.f32 0.0, %v4782
        %v4784 = vpop.f32.mrf.mxu0
        %4785 = vmatprep.mubr.bf16.mxu0 0
        %4786 = vmatmul.mubr.bf16.gmra.mxu0 %v4577
        %v4787 = vpop.f32.mrf.mxu0
        %v4788 = vadd.f32 0.0, %v4787
        %v4789 = vpop.f32.mrf.mxu0
        %v4790 = vpop.f32.mrf.mxu0
        %v4791 = vadd.f32 0.0, %v4790
        %v4792 = vpop.f32.mrf.mxu0
        %4793 = vmatprep.mubr.bf16.mxu0 0
        %4794 = vmatmul.mubr.bf16.gmra.mxu0 %v4580
        %v4795 = vpop.f32.mrf.mxu0
        %v4796 = vadd.f32 0.0, %v4795
        %v4797 = vpop.f32.mrf.mxu0
        %v4798 = vpop.f32.mrf.mxu0
        %v4799 = vadd.f32 0.0, %v4798
        %v4800 = vpop.f32.mrf.mxu0
        %4801 = vmatprep.mubr.bf16.mxu0 0
        %4802 = vmatmul.mubr.bf16.gmra.mxu0 %v4583
        %v4803 = vpop.f32.mrf.mxu0
        %v4804 = vadd.f32 0.0, %v4803
        %v4805 = vpop.f32.mrf.mxu0
        %v4806 = vpop.f32.mrf.mxu0
        %v4807 = vadd.f32 0.0, %v4806
        %v4808 = vpop.f32.mrf.mxu0
        %4809 = vdwg.mxu0
        %v4810 = vadd.f32 %v3386, %v4620
        %v4811 = vadd.f32 %v3389, %v4623
        %v4812 = vadd.f32 %v3394, %v4628
        %v4813 = vadd.f32 %v3397, %v4631
        %v4814 = vadd.f32 %v3402, %v4636
        %v4815 = vadd.f32 %v3405, %v4639
        %v4816 = vadd.f32 %v3410, %v4644
        %v4817 = vadd.f32 %v3413, %v4647
        %v4818 = vadd.f32 %v3418, %v4652
        %v4819 = vadd.f32 %v3421, %v4655
        %v4820 = vadd.f32 %v3426, %v4660
        %v4821 = vadd.f32 %v3429, %v4663
        %v4822 = vadd.f32 %v3434, %v4668
        %v4823 = vadd.f32 %v3437, %v4671
        %v4824 = vadd.f32 %v3442, %v4676
        %v4825 = vadd.f32 %v3445, %v4679
        %v4826 = vadd.f32 %v3450, %v4684
        %v4827 = vadd.f32 %v3453, %v4687
        %v4828 = vadd.f32 %v3458, %v4692
        %v4829 = vadd.f32 %v3461, %v4695
        %v4830 = vadd.f32 %v3466, %v4700
        %v4831 = vadd.f32 %v3469, %v4703
        %v4832 = vadd.f32 %v3474, %v4708
        %v4833 = vadd.f32 %v3477, %v4711
        %v4834 = vadd.f32 %v3482, %v4716
        %v4835 = vadd.f32 %v3485, %v4719
        %v4836 = vadd.f32 %v3490, %v4724
        %v4837 = vadd.f32 %v3493, %v4727
        %v4838 = vadd.f32 %v3498, %v4732
        %v4839 = vadd.f32 %v3501, %v4735
        %v4840 = vadd.f32 %v3506, %v4740
        %v4841 = vadd.f32 %v3509, %v4743
        %v4842 = vadd.f32 %v3514, %v4748
        %v4843 = vadd.f32 %v3517, %v4751
        %v4844 = vadd.f32 %v3522, %v4756
        %v4845 = vadd.f32 %v3525, %v4759
        %v4846 = vadd.f32 %v3530, %v4764
        %v4847 = vadd.f32 %v3533, %v4767
        %v4848 = vadd.f32 %v3538, %v4772
        %v4849 = vadd.f32 %v3541, %v4775
        %v4850 = vadd.f32 %v3546, %v4780
        %v4851 = vadd.f32 %v3549, %v4783
        %v4852 = vadd.f32 %v3554, %v4788
        %v4853 = vadd.f32 %v3557, %v4791
        %v4854 = vadd.f32 %v3562, %v4796
        %v4855 = vadd.f32 %v3565, %v4799
        %v4856 = vadd.f32 %v3570, %v4804
        %v4857 = vadd.f32 %v3573, %v4807
        %v4858 = vld [vmem:[%s5] sm:$0x1]
        %v4860 = vlaneseq
        %v4861 = vshrl.u32 %v4860, 7
        %v4862 = vsub.s32 0, %v4861
        %v4863 = vrot.slane %v4858, %v4862
        %v4865 = vadd.f32 %v4810, %v4863
        %v4866 = vadd.f32 %v4811, %v4863
        %v4867 = vadd.f32 %v4812, %v4863
        %v4868 = vadd.f32 %v4813, %v4863
        %v4869 = vadd.f32 %v4814, %v4863
        %v4870 = vadd.f32 %v4815, %v4863
        %v4871 = vadd.f32 %v4816, %v4863
        %v4872 = vadd.f32 %v4817, %v4863
        %v4873 = vadd.f32 %v4818, %v4863
        %v4874 = vadd.f32 %v4819, %v4863
        %v4875 = vadd.f32 %v4820, %v4863
        %v4876 = vadd.f32 %v4821, %v4863
        %v4877 = vadd.f32 %v4822, %v4863
        %v4878 = vadd.f32 %v4823, %v4863
        %v4879 = vadd.f32 %v4824, %v4863
        %v4880 = vadd.f32 %v4825, %v4863
        %v4881 = vadd.f32 %v4826, %v4863
        %v4882 = vadd.f32 %v4827, %v4863
        %v4883 = vadd.f32 %v4828, %v4863
        %v4884 = vadd.f32 %v4829, %v4863
        %v4885 = vadd.f32 %v4830, %v4863
        %v4886 = vadd.f32 %v4831, %v4863
        %v4887 = vadd.f32 %v4832, %v4863
        %v4888 = vadd.f32 %v4833, %v4863
        %v4889 = vadd.f32 %v4834, %v4863
        %v4890 = vadd.f32 %v4835, %v4863
        %v4891 = vadd.f32 %v4836, %v4863
        %v4892 = vadd.f32 %v4837, %v4863
        %v4893 = vadd.f32 %v4838, %v4863
        %v4894 = vadd.f32 %v4839, %v4863
        %v4895 = vadd.f32 %v4840, %v4863
        %v4896 = vadd.f32 %v4841, %v4863
        %v4897 = vadd.f32 %v4842, %v4863
        %v4898 = vadd.f32 %v4843, %v4863
        %v4899 = vadd.f32 %v4844, %v4863
        %v4900 = vadd.f32 %v4845, %v4863
        %v4901 = vadd.f32 %v4846, %v4863
        %v4902 = vadd.f32 %v4847, %v4863
        %v4903 = vadd.f32 %v4848, %v4863
        %v4904 = vadd.f32 %v4849, %v4863
        %v4905 = vadd.f32 %v4850, %v4863
        %v4906 = vadd.f32 %v4851, %v4863
        %v4907 = vadd.f32 %v4852, %v4863
        %v4908 = vadd.f32 %v4853, %v4863
        %v4909 = vadd.f32 %v4854, %v4863
        %v4910 = vadd.f32 %v4855, %v4863
        %v4911 = vadd.f32 %v4856, %v4863
        %v4912 = vadd.f32 %v4857, %v4863
        %v4913 = vmax.f32 %v4865, 0.0
        %v4914 = vmax.f32 %v4866, 0.0
        %v4915 = vmax.f32 %v4867, 0.0
        %v4916 = vmax.f32 %v4868, 0.0
        %v4917 = vmax.f32 %v4869, 0.0
        %v4918 = vmax.f32 %v4870, 0.0
        %v4919 = vmax.f32 %v4871, 0.0
        %v4920 = vmax.f32 %v4872, 0.0
        %v4921 = vmax.f32 %v4873, 0.0
        %v4922 = vmax.f32 %v4874, 0.0
        %v4923 = vmax.f32 %v4875, 0.0
        %v4924 = vmax.f32 %v4876, 0.0
        %v4925 = vmax.f32 %v4877, 0.0
        %v4926 = vmax.f32 %v4878, 0.0
        %v4927 = vmax.f32 %v4879, 0.0
        %v4928 = vmax.f32 %v4880, 0.0
        %v4929 = vmax.f32 %v4881, 0.0
        %v4930 = vmax.f32 %v4882, 0.0
        %v4931 = vmax.f32 %v4883, 0.0
        %v4932 = vmax.f32 %v4884, 0.0
        %v4933 = vmax.f32 %v4885, 0.0
        %v4934 = vmax.f32 %v4886, 0.0
        %v4935 = vmax.f32 %v4887, 0.0
        %v4936 = vmax.f32 %v4888, 0.0
        %v4937 = vmax.f32 %v4889, 0.0
        %v4938 = vmax.f32 %v4890, 0.0
        %v4939 = vmax.f32 %v4891, 0.0
        %v4940 = vmax.f32 %v4892, 0.0
        %v4941 = vmax.f32 %v4893, 0.0
        %v4942 = vmax.f32 %v4894, 0.0
        %v4943 = vmax.f32 %v4895, 0.0
        %v4944 = vmax.f32 %v4896, 0.0
        %v4945 = vmax.f32 %v4897, 0.0
        %v4946 = vmax.f32 %v4898, 0.0
        %v4947 = vmax.f32 %v4899, 0.0
        %v4948 = vmax.f32 %v4900, 0.0
        %v4949 = vmax.f32 %v4901, 0.0
        %v4950 = vmax.f32 %v4902, 0.0
        %v4951 = vmax.f32 %v4903, 0.0
        %v4952 = vmax.f32 %v4904, 0.0
        %v4953 = vmax.f32 %v4905, 0.0
        %v4954 = vmax.f32 %v4906, 0.0
        %v4955 = vmax.f32 %v4907, 0.0
        %v4956 = vmax.f32 %v4908, 0.0
        %v4957 = vmax.f32 %v4909, 0.0
        %v4958 = vmax.f32 %v4910, 0.0
        %v4959 = vmax.f32 %v4911, 0.0
        %v4960 = vmax.f32 %v4912, 0.0
        %v4961 = vpack.c.bf16 %v4914, %v4913
        %v4962 = vpack.c.bf16 %v4916, %v4915
        %v4963 = vpack.c.bf16 %v4918, %v4917
        %v4964 = vpack.c.bf16 %v4920, %v4919
        %v4965 = vpack.c.bf16 %v4922, %v4921
        %v4966 = vpack.c.bf16 %v4924, %v4923
        %v4967 = vpack.c.bf16 %v4926, %v4925
        %v4968 = vpack.c.bf16 %v4928, %v4927
        %v4969 = vpack.c.bf16 %v4930, %v4929
        %v4970 = vpack.c.bf16 %v4932, %v4931
        %v4971 = vpack.c.bf16 %v4934, %v4933
        %v4972 = vpack.c.bf16 %v4936, %v4935
        %v4973 = vpack.c.bf16 %v4938, %v4937
        %v4974 = vpack.c.bf16 %v4940, %v4939
        %v4975 = vpack.c.bf16 %v4942, %v4941
        %v4976 = vpack.c.bf16 %v4944, %v4943
        %v4977 = vpack.c.bf16 %v4946, %v4945
        %v4978 = vpack.c.bf16 %v4948, %v4947
        %v4979 = vpack.c.bf16 %v4950, %v4949
        %v4980 = vpack.c.bf16 %v4952, %v4951
        %v4981 = vpack.c.bf16 %v4954, %v4953
        %v4982 = vpack.c.bf16 %v4956, %v4955
        %v4983 = vpack.c.bf16 %v4958, %v4957
        %v4984 = vpack.c.bf16 %v4960, %v4959
        %v4985 = vld [vmem:[%s6] sm:$0xf]
        %v4986 = vld [vmem:[%s6 + $0x4] sm:$0xf]
        %v4987 = vld [vmem:[%s6 + $0x8] sm:$0xf]
        %v4988 = vld [vmem:[%s6 + $0xc] sm:$0xf]
        %v4989 = vld [vmem:[%s7] sm:$0x1]
        %v4991 = vlaneseq
        %v4992 = vshrl.u32 %v4991, 7
        %v4993 = vsub.s32 0, %v4992
        %v4994 = vrot.slane %v4989, %v4993
        %v5000 = vunpack.c.l.b16 %v4985
        %v5001 = vunpack.c.l.b16 %v4986
        %v5002 = vunpack.c.l.b16 %v4987
        %v5003 = vunpack.c.l.b16 %v4988
        %v5004 = vpack.c.b16 %v5001, %v5000
        %v5005 = vpack.c.b16 %v5003, %v5002
        %v5009 = vsel %vm1892, %v4961, 0
        %v5012 = vsel %vm1892, %v4962, 0
        %v5015 = vsel %vm1892, %v4963, 0
        %v5018 = vsel %vm1892, %v4964, 0
        %v5021 = vsel %vm1892, %v4965, 0
        %v5024 = vsel %vm1892, %v4966, 0
        %v5027 = vsel %vm1892, %v4967, 0
        %v5030 = vsel %vm1892, %v4968, 0
        %v5033 = vsel %vm1892, %v4969, 0
        %v5036 = vsel %vm1892, %v4970, 0
        %v5039 = vsel %vm1892, %v4971, 0
        %v5042 = vsel %vm1892, %v4972, 0
        %v5045 = vsel %vm1892, %v4973, 0
        %v5048 = vsel %vm1892, %v4974, 0
        %v5051 = vsel %vm1892, %v4975, 0
        %v5054 = vsel %vm1892, %v4976, 0
        %v5057 = vsel %vm1892, %v4977, 0
        %v5060 = vsel %vm1892, %v4978, 0
        %v5063 = vsel %vm1892, %v4979, 0
        %v5066 = vsel %vm1892, %v4980, 0
        %v5069 = vsel %vm1892, %v4981, 0
        %v5072 = vsel %vm1892, %v4982, 0
        %v5075 = vsel %vm1892, %v4983, 0
        %v5078 = vsel %vm1892, %v4984, 0
        %5080 = vmatprep.subr.bf16.mxu0 0
        %5081 = vmatpush1.bf16.msra.mxu0 0
        %5082 = vmatprep.subr.bf16.mxu0 0
        %5083 = vmatpush1.bf16.msra.mxu0 0
        %5084 = vmatprep.subr.bf16.mxu0 0
        %5085 = vmatpush1.bf16.msra.mxu0 0
        %5086 = vmatprep.subr.bf16.mxu0 0
        %5087 = vmatpush1.bf16.msra.mxu0 0
        %5088 = vmatprep.subr.bf16.mxu0 0
        %5089 = vmatpush1.bf16.msra.mxu0 0
        %5090 = vmatprep.subr.bf16.mxu0 0
        %5091 = vmatpush1.bf16.msra.mxu0 0
        %5092 = vmatprep.subr.bf16.mxu0 0
        %5093 = vmatpush1.bf16.msra.mxu0 %v5005
        %5094 = vmatprep.subr.bf16.mxu0 0
        %5095 = vmatpush1.bf16.msra.mxu0 %v5004
        %5096 = vmatprep.subr.bf16.mxu0 0
        %5097 = vmatpush2.bf16.msra.mxu0 0
        %5098 = vmatprep.subr.bf16.mxu0 0
        %5099 = vmatpush2.bf16.msra.mxu0 0
        %5100 = vmatprep.subr.bf16.mxu0 0
        %5101 = vmatpush2.bf16.msra.mxu0 0
        %5102 = vmatprep.subr.bf16.mxu0 0
        %5103 = vmatpush2.bf16.msra.mxu0 0
        %5104 = vmatprep.subr.bf16.mxu0 0
        %5105 = vmatpush2.bf16.msra.mxu0 0
        %5106 = vmatprep.subr.bf16.mxu0 0
        %5107 = vmatpush2.bf16.msra.mxu0 0
        %5108 = vmatprep.subr.bf16.mxu0 0
        %5109 = vmatpush2.bf16.msra.mxu0 0
        %5110 = vmatprep.subr.bf16.mxu0 0
        %5111 = vmatpush2.bf16.msra.mxu0 0
        %5112 = vmatprep.mubr.bf16.mxu0 0
        %5113 = vmatmul.mubr.bf16.gmra.mxu0 %v5009
        %v5114 = vpop.f32.mrf.mxu0
        %v5115 = vadd.f32 %v4994, %v5114
        %v5116 = vpop.f32.mrf.mxu0
        %v5117 = vpop.f32.mrf.mxu0
        %v5118 = vadd.f32 %v4994, %v5117
        %v5119 = vpop.f32.mrf.mxu0
        %5120 = vmatprep.mubr.bf16.mxu0 0
        %5121 = vmatmul.mubr.bf16.gmra.mxu0 %v5012
        %v5122 = vpop.f32.mrf.mxu0
        %v5123 = vadd.f32 %v4994, %v5122
        %v5124 = vpop.f32.mrf.mxu0
        %v5125 = vpop.f32.mrf.mxu0
        %v5126 = vadd.f32 %v4994, %v5125
        %v5127 = vpop.f32.mrf.mxu0
        %5128 = vmatprep.mubr.bf16.mxu0 0
        %5129 = vmatmul.mubr.bf16.gmra.mxu0 %v5015
        %v5130 = vpop.f32.mrf.mxu0
        %v5131 = vadd.f32 %v4994, %v5130
        %v5132 = vpop.f32.mrf.mxu0
        %v5133 = vpop.f32.mrf.mxu0
        %v5134 = vadd.f32 %v4994, %v5133
        %v5135 = vpop.f32.mrf.mxu0
        %5136 = vmatprep.mubr.bf16.mxu0 0
        %5137 = vmatmul.mubr.bf16.gmra.mxu0 %v5018
        %v5138 = vpop.f32.mrf.mxu0
        %v5139 = vadd.f32 %v4994, %v5138
        %v5140 = vpop.f32.mrf.mxu0
        %v5141 = vpop.f32.mrf.mxu0
        %v5142 = vadd.f32 %v4994, %v5141
        %v5143 = vpop.f32.mrf.mxu0
        %5144 = vmatprep.mubr.bf16.mxu0 0
        %5145 = vmatmul.mubr.bf16.gmra.mxu0 %v5021
        %v5146 = vpop.f32.mrf.mxu0
        %v5147 = vadd.f32 %v4994, %v5146
        %v5148 = vpop.f32.mrf.mxu0
        %v5149 = vpop.f32.mrf.mxu0
        %v5150 = vadd.f32 %v4994, %v5149
        %v5151 = vpop.f32.mrf.mxu0
        %5152 = vmatprep.mubr.bf16.mxu0 0
        %5153 = vmatmul.mubr.bf16.gmra.mxu0 %v5024
        %v5154 = vpop.f32.mrf.mxu0
        %v5155 = vadd.f32 %v4994, %v5154
        %v5156 = vpop.f32.mrf.mxu0
        %v5157 = vpop.f32.mrf.mxu0
        %v5158 = vadd.f32 %v4994, %v5157
        %v5159 = vpop.f32.mrf.mxu0
        %5160 = vmatprep.mubr.bf16.mxu0 0
        %5161 = vmatmul.mubr.bf16.gmra.mxu0 %v5027
        %v5162 = vpop.f32.mrf.mxu0
        %v5163 = vadd.f32 %v4994, %v5162
        %v5164 = vpop.f32.mrf.mxu0
        %v5165 = vpop.f32.mrf.mxu0
        %v5166 = vadd.f32 %v4994, %v5165
        %v5167 = vpop.f32.mrf.mxu0
        %5168 = vmatprep.mubr.bf16.mxu0 0
        %5169 = vmatmul.mubr.bf16.gmra.mxu0 %v5030
        %v5170 = vpop.f32.mrf.mxu0
        %v5171 = vadd.f32 %v4994, %v5170
        %v5172 = vpop.f32.mrf.mxu0
        %v5173 = vpop.f32.mrf.mxu0
        %v5174 = vadd.f32 %v4994, %v5173
        %v5175 = vpop.f32.mrf.mxu0
        %5176 = vmatprep.mubr.bf16.mxu0 0
        %5177 = vmatmul.mubr.bf16.gmra.mxu0 %v5033
        %v5178 = vpop.f32.mrf.mxu0
        %v5179 = vadd.f32 %v4994, %v5178
        %v5180 = vpop.f32.mrf.mxu0
        %v5181 = vpop.f32.mrf.mxu0
        %v5182 = vadd.f32 %v4994, %v5181
        %v5183 = vpop.f32.mrf.mxu0
        %5184 = vmatprep.mubr.bf16.mxu0 0
        %5185 = vmatmul.mubr.bf16.gmra.mxu0 %v5036
        %v5186 = vpop.f32.mrf.mxu0
        %v5187 = vadd.f32 %v4994, %v5186
        %v5188 = vpop.f32.mrf.mxu0
        %v5189 = vpop.f32.mrf.mxu0
        %v5190 = vadd.f32 %v4994, %v5189
        %v5191 = vpop.f32.mrf.mxu0
        %5192 = vmatprep.mubr.bf16.mxu0 0
        %5193 = vmatmul.mubr.bf16.gmra.mxu0 %v5039
        %v5194 = vpop.f32.mrf.mxu0
        %v5195 = vadd.f32 %v4994, %v5194
        %v5196 = vpop.f32.mrf.mxu0
        %v5197 = vpop.f32.mrf.mxu0
        %v5198 = vadd.f32 %v4994, %v5197
        %v5199 = vpop.f32.mrf.mxu0
        %5200 = vmatprep.mubr.bf16.mxu0 0
        %5201 = vmatmul.mubr.bf16.gmra.mxu0 %v5042
        %v5202 = vpop.f32.mrf.mxu0
        %v5203 = vadd.f32 %v4994, %v5202
        %v5204 = vpop.f32.mrf.mxu0
        %v5205 = vpop.f32.mrf.mxu0
        %v5206 = vadd.f32 %v4994, %v5205
        %v5207 = vpop.f32.mrf.mxu0
        %5208 = vmatprep.mubr.bf16.mxu0 0
        %5209 = vmatmul.mubr.bf16.gmra.mxu0 %v5045
        %v5210 = vpop.f32.mrf.mxu0
        %v5211 = vadd.f32 %v4994, %v5210
        %v5212 = vpop.f32.mrf.mxu0
        %v5213 = vpop.f32.mrf.mxu0
        %v5214 = vadd.f32 %v4994, %v5213
        %v5215 = vpop.f32.mrf.mxu0
        %5216 = vmatprep.mubr.bf16.mxu0 0
        %5217 = vmatmul.mubr.bf16.gmra.mxu0 %v5048
        %v5218 = vpop.f32.mrf.mxu0
        %v5219 = vadd.f32 %v4994, %v5218
        %v5220 = vpop.f32.mrf.mxu0
        %v5221 = vpop.f32.mrf.mxu0
        %v5222 = vadd.f32 %v4994, %v5221
        %v5223 = vpop.f32.mrf.mxu0
        %5224 = vmatprep.mubr.bf16.mxu0 0
        %5225 = vmatmul.mubr.bf16.gmra.mxu0 %v5051
        %v5226 = vpop.f32.mrf.mxu0
        %v5227 = vadd.f32 %v4994, %v5226
        %v5228 = vpop.f32.mrf.mxu0
        %v5229 = vpop.f32.mrf.mxu0
        %v5230 = vadd.f32 %v4994, %v5229
        %v5231 = vpop.f32.mrf.mxu0
        %5232 = vmatprep.mubr.bf16.mxu0 0
        %5233 = vmatmul.mubr.bf16.gmra.mxu0 %v5054
        %v5234 = vpop.f32.mrf.mxu0
        %v5235 = vadd.f32 %v4994, %v5234
        %v5236 = vpop.f32.mrf.mxu0
        %v5237 = vpop.f32.mrf.mxu0
        %v5238 = vadd.f32 %v4994, %v5237
        %v5239 = vpop.f32.mrf.mxu0
        %5240 = vmatprep.mubr.bf16.mxu0 0
        %5241 = vmatmul.mubr.bf16.gmra.mxu0 %v5057
        %v5242 = vpop.f32.mrf.mxu0
        %v5243 = vadd.f32 %v4994, %v5242
        %v5244 = vpop.f32.mrf.mxu0
        %v5245 = vpop.f32.mrf.mxu0
        %v5246 = vadd.f32 %v4994, %v5245
        %v5247 = vpop.f32.mrf.mxu0
        %5248 = vmatprep.mubr.bf16.mxu0 0
        %5249 = vmatmul.mubr.bf16.gmra.mxu0 %v5060
        %v5250 = vpop.f32.mrf.mxu0
        %v5251 = vadd.f32 %v4994, %v5250
        %v5252 = vpop.f32.mrf.mxu0
        %v5253 = vpop.f32.mrf.mxu0
        %v5254 = vadd.f32 %v4994, %v5253
        %v5255 = vpop.f32.mrf.mxu0
        %5256 = vmatprep.mubr.bf16.mxu0 0
        %5257 = vmatmul.mubr.bf16.gmra.mxu0 %v5063
        %v5258 = vpop.f32.mrf.mxu0
        %v5259 = vadd.f32 %v4994, %v5258
        %v5260 = vpop.f32.mrf.mxu0
        %v5261 = vpop.f32.mrf.mxu0
        %v5262 = vadd.f32 %v4994, %v5261
        %v5263 = vpop.f32.mrf.mxu0
        %5264 = vmatprep.mubr.bf16.mxu0 0
        %5265 = vmatmul.mubr.bf16.gmra.mxu0 %v5066
        %v5266 = vpop.f32.mrf.mxu0
        %v5267 = vadd.f32 %v4994, %v5266
        %v5268 = vpop.f32.mrf.mxu0
        %v5269 = vpop.f32.mrf.mxu0
        %v5270 = vadd.f32 %v4994, %v5269
        %v5271 = vpop.f32.mrf.mxu0
        %5272 = vmatprep.mubr.bf16.mxu0 0
        %5273 = vmatmul.mubr.bf16.gmra.mxu0 %v5069
        %v5274 = vpop.f32.mrf.mxu0
        %v5275 = vadd.f32 %v4994, %v5274
        %v5276 = vpop.f32.mrf.mxu0
        %v5277 = vpop.f32.mrf.mxu0
        %v5278 = vadd.f32 %v4994, %v5277
        %v5279 = vpop.f32.mrf.mxu0
        %5280 = vmatprep.mubr.bf16.mxu0 0
        %5281 = vmatmul.mubr.bf16.gmra.mxu0 %v5072
        %v5282 = vpop.f32.mrf.mxu0
        %v5283 = vadd.f32 %v4994, %v5282
        %v5284 = vpop.f32.mrf.mxu0
        %v5285 = vpop.f32.mrf.mxu0
        %v5286 = vadd.f32 %v4994, %v5285
        %v5287 = vpop.f32.mrf.mxu0
        %5288 = vmatprep.mubr.bf16.mxu0 0
        %5289 = vmatmul.mubr.bf16.gmra.mxu0 %v5075
        %v5290 = vpop.f32.mrf.mxu0
        %v5291 = vadd.f32 %v4994, %v5290
        %v5292 = vpop.f32.mrf.mxu0
        %v5293 = vpop.f32.mrf.mxu0
        %v5294 = vadd.f32 %v4994, %v5293
        %v5295 = vpop.f32.mrf.mxu0
        %5296 = vmatprep.mubr.bf16.mxu0 0
        %5297 = vmatmul.mubr.bf16.gmra.mxu0 %v5078
        %v5298 = vpop.f32.mrf.mxu0
        %v5299 = vadd.f32 %v4994, %v5298
        %v5300 = vpop.f32.mrf.mxu0
        %v5301 = vpop.f32.mrf.mxu0
        %v5302 = vadd.f32 %v4994, %v5301
        %v5303 = vpop.f32.mrf.mxu0
        %5304 = vdwg.mxu0
        %v5305 = vadd.f32 %v5115, %v325
        %v5306 = vadd.f32 %v5118, %v326
        %v5307 = vadd.f32 %v5123, %v327
        %v5308 = vadd.f32 %v5126, %v328
        %v5309 = vadd.f32 %v5131, %v329
        %v5310 = vadd.f32 %v5134, %v330
        %v5311 = vadd.f32 %v5139, %v331
        %v5312 = vadd.f32 %v5142, %v332
        %v5313 = vadd.f32 %v5147, %v333
        %v5314 = vadd.f32 %v5150, %v334
        %v5315 = vadd.f32 %v5155, %v335
        %v5316 = vadd.f32 %v5158, %v336
        %v5317 = vadd.f32 %v5163, %v337
        %v5318 = vadd.f32 %v5166, %v338
        %v5319 = vadd.f32 %v5171, %v339
        %v5320 = vadd.f32 %v5174, %v340
        %v5321 = vadd.f32 %v5179, %v341
        %v5322 = vadd.f32 %v5182, %v342
        %v5323 = vadd.f32 %v5187, %v343
        %v5324 = vadd.f32 %v5190, %v344
        %v5325 = vadd.f32 %v5195, %v345
        %v5326 = vadd.f32 %v5198, %v346
        %v5327 = vadd.f32 %v5203, %v347
        %v5328 = vadd.f32 %v5206, %v348
        %v5329 = vadd.f32 %v5211, %v349
        %v5330 = vadd.f32 %v5214, %v350
        %v5331 = vadd.f32 %v5219, %v351
        %v5332 = vadd.f32 %v5222, %v352
        %v5333 = vadd.f32 %v5227, %v353
        %v5334 = vadd.f32 %v5230, %v354
        %v5335 = vadd.f32 %v5235, %v355
        %v5336 = vadd.f32 %v5238, %v356
        %v5337 = vadd.f32 %v5243, %v357
        %v5338 = vadd.f32 %v5246, %v358
        %v5339 = vadd.f32 %v5251, %v359
        %v5340 = vadd.f32 %v5254, %v360
        %v5341 = vadd.f32 %v5259, %v361
        %v5342 = vadd.f32 %v5262, %v362
        %v5343 = vadd.f32 %v5267, %v363
        %v5344 = vadd.f32 %v5270, %v364
        %v5345 = vadd.f32 %v5275, %v365
        %v5346 = vadd.f32 %v5278, %v366
        %v5347 = vadd.f32 %v5283, %v367
        %v5348 = vadd.f32 %v5286, %v368
        %v5349 = vadd.f32 %v5291, %v369
        %v5350 = vadd.f32 %v5294, %v370
        %v5351 = vadd.f32 %v5299, %v371
        %v5352 = vadd.f32 %v5302, %v372
        %v5353 = vmax.f32 %v5305, 0.0
        %v5354 = vmax.f32 %v5306, 0.0
        %v5355 = vmax.f32 %v5307, 0.0
        %v5356 = vmax.f32 %v5308, 0.0
        %v5357 = vmax.f32 %v5309, 0.0
        %v5358 = vmax.f32 %v5310, 0.0
        %v5359 = vmax.f32 %v5311, 0.0
        %v5360 = vmax.f32 %v5312, 0.0
        %v5361 = vmax.f32 %v5313, 0.0
        %v5362 = vmax.f32 %v5314, 0.0
        %v5363 = vmax.f32 %v5315, 0.0
        %v5364 = vmax.f32 %v5316, 0.0
        %v5365 = vmax.f32 %v5317, 0.0
        %v5366 = vmax.f32 %v5318, 0.0
        %v5367 = vmax.f32 %v5319, 0.0
        %v5368 = vmax.f32 %v5320, 0.0
        %v5369 = vmax.f32 %v5321, 0.0
        %v5370 = vmax.f32 %v5322, 0.0
        %v5371 = vmax.f32 %v5323, 0.0
        %v5372 = vmax.f32 %v5324, 0.0
        %v5373 = vmax.f32 %v5325, 0.0
        %v5374 = vmax.f32 %v5326, 0.0
        %v5375 = vmax.f32 %v5327, 0.0
        %v5376 = vmax.f32 %v5328, 0.0
        %v5377 = vmax.f32 %v5329, 0.0
        %v5378 = vmax.f32 %v5330, 0.0
        %v5379 = vmax.f32 %v5331, 0.0
        %v5380 = vmax.f32 %v5332, 0.0
        %v5381 = vmax.f32 %v5333, 0.0
        %v5382 = vmax.f32 %v5334, 0.0
        %v5383 = vmax.f32 %v5335, 0.0
        %v5384 = vmax.f32 %v5336, 0.0
        %v5385 = vmax.f32 %v5337, 0.0
        %v5386 = vmax.f32 %v5338, 0.0
        %v5387 = vmax.f32 %v5339, 0.0
        %v5388 = vmax.f32 %v5340, 0.0
        %v5389 = vmax.f32 %v5341, 0.0
        %v5390 = vmax.f32 %v5342, 0.0
        %v5391 = vmax.f32 %v5343, 0.0
        %v5392 = vmax.f32 %v5344, 0.0
        %v5393 = vmax.f32 %v5345, 0.0
        %v5394 = vmax.f32 %v5346, 0.0
        %v5395 = vmax.f32 %v5347, 0.0
        %v5396 = vmax.f32 %v5348, 0.0
        %v5397 = vmax.f32 %v5349, 0.0
        %v5398 = vmax.f32 %v5350, 0.0
        %v5399 = vmax.f32 %v5351, 0.0
        %v5400 = vmax.f32 %v5352, 0.0
        %v5401 = vmul.f32 %v5353, %v792
        %v5402 = vmul.f32 %v5354, %v797
        %v5403 = vmul.f32 %v5355, %v802
        %v5404 = vmul.f32 %v5356, %v807
        %v5405 = vmul.f32 %v5357, %v812
        %v5406 = vmul.f32 %v5358, %v817
        %v5407 = vmul.f32 %v5359, %v822
        %v5408 = vmul.f32 %v5360, %v827
        %v5409 = vmul.f32 %v5361, %v832
        %v5410 = vmul.f32 %v5362, %v837
        %v5411 = vmul.f32 %v5363, %v842
        %v5412 = vmul.f32 %v5364, %v847
        %v5413 = vmul.f32 %v5365, %v852
        %v5414 = vmul.f32 %v5366, %v857
        %v5415 = vmul.f32 %v5367, %v862
        %v5416 = vmul.f32 %v5368, %v867
        %v5417 = vmul.f32 %v5369, %v872
        %v5418 = vmul.f32 %v5370, %v877
        %v5419 = vmul.f32 %v5371, %v882
        %v5420 = vmul.f32 %v5372, %v887
        %v5421 = vmul.f32 %v5373, %v892
        %v5422 = vmul.f32 %v5374, %v897
        %v5423 = vmul.f32 %v5375, %v902
        %v5424 = vmul.f32 %v5376, %v907
        %v5425 = vmul.f32 %v5377, %v912
        %v5426 = vmul.f32 %v5378, %v917
        %v5427 = vmul.f32 %v5379, %v922
        %v5428 = vmul.f32 %v5380, %v927
        %v5429 = vmul.f32 %v5381, %v932
        %v5430 = vmul.f32 %v5382, %v937
        %v5431 = vmul.f32 %v5383, %v942
        %v5432 = vmul.f32 %v5384, %v947
        %v5433 = vmul.f32 %v5385, %v952
        %v5434 = vmul.f32 %v5386, %v957
        %v5435 = vmul.f32 %v5387, %v962
        %v5436 = vmul.f32 %v5388, %v967
        %v5437 = vmul.f32 %v5389, %v972
        %v5438 = vmul.f32 %v5390, %v977
        %v5439 = vmul.f32 %v5391, %v982
        %v5440 = vmul.f32 %v5392, %v987
        %v5441 = vmul.f32 %v5393, %v992
        %v5442 = vmul.f32 %v5394, %v997
        %v5443 = vmul.f32 %v5395, %v1002
        %v5444 = vmul.f32 %v5396, %v1007
        %v5445 = vmul.f32 %v5397, %v1012
        %v5446 = vmul.f32 %v5398, %v1017
        %v5447 = vmul.f32 %v5399, %v1022
        %v5448 = vmul.f32 %v5400, %v1027
        %5449 = vst [vmem:[%s323] sm:$0xff] %v5401
        %5450 = vst [vmem:[%s323 + $0x8] sm:$0xff] %v5402
        %5451 = vst [vmem:[%s323 + $0x10] sm:$0xff] %v5403
        %5452 = vst [vmem:[%s323 + $0x18] sm:$0xff] %v5404
        %5453 = vst [vmem:[%s323 + $0x20] sm:$0xff] %v5405
        %5454 = vst [vmem:[%s323 + $0x28] sm:$0xff] %v5406
        %5455 = vst [vmem:[%s323 + $0x30] sm:$0xff] %v5407
        %5456 = vst [vmem:[%s323 + $0x38] sm:$0xff] %v5408
        %5457 = vst [vmem:[%s323 + $0x40] sm:$0xff] %v5409
        %5458 = vst [vmem:[%s323 + $0x48] sm:$0xff] %v5410
        %5459 = vst [vmem:[%s323 + $0x50] sm:$0xff] %v5411
        %5460 = vst [vmem:[%s323 + $0x58] sm:$0xff] %v5412
        %5461 = vst [vmem:[%s323 + $0x60] sm:$0xff] %v5413
        %5462 = vst [vmem:[%s323 + $0x68] sm:$0xff] %v5414
        %5463 = vst [vmem:[%s323 + $0x70] sm:$0xff] %v5415
        %5464 = vst [vmem:[%s323 + $0x78] sm:$0xff] %v5416
        %5465 = vst [vmem:[%s323 + $0x80] sm:$0xff] %v5417
        %5466 = vst [vmem:[%s323 + $0x88] sm:$0xff] %v5418
        %5467 = vst [vmem:[%s323 + $0x90] sm:$0xff] %v5419
        %5468 = vst [vmem:[%s323 + $0x98] sm:$0xff] %v5420
        %5469 = vst [vmem:[%s323 + $0xa0] sm:$0xff] %v5421
        %5470 = vst [vmem:[%s323 + $0xa8] sm:$0xff] %v5422
        %5471 = vst [vmem:[%s323 + $0xb0] sm:$0xff] %v5423
        %5472 = vst [vmem:[%s323 + $0xb8] sm:$0xff] %v5424
        %5473 = vst [vmem:[%s323 + $0xc0] sm:$0xff] %v5425
        %5474 = vst [vmem:[%s323 + $0xc8] sm:$0xff] %v5426
        %5475 = vst [vmem:[%s323 + $0xd0] sm:$0xff] %v5427
        %5476 = vst [vmem:[%s323 + $0xd8] sm:$0xff] %v5428
        %5477 = vst [vmem:[%s323 + $0xe0] sm:$0xff] %v5429
        %5478 = vst [vmem:[%s323 + $0xe8] sm:$0xff] %v5430
        %5479 = vst [vmem:[%s323 + $0xf0] sm:$0xff] %v5431
        %5480 = vst [vmem:[%s323 + $0xf8] sm:$0xff] %v5432
        %5481 = vst [vmem:[%s323 + $0x100] sm:$0xff] %v5433
        %5482 = vst [vmem:[%s323 + $0x108] sm:$0xff] %v5434
        %5483 = vst [vmem:[%s323 + $0x110] sm:$0xff] %v5435
        %5484 = vst [vmem:[%s323 + $0x118] sm:$0xff] %v5436
        %5485 = vst [vmem:[%s323 + $0x120] sm:$0xff] %v5437
        %5486 = vst [vmem:[%s323 + $0x128] sm:$0xff] %v5438
        %5487 = vst [vmem:[%s323 + $0x130] sm:$0xff] %v5439
        %5488 = vst [vmem:[%s323 + $0x138] sm:$0xff] %v5440
        %5489 = vst [vmem:[%s323 + $0x140] sm:$0xff] %v5441
        %5490 = vst [vmem:[%s323 + $0x148] sm:$0xff] %v5442
        %5491 = vst [vmem:[%s323 + $0x150] sm:$0xff] %v5443
        %5492 = vst [vmem:[%s323 + $0x158] sm:$0xff] %v5444
        %5493 = vst [vmem:[%s323 + $0x160] sm:$0xff] %v5445
        %5494 = vst [vmem:[%s323 + $0x168] sm:$0xff] %v5446
        %5495 = vst [vmem:[%s323 + $0x170] sm:$0xff] %v5447
        %5496 = vst [vmem:[%s323 + $0x178] sm:$0xff] %v5448
        %s5497 = sand.u32 %s206, 1
        %s5498 = scalar_lea.sflag [#allocation5], %s5497
        %s5499 = sand.u32 %s206, 1
        %s5500 = smul.addr %s5499, 384
        %s5501 = scalar_lea.vmem [#allocation6], %s5500
        // Predicated region
        $region57: #{tpu_custom_call.1} parent=51 // pred_check
          %p5502 = pneg %p216
        $region58: #{tpu_custom_call.1} parent=51 // pred_check_branch
          %5504 = sbr.rel (%p5502) target = $region60
        $region59: #{tpu_custom_call.1} parent=51 // pred_region
          %s5506 = ssub.s32 6144, 6144
          %5507 = vsyncadd %s5498, %s5506
          %s5508 = smul.addr %s25, 48
          %s5509 = smul.addr %s5508, 128
          %s5510 = scalar_lea.hbm %s8, %s5509
          %s5511 = sshll.u32 %s5501, 4
          %s5512 = int_to_ptr.vmem [resolvable:$true] %s5511
          %5517 = dma.vmem_to_hbm [thread:$0]  %s5512, 6144, %s5510, %s5498, 128, 128, 8
        $region60: #{tpu_custom_call.1} parent=51 // pred_fallthru
          _
      $region52: #{tpu_custom_call.1} parent=5 // pred_fallthru
        _
      %p5518 = scmp.le.s32.totalorder 2, %s20
      // Predicated region
      $region61: #{tpu_custom_call.1} parent=5 // pred_check
        %p5519 = pneg %p5518
      $region62: #{tpu_custom_call.1} parent=5 // pred_check_branch
        %5521 = sbr.rel (%p5519) target = $region64
      $region63: #{tpu_custom_call.1} parent=5 // pred_region
        %s5522 = ssub.s32 %s20, 2
        // Predicated region
        $region65: #{tpu_custom_call.1} parent=63 // pred_check
          %p5523 = pneg %p222
        $region66: #{tpu_custom_call.1} parent=63 // pred_check_branch
          %5525 = sbr.rel (%p5523) target = $region68
        $region67: #{tpu_custom_call.1} parent=63 // pred_region
          %s5526 = sand.u32 %s207, 1
          %s5527 = scalar_lea.sflag [#allocation5], %s5526
          %s5528 = sand.u32 %s207, 1
          %s5529 = smul.addr %s5528, 384
          %s5530 = scalar_lea.vmem [#allocation6], %s5529
          %5531 = dma.done %s5527, 6144
        $region68: #{tpu_custom_call.1} parent=63 // pred_fallthru
          _
      $region64: #{tpu_custom_call.1} parent=5 // pred_fallthru
        _
    $region6: #{tpu_custom_call.1} parent=1 // loop_footer
      %s24 = sadd.s32 1, %s20
    $region7: #{tpu_custom_call.1} parent=1 // loop_footer_branch
      %19 = sbr.rel target = $region3
    $region8: #{tpu_custom_call.1} parent=1 // loop_exit
      _
    %5532 = vsyncpa [#allocation4], 1
    %s5533 = scalar_lea.sflag [#allocation4], 1
    %5534 = vsyncpa %s5533, 1
    %5535 = vsyncpa [#allocation5], 1
    %s5536 = scalar_lea.sflag [#allocation5], 1
    %5537 = vsyncpa %s5536, 1

</llo_original>
